<compile_context>
chip_gen: v7x
topology: tpu7x:2x2x1
jax: 0.10.0
libtpu: 0.0.40
codegen_flags: <defaults>
</compile_context>

<pallas_src>
import functools

import jax
import jax.numpy as jnp
from jax.experimental import pallas as pl
from jax.experimental.pallas import tpu as pltpu

LEAKY_SLOPE = 1.0          # nn.LeakyReLU(True): negative_slope == 1.0 == identity
BN_EPS = 1e-5
COMPUTE_DTYPE = jnp.bfloat16   # MXU operand dtype; accumulation stays f32
CPAD = 128                 # BN channel axis padded to one full lane tile


# ----------------------------------------------------------------------------
# The fused Pallas kernel: 5 GEMMs + 4 training-mode BatchNorms + sigmoid.
# refs = (x, *weight_slabs, param_slab, out).  Layer structure is static metadata.
# ----------------------------------------------------------------------------
def _foe_ae_kernel(*refs, layers, n_wslabs, eps, cdt):
    x_ref = refs[0]
    w_refs = refs[1:1 + n_wslabs]
    p_ref = refs[-2]
    out_ref = refs[-1]
    B = x_ref.shape[0]

    y = x_ref[...]                                   # bf16 [B, F0]
    z = None
    for li, lyr in enumerate(layers):
        fin, fout = lyr["fin"], lyr["fout"]
        # Lane-dense GEMM on the MXU (bf16 operands, f32 accumulation) + f32 bias.
        A = w_refs[lyr["w_slab"]][lyr["w_off"]:lyr["w_off"] + fin, 0:fout]
        b = p_ref[lyr["b_row"]:lyr["b_row"] + 1, 0:fout]
        z = jnp.dot(y, A, preferred_element_type=jnp.float32) + b

        if lyr["bn"]:
            C = lyr["C"]
            n = B * (fout // C)                      # B * Hout * Wout (true samples)
            s = w_refs[lyr["s_slab"]][lyr["s_off"]:lyr["s_off"] + fout, 0:CPAD]
            eg = w_refs[lyr["e_slab"]][lyr["e_off"]:lyr["e_off"] + CPAD, 0:fout]
            beta = p_ref[lyr["beta_row"]:lyr["beta_row"] + 1, 0:fout]
            # One-pass batch statistics reduced to (padded) channel space via bf16
            # indicator matmuls (single MXU pass each, f32 accumulation).
            ch_sum = jnp.sum(
                jnp.dot(z.astype(cdt), s, preferred_element_type=jnp.float32),
                axis=0, keepdims=True)                                  # [1, CPAD]
            ch_sq = jnp.sum(
                jnp.dot((z * z).astype(cdt), s, preferred_element_type=jnp.float32),
                axis=0, keepdims=True)                                  # [1, CPAD]
            mu = ch_sum * (1.0 / n)
            var = jnp.maximum(ch_sq * (1.0 / n) - mu * mu, 0.0)
            rstd = jax.lax.rsqrt(var + eps)
            # Combined [rstd; -mu*rstd] built with iota/where (no concat), expanded
            # to feature space with the gamma-scaled expander in ONE tiny MXU op.
            rowi = jax.lax.broadcasted_iota(jnp.int32, (2, CPAD), 0)
            cmb = jnp.where(rowi == 0, rstd, -mu * rstd).astype(cdt)    # [2, CPAD]
            sf = jnp.dot(cmb, eg, preferred_element_type=jnp.float32)   # [2, fout]
            z = z * sf[0:1, :] + sf[1:2, :] + beta

        if lyr["act"] == "sigmoid":
            z = jax.nn.sigmoid(z)
        # All other activations are LeakyReLU(slope=1.0) == identity (folded away;
        # prepare_kernel_inputs asserts LEAKY_SLOPE == 1.0).

        if li + 1 < len(layers):
            y = z.astype(cdt)                        # operand for the next GEMM

    out_ref[...] = z                                 # f32 [B, P*P]


# ----------------------------------------------------------------------------
# Host-side (one-time) parameter folding + slab packing.
# ----------------------------------------------------------------------------
def _conv_operator(w_oihw, hin, win, stride, pad, lhs_dil=1):
    cout, cin, k, _ = w_oihw.shape
    fin = hin * win * cin
    # One-hot NHWC basis -> operator entries are exact weight copies.
    basis = jnp.eye(fin, dtype=jnp.float32).reshape(fin, hin, win, cin)
    basis = basis.transpose(0, 3, 1, 2)                           # NCHW basis
    out = jax.lax.conv_general_dilated(
        basis, w_oihw.astype(jnp.float32),
        window_strides=(stride, stride), padding=[(pad, pad), (pad, pad)],
        lhs_dilation=(lhs_dil, lhs_dil),
        dimension_numbers=("NCHW", "OIHW", "NCHW"))
    _, co, ho, wo = out.shape
    return out.transpose(0, 2, 3, 1).reshape(fin, ho * wo * co), ho, wo


def _deconv_operator(w_iohw, hin, win, stride, pad):
    # PyTorch ConvTranspose2d == conv of the stride-dilated input with the
    # spatially-flipped, channel-swapped kernel and padding k-1-pad.
    k = w_iohw.shape[2]
    w_conv = jnp.flip(w_iohw, axis=(2, 3)).transpose(1, 0, 2, 3)
    return _conv_operator(w_conv, hin, win, 1, k - 1 - pad, lhs_dil=stride)


def _round_up(v, m):
    return -(-v // m) * m


def _pack_weight_slabs(named):
    """Pack f32 matrices into bf16 slabs grouped by (128-padded) column width."""
    groups = {}
    for name, m in named.items():
        groups.setdefault(_round_up(m.shape[1], 128), []).append((name, m))
    slabs, index = [], {}
    for si, width in enumerate(sorted(groups)):
        items = groups[width]
        rows = sum(m.shape[0] for _, m in items)
        slab = jnp.zeros((rows, width), jnp.float32)
        off = 0
        for name, m in items:
            assert m.shape[0] % 8 == 0 and m.shape[1] % 128 == 0
            slab = slab.at[off:off + m.shape[0], 0:m.shape[1]].set(m)
            index[name] = (si, off)
            off += m.shape[0]
        slabs.append(slab.astype(COMPUTE_DTYPE))
    return tuple(slabs), index


def _pack_param_rows(order, vecs):
    """Pack f32 vectors as rows (8-row stride for aligned slices) of one slab."""
    width = _round_up(max(int(v.shape[0]) for v in vecs.values()), 128)
    slab = jnp.zeros((8 * len(order), width), jnp.float32)
    rows = {}
    for i, name in enumerate(order):
        v = vecs[name]
        slab = slab.at[8 * i, 0:v.shape[0]].set(v)
        rows[name] = 8 * i
    return slab, rows


def prepare_kernel_inputs(params, patch_size):
    # Folding the identity-activation chains is ONLY valid for slope == 1.0
    # (nn.LeakyReLU(True)) -- gate it explicitly.
    assert LEAKY_SLOPE == 1.0, "layer folding requires LeakyReLU slope == 1.0"
    p = params
    P = patch_size

    # Dense NHWC->NHWC linear operators for every conv / conv-transpose (f32).
    A_c1, h1, w1 = _conv_operator(p["e_c1_w"], P, P, 2, 1)
    A_c2, h2, w2 = _conv_operator(p["e_c2_w"], h1, w1, 2, 1)
    A_c3, h3, w3 = _conv_operator(p["e_c3_w"], h2, w2, 2, 1)
    flat = 32 * h3 * w3                       # == patch_size**2 // 2
    A_d1, g1, q1 = _deconv_operator(p["d_c1_w"], h3, w3, 2, 1)
    A_d2, g2, q2 = _deconv_operator(p["d_c2_w"], g1, q1, 2, 1)
    A_d3, g3, q3 = _deconv_operator(p["d_c3_w"], g2, q2, 2, 1)
    assert (g3, q3) == (P, P)

    tile = lambda b, hw: jnp.tile(b, hw)

    # L0: conv1 folded into conv2 (identity act, no BN in between).
    W0 = A_c1 @ A_c2
    b0 = tile(p["e_c1_b"], h1 * w1) @ A_c2 + tile(p["e_c2_b"], h2 * w2)
    # L1: conv3.
    W1, b1 = A_c3, tile(p["e_c3_b"], h3 * w3)
    # L2: e_l1 . e_l2 . d_l1 . d_l2 . deconv1 folded into one operator
    #     (all identity activations, no BN; Flatten/Unflatten NCHW permutations
    #      are folded into the adjacent linear weights; latent never padded).
    W_e1 = (p["e_l1_w"].T.reshape(32, h3, w3, 128)
            .transpose(1, 2, 0, 3).reshape(flat, 128))
    W_d2 = (p["d_l2_w"].T.reshape(128, 32, h3, w3)
            .transpose(0, 2, 3, 1).reshape(128, flat))
    b_d2 = p["d_l2_b"].reshape(32, h3, w3).transpose(1, 2, 0).reshape(flat)
    chain = [(W_e1, p["e_l1_b"]), (p["e_l2_w"].T, p["e_l2_b"]),
             (p["d_l1_w"].T, p["d_l1_b"]), (W_d2, b_d2),
             (A_d1, tile(p["d_c1_b"], g1 * q1))]
    W2, b2 = chain[0]
    for Wn, bvec in chain[1:]:
        b2 = b2 @ Wn + bvec
        W2 = W2 @ Wn
    # L3 / L4.
    W3, b3 = A_d2, tile(p["d_c2_b"], g2 * q2)
    W4, b4 = A_d3, tile(p["d_c3_b"], g3 * q3)

    # BN indicator (stats) + gamma-scaled expander matrices; channel axis padded
    # to a full 128-lane tile so every in-kernel slice is lane-aligned (padded
    # channels have zero expander rows, so they contribute nothing).
    def indicator(F, C):
        ch = jnp.arange(F) % C
        return (ch[:, None] == jnp.arange(CPAD)[None, :]).astype(jnp.float32)

    def expander(F, C, gamma):
        ch = jnp.arange(F) % C
        e = (jnp.arange(CPAD)[:, None] == ch[None, :]).astype(jnp.float32)
        g = jnp.zeros((CPAD,), jnp.float32).at[:C].set(gamma)
        return e * g[:, None]

    def expand_beta(beta, F, C):
        return beta[jnp.arange(F) % C]

    Ws = [W0, W1, W2, W3, W4]
    bs = [b0, b1, b2, b3, b4]
    bn_cfg = {0: (16, p["e_bn2_g"], p["e_bn2_b"]),
              1: (32, p["e_bn3_g"], p["e_bn3_b"]),
              2: (16, p["d_bn1_g"], p["d_bn1_b"]),
              3: (8,  p["d_bn2_g"], p["d_bn2_b"])}

    wmats = {f"A{i}": Ws[i] for i in range(5)}
    pvecs = {f"b{i}": bs[i] for i in range(5)}
    porder = [f"b{i}" for i in range(5)]
    for li, (C, g, be) in bn_cfg.items():
        F = Ws[li].shape[1]
        wmats[f"s{li}"] = indicator(F, C)
        wmats[f"eg{li}"] = expander(F, C, g)
        pvecs[f"be{li}"] = expand_beta(be, F, C)
        porder.append(f"be{li}")

    w_slabs, widx = _pack_weight_slabs(wmats)
    p_slab, prow = _pack_param_rows(porder, pvecs)

    layers = []
    for i in range(5):
        si, off = widx[f"A{i}"]
        lyr = dict(w_slab=si, w_off=off,
                   fin=int(Ws[i].shape[0]), fout=int(Ws[i].shape[1]),
                   b_row=prow[f"b{i}"], bn=i in bn_cfg,
                   act="sigmoid" if i == 4 else "none")
        if lyr["bn"]:
            C = bn_cfg[i][0]
            s_si, s_off = widx[f"s{i}"]
            e_si, e_off = widx[f"eg{i}"]
            lyr.update(C=C, s_slab=s_si, s_off=s_off,
                       e_slab=e_si, e_off=e_off, beta_row=prow[f"be{i}"])
        layers.append(lyr)

    return w_slabs, p_slab, tuple(layers)


def build_forward(layers, n_wslabs, patch_size):
    kernel = functools.partial(_foe_ae_kernel, layers=layers, n_wslabs=n_wslabs,
                               eps=BN_EPS, cdt=COMPUTE_DTYPE)
    vmem = pl.BlockSpec(memory_space=pltpu.MemorySpace.VMEM)

    @jax.jit
    def forward(w_slabs, p_slab, x):
        B = x.shape[0]
        # Cin == 1: NCHW flatten == NHWC flatten. Pre-cast to bf16 host-side.
        x2d = x.reshape(B, patch_size * patch_size).astype(COMPUTE_DTYPE)
        y = pl.pallas_call(
            kernel,
            out_shape=jax.ShapeDtypeStruct((B, patch_size * patch_size), jnp.float32),
            in_specs=[vmem] * (1 + n_wslabs + 1),
            out_specs=vmem,
        )(x2d, *w_slabs, p_slab)
        return y.reshape(B, 1, patch_size, patch_size)

    return forward


# ----------------------------------------------------------------------------
# Deterministic parameter construction (PyTorch layouts)
# ----------------------------------------------------------------------------
def init_params(key, patch_size, enc_dim):
    def nrm(k, shape, scale=0.1):
        return scale * jax.random.normal(k, shape, dtype=jnp.float32)

    keys = iter(jax.random.split(key, 32))
    flat = patch_size ** 2 // 2
    p = {}
    # Encoder
    p["e_c1_w"] = nrm(next(keys), (8, 1, 4, 4));    p["e_c1_b"] = nrm(next(keys), (8,))
    p["e_c2_w"] = nrm(next(keys), (16, 8, 4, 4));   p["e_c2_b"] = nrm(next(keys), (16,))
    p["e_bn2_g"] = jnp.ones((16,), jnp.float32);    p["e_bn2_b"] = jnp.zeros((16,), jnp.float32)
    p["e_c3_w"] = nrm(next(keys), (32, 16, 4, 4));  p["e_c3_b"] = nrm(next(keys), (32,))
    p["e_bn3_g"] = jnp.ones((32,), jnp.float32);    p["e_bn3_b"] = jnp.zeros((32,), jnp.float32)
    p["e_l1_w"] = nrm(next(keys), (128, flat));     p["e_l1_b"] = nrm(next(keys), (128,))
    p["e_l2_w"] = nrm(next(keys), (enc_dim, 128));  p["e_l2_b"] = nrm(next(keys), (enc_dim,))
    # Decoder
    p["d_l1_w"] = nrm(next(keys), (128, enc_dim));  p["d_l1_b"] = nrm(next(keys), (128,))
    p["d_l2_w"] = nrm(next(keys), (flat, 128));     p["d_l2_b"] = nrm(next(keys), (flat,))
    p["d_c1_w"] = nrm(next(keys), (32, 16, 4, 4));  p["d_c1_b"] = nrm(next(keys), (16,))
    p["d_bn1_g"] = jnp.ones((16,), jnp.float32);    p["d_bn1_b"] = jnp.zeros((16,), jnp.float32)
    p["d_c2_w"] = nrm(next(keys), (16, 8, 4, 4));   p["d_c2_b"] = nrm(next(keys), (8,))
    p["d_bn2_g"] = jnp.ones((8,), jnp.float32);     p["d_bn2_b"] = jnp.zeros((8,), jnp.float32)
    p["d_c3_w"] = nrm(next(keys), (8, 1, 4, 4));    p["d_c3_b"] = nrm(next(keys), (1,))
    return p


# ----------------------------------------------------------------------------
# Plain-JAX f32 reference of the PyTorch forward (semantic self-check only)
# ----------------------------------------------------------------------------
def reference_forward(params, x, patch_size):
    p = params
    B = x.shape[0]

    def conv(h, w, b, stride, pad):
        y = jax.lax.conv_general_dilated(
            h, w, (stride, stride), [(pad, pad), (pad, pad)],
            dimension_numbers=("NCHW", "OIHW", "NCHW"))
        return y + b.reshape(1, -1, 1, 1)

    def deconv(h, w, b, stride, pad):
        k = w.shape[2]
        w_conv = jnp.flip(w, axis=(2, 3)).transpose(1, 0, 2, 3)
        y = jax.lax.conv_general_dilated(
            h, w_conv, (1, 1), [(k - 1 - pad, k - 1 - pad)] * 2,
            lhs_dilation=(stride, stride),
            dimension_numbers=("NCHW", "OIHW", "NCHW"))
        return y + b.reshape(1, -1, 1, 1)

    def bn(h, g, be):
        mu = jnp.mean(h, axis=(0, 2, 3), keepdims=True)
        var = jnp.mean((h - mu) ** 2, axis=(0, 2, 3), keepdims=True)
        return ((h - mu) * jax.lax.rsqrt(var + BN_EPS)
                * g.reshape(1, -1, 1, 1) + be.reshape(1, -1, 1, 1))

    # LeakyReLU(True) -> slope 1.0 -> identity, so activations are omitted.
    h = conv(x, p["e_c1_w"], p["e_c1_b"], 2, 1)
    h = bn(conv(h, p["e_c2_w"], p["e_c2_b"], 2, 1), p["e_bn2_g"], p["e_bn2_b"])
    h = bn(conv(h, p["e_c3_w"], p["e_c3_b"], 2, 1), p["e_bn3_g"], p["e_bn3_b"])
    h = h.reshape(B, -1)
    h = h @ p["e_l1_w"].T + p["e_l1_b"]
    z = h @ p["e_l2_w"].T + p["e_l2_b"]
    h = z @ p["d_l1_w"].T + p["d_l1_b"]
    h = h @ p["d_l2_w"].T + p["d_l2_b"]
    h = h.reshape(B, 32, patch_size // 8, patch_size // 8)
    h = bn(deconv(h, p["d_c1_w"], p["d_c1_b"], 2, 1), p["d_bn1_g"], p["d_bn1_b"])
    h = bn(deconv(h, p["d_c2_w"], p["d_c2_b"], 2, 1), p["d_bn2_g"], p["d_bn2_b"])
    h = deconv(h, p["d_c3_w"], p["d_c3_b"], 2, 1)
    return jax.nn.sigmoid(h)


if __name__ == "__main__":
    patch_size = 16      # inp_dim
    enc_dim = 32         # out_dim (encoded_space_dim)
    batch = 2

    key = jax.random.PRNGKey(0)
    k_param, k_x = jax.random.split(key)
    params = init_params(k_param, patch_size, enc_dim)
    x = jax.random.normal(k_x, (batch, 1, patch_size, patch_size), dtype=jnp.float32)

    # One-time folding / packing (outside the hot path), then the fused kernel.
    w_slabs, p_slab, layers = prepare_kernel_inputs(params, patch_size)
    fwd = build_forward(layers, len(w_slabs), patch_size)

    y = jax.block_until_ready(fwd(w_slabs, p_slab, x))

    assert y.shape == (batch, 1, patch_size, patch_size), y.shape
    assert bool(jnp.all(jnp.isfinite(y)))
    assert bool(jnp.all((y >= 0.0) & (y <= 1.0)))   # sigmoid output range

    # Semantic check vs. plain-JAX f32 reference (bf16 operands -> loose atol).
    y_ref = reference_forward(params, x, patch_size)
    max_diff = float(jnp.max(jnp.abs(y - y_ref)))
    assert max_diff < 8e-2, max_diff

    print("KERNEL_OK")
</pallas_src>

<mosaic_0001>
module attributes {stable_mosaic.version = 11 : i64} {
  func.func @_foe_ae_kernel(%arg0: memref<2x256xbf16, #tpu.memory_space<vmem>>, %arg1: memref<1536x128xbf16, #tpu.memory_space<vmem>>, %arg2: memref<1152x256xbf16, #tpu.memory_space<vmem>>, %arg3: memref<384x512xbf16, #tpu.memory_space<vmem>>, %arg4: memref<72x512xf32, #tpu.memory_space<vmem>>, %arg5: memref<2x256xf32, #tpu.memory_space<vmem>>) attributes {dimension_semantics = [], scalar_prefetch = 0 : i64, scratch_operands = 0 : i64, tpu.core_type = #tpu.core_type<tc>} {
    %c0 = arith.constant 0 : index
    %c0_0 = arith.constant 0 : index
    %0 = vector.load %arg0[%c0, %c0_0] : memref<2x256xbf16, #tpu.memory_space<vmem>>, vector<2x256xbf16>
    %c0_1 = arith.constant 0 : index
    %c0_2 = arith.constant 0 : index
    %1 = vector.load %arg2[%c0_1, %c0_2] : memref<1152x256xbf16, #tpu.memory_space<vmem>>, vector<256x256xbf16>
    %c0_3 = arith.constant 0 : index
    %c0_4 = arith.constant 0 : index
    %2 = vector.load %arg4[%c0_3, %c0_4] : memref<72x512xf32, #tpu.memory_space<vmem>>, vector<1x256xf32>
    %cst = arith.constant dense<0.000000e+00> : vector<2x256xf32>
    %3 = tpu.matmul %0, %1, %cst {dimension_numbers = #tpu.dot_dimension_numbers<[1], [0], [0], [1], [0, 0, 1, 1], [], []>} : vector<2x256xbf16>, vector<256x256xbf16>, vector<2x256xf32> -> vector<2x256xf32>
    %4 = vector.broadcast %2 : vector<1x256xf32> to vector<2x256xf32>
    %5 = arith.addf %3, %4 : vector<2x256xf32>
    %c256 = arith.constant 256 : index
    %c0_5 = arith.constant 0 : index
    %6 = vector.load %arg1[%c256, %c0_5] : memref<1536x128xbf16, #tpu.memory_space<vmem>>, vector<256x128xbf16>
    %c896 = arith.constant 896 : index
    %c0_6 = arith.constant 0 : index
    %7 = vector.load %arg2[%c896, %c0_6] : memref<1152x256xbf16, #tpu.memory_space<vmem>>, vector<128x256xbf16>
    %c40 = arith.constant 40 : index
    %c0_7 = arith.constant 0 : index
    %8 = vector.load %arg4[%c40, %c0_7] : memref<72x512xf32, #tpu.memory_space<vmem>>, vector<1x256xf32>
    %9 = arith.truncf %5 : vector<2x256xf32> to vector<2x256xbf16>
    %cst_8 = arith.constant dense<0.000000e+00> : vector<2x128xf32>
    %10 = tpu.matmul %9, %6, %cst_8 {dimension_numbers = #tpu.dot_dimension_numbers<[1], [0], [0], [1], [0, 0, 1, 1], [], []>} : vector<2x256xbf16>, vector<256x128xbf16>, vector<2x128xf32> -> vector<2x128xf32>
    %cst_9 = arith.constant dense<0.000000e+00> : vector<128xf32>
    %11 = vector.multi_reduction <add>, %10, %cst_9 [0] : vector<2x128xf32> to vector<128xf32>
    %12 = vector.shape_cast %11 : vector<128xf32> to vector<1x128xf32>
    %13 = arith.mulf %5, %5 : vector<2x256xf32>
    %14 = arith.truncf %13 : vector<2x256xf32> to vector<2x256xbf16>
    %cst_10 = arith.constant dense<0.000000e+00> : vector<2x128xf32>
    %15 = tpu.matmul %14, %6, %cst_10 {dimension_numbers = #tpu.dot_dimension_numbers<[1], [0], [0], [1], [0, 0, 1, 1], [], []>} : vector<2x256xbf16>, vector<256x128xbf16>, vector<2x128xf32> -> vector<2x128xf32>
    %cst_11 = arith.constant dense<0.000000e+00> : vector<128xf32>
    %16 = vector.multi_reduction <add>, %15, %cst_11 [0] : vector<2x128xf32> to vector<128xf32>
    %17 = vector.shape_cast %16 : vector<128xf32> to vector<1x128xf32>
    %cst_12 = arith.constant 3.125000e-02 : f32
    %18 = vector.broadcast %cst_12 : f32 to vector<1x128xf32>
    %19 = arith.mulf %12, %18 : vector<1x128xf32>
    %cst_13 = arith.constant 3.125000e-02 : f32
    %20 = vector.broadcast %cst_13 : f32 to vector<1x128xf32>
    %21 = arith.mulf %17, %20 : vector<1x128xf32>
    %22 = arith.mulf %19, %19 : vector<1x128xf32>
    %23 = arith.subf %21, %22 : vector<1x128xf32>
    %cst_14 = arith.constant 0.000000e+00 : f32
    %24 = vector.broadcast %cst_14 : f32 to vector<1x128xf32>
    %25 = arith.maximumf %23, %24 : vector<1x128xf32>
    %cst_15 = arith.constant 9.99999974E-6 : f32
    %26 = vector.broadcast %cst_15 : f32 to vector<1x128xf32>
    %27 = arith.addf %25, %26 : vector<1x128xf32>
    %28 = math.rsqrt %27 : vector<1x128xf32>
    %29 = tpu.iota {dimensions = array<i32: 0>} : vector<2x128xi32>
    %c0_i32 = arith.constant 0 : i32
    %30 = vector.broadcast %c0_i32 : i32 to vector<2x128xi32>
    %31 = arith.cmpi eq, %29, %30 : vector<2x128xi32>
    %cst_16 = arith.constant 0.000000e+00 : f32
    %32 = vector.broadcast %cst_16 : f32 to vector<1x128xf32>
    %33 = arith.subf %32, %19 : vector<1x128xf32>
    %34 = arith.mulf %33, %28 : vector<1x128xf32>
    %35 = vector.shape_cast %28 : vector<1x128xf32> to vector<1x128xf32>
    %36 = vector.broadcast %35 : vector<1x128xf32> to vector<2x128xf32>
    %37 = vector.shape_cast %34 : vector<1x128xf32> to vector<1x128xf32>
    %38 = vector.broadcast %37 : vector<1x128xf32> to vector<2x128xf32>
    %39 = arith.select %31, %36, %38 : vector<2x128xi1>, vector<2x128xf32>
    %40 = arith.truncf %39 : vector<2x128xf32> to vector<2x128xbf16>
    %cst_17 = arith.constant dense<0.000000e+00> : vector<2x256xf32>
    %41 = tpu.matmul %40, %7, %cst_17 {dimension_numbers = #tpu.dot_dimension_numbers<[1], [0], [0], [1], [0, 0, 1, 1], [], []>} : vector<2x128xbf16>, vector<128x256xbf16>, vector<2x256xf32> -> vector<2x256xf32>
    %42 = vector.extract_strided_slice %41 {offsets = [0, 0], sizes = [1, 256], strides = [1, 1]} : vector<2x256xf32> to vector<1x256xf32>
    %43 = vector.broadcast %42 : vector<1x256xf32> to vector<2x256xf32>
    %44 = arith.mulf %5, %43 : vector<2x256xf32>
    %45 = vector.extract_strided_slice %41 {offsets = [1, 0], sizes = [1, 256], strides = [1, 1]} : vector<2x256xf32> to vector<1x256xf32>
    %46 = vector.broadcast %45 : vector<1x256xf32> to vector<2x256xf32>
    %47 = arith.addf %44, %46 : vector<2x256xf32>
    %48 = vector.broadcast %8 : vector<1x256xf32> to vector<2x256xf32>
    %49 = arith.addf %47, %48 : vector<2x256xf32>
    %50 = arith.truncf %49 : vector<2x256xf32> to vector<2x256xbf16>
    %c0_18 = arith.constant 0 : index
    %c0_19 = arith.constant 0 : index
    %51 = vector.load %arg1[%c0_18, %c0_19] : memref<1536x128xbf16, #tpu.memory_space<vmem>>, vector<256x128xbf16>
    %c8 = arith.constant 8 : index
    %c0_20 = arith.constant 0 : index
    %52 = vector.load %arg4[%c8, %c0_20] : memref<72x512xf32, #tpu.memory_space<vmem>>, vector<1x128xf32>
    %cst_21 = arith.constant dense<0.000000e+00> : vector<2x128xf32>
    %53 = tpu.matmul %50, %51, %cst_21 {dimension_numbers = #tpu.dot_dimension_numbers<[1], [0], [0], [1], [0, 0, 1, 1], [], []>} : vector<2x256xbf16>, vector<256x128xbf16>, vector<2x128xf32> -> vector<2x128xf32>
    %54 = vector.broadcast %52 : vector<1x128xf32> to vector<2x128xf32>
    %55 = arith.addf %53, %54 : vector<2x128xf32>
    %c512 = arith.constant 512 : index
    %c0_22 = arith.constant 0 : index
    %56 = vector.load %arg1[%c512, %c0_22] : memref<1536x128xbf16, #tpu.memory_space<vmem>>, vector<128x128xbf16>
    %c640 = arith.constant 640 : index
    %c0_23 = arith.constant 0 : index
    %57 = vector.load %arg1[%c640, %c0_23] : memref<1536x128xbf16, #tpu.memory_space<vmem>>, vector<128x128xbf16>
    %c48 = arith.constant 48 : index
    %c0_24 = arith.constant 0 : index
    %58 = vector.load %arg4[%c48, %c0_24] : memref<72x512xf32, #tpu.memory_space<vmem>>, vector<1x128xf32>
    %59 = arith.truncf %55 : vector<2x128xf32> to vector<2x128xbf16>
    %cst_25 = arith.constant dense<0.000000e+00> : vector<2x128xf32>
    %60 = tpu.matmul %59, %56, %cst_25 {dimension_numbers = #tpu.dot_dimension_numbers<[1], [0], [0], [1], [0, 0, 1, 1], [], []>} : vector<2x128xbf16>, vector<128x128xbf16>, vector<2x128xf32> -> vector<2x128xf32>
    %cst_26 = arith.constant dense<0.000000e+00> : vector<128xf32>
    %61 = vector.multi_reduction <add>, %60, %cst_26 [0] : vector<2x128xf32> to vector<128xf32>
    %62 = vector.shape_cast %61 : vector<128xf32> to vector<1x128xf32>
    %63 = arith.mulf %55, %55 : vector<2x128xf32>
    %64 = arith.truncf %63 : vector<2x128xf32> to vector<2x128xbf16>
    %cst_27 = arith.constant dense<0.000000e+00> : vector<2x128xf32>
    %65 = tpu.matmul %64, %56, %cst_27 {dimension_numbers = #tpu.dot_dimension_numbers<[1], [0], [0], [1], [0, 0, 1, 1], [], []>} : vector<2x128xbf16>, vector<128x128xbf16>, vector<2x128xf32> -> vector<2x128xf32>
    %cst_28 = arith.constant dense<0.000000e+00> : vector<128xf32>
    %66 = vector.multi_reduction <add>, %65, %cst_28 [0] : vector<2x128xf32> to vector<128xf32>
    %67 = vector.shape_cast %66 : vector<128xf32> to vector<1x128xf32>
    %cst_29 = arith.constant 1.250000e-01 : f32
    %68 = vector.broadcast %cst_29 : f32 to vector<1x128xf32>
    %69 = arith.mulf %62, %68 : vector<1x128xf32>
    %cst_30 = arith.constant 1.250000e-01 : f32
    %70 = vector.broadcast %cst_30 : f32 to vector<1x128xf32>
    %71 = arith.mulf %67, %70 : vector<1x128xf32>
    %72 = arith.mulf %69, %69 : vector<1x128xf32>
    %73 = arith.subf %71, %72 : vector<1x128xf32>
    %cst_31 = arith.constant 0.000000e+00 : f32
    %74 = vector.broadcast %cst_31 : f32 to vector<1x128xf32>
    %75 = arith.maximumf %73, %74 : vector<1x128xf32>
    %cst_32 = arith.constant 9.99999974E-6 : f32
    %76 = vector.broadcast %cst_32 : f32 to vector<1x128xf32>
    %77 = arith.addf %75, %76 : vector<1x128xf32>
    %78 = math.rsqrt %77 : vector<1x128xf32>
    %79 = tpu.iota {dimensions = array<i32: 0>} : vector<2x128xi32>
    %c0_i32_33 = arith.constant 0 : i32
    %80 = vector.broadcast %c0_i32_33 : i32 to vector<2x128xi32>
    %81 = arith.cmpi eq, %79, %80 : vector<2x128xi32>
    %cst_34 = arith.constant 0.000000e+00 : f32
    %82 = vector.broadcast %cst_34 : f32 to vector<1x128xf32>
    %83 = arith.subf %82, %69 : vector<1x128xf32>
    %84 = arith.mulf %83, %78 : vector<1x128xf32>
    %85 = vector.shape_cast %78 : vector<1x128xf32> to vector<1x128xf32>
    %86 = vector.broadcast %85 : vector<1x128xf32> to vector<2x128xf32>
    %87 = vector.shape_cast %84 : vector<1x128xf32> to vector<1x128xf32>
    %88 = vector.broadcast %87 : vector<1x128xf32> to vector<2x128xf32>
    %89 = arith.select %81, %86, %88 : vector<2x128xi1>, vector<2x128xf32>
    %90 = arith.truncf %89 : vector<2x128xf32> to vector<2x128xbf16>
    %cst_35 = arith.constant dense<0.000000e+00> : vector<2x128xf32>
    %91 = tpu.matmul %90, %57, %cst_35 {dimension_numbers = #tpu.dot_dimension_numbers<[1], [0], [0], [1], [0, 0, 1, 1], [], []>} : vector<2x128xbf16>, vector<128x128xbf16>, vector<2x128xf32> -> vector<2x128xf32>
    %92 = vector.extract_strided_slice %91 {offsets = [0, 0], sizes = [1, 128], strides = [1, 1]} : vector<2x128xf32> to vector<1x128xf32>
    %93 = vector.broadcast %92 : vector<1x128xf32> to vector<2x128xf32>
    %94 = arith.mulf %55, %93 : vector<2x128xf32>
    %95 = vector.extract_strided_slice %91 {offsets = [1, 0], sizes = [1, 128], strides = [1, 1]} : vector<2x128xf32> to vector<1x128xf32>
    %96 = vector.broadcast %95 : vector<1x128xf32> to vector<2x128xf32>
    %97 = arith.addf %94, %96 : vector<2x128xf32>
    %98 = vector.broadcast %58 : vector<1x128xf32> to vector<2x128xf32>
    %99 = arith.addf %97, %98 : vector<2x128xf32>
    %100 = arith.truncf %99 : vector<2x128xf32> to vector<2x128xbf16>
    %c256_36 = arith.constant 256 : index
    %c0_37 = arith.constant 0 : index
    %101 = vector.load %arg2[%c256_36, %c0_37] : memref<1152x256xbf16, #tpu.memory_space<vmem>>, vector<128x256xbf16>
    %c16 = arith.constant 16 : index
    %c0_38 = arith.constant 0 : index
    %102 = vector.load %arg4[%c16, %c0_38] : memref<72x512xf32, #tpu.memory_space<vmem>>, vector<1x256xf32>
    %cst_39 = arith.constant dense<0.000000e+00> : vector<2x256xf32>
    %103 = tpu.matmul %100, %101, %cst_39 {dimension_numbers = #tpu.dot_dimension_numbers<[1], [0], [0], [1], [0, 0, 1, 1], [], []>} : vector<2x128xbf16>, vector<128x256xbf16>, vector<2x256xf32> -> vector<2x256xf32>
    %104 = vector.broadcast %102 : vector<1x256xf32> to vector<2x256xf32>
    %105 = arith.addf %103, %104 : vector<2x256xf32>
    %c768 = arith.constant 768 : index
    %c0_40 = arith.constant 0 : index
    %106 = vector.load %arg1[%c768, %c0_40] : memref<1536x128xbf16, #tpu.memory_space<vmem>>, vector<256x128xbf16>
    %c1024 = arith.constant 1024 : index
    %c0_41 = arith.constant 0 : index
    %107 = vector.load %arg2[%c1024, %c0_41] : memref<1152x256xbf16, #tpu.memory_space<vmem>>, vector<128x256xbf16>
    %c56 = arith.constant 56 : index
    %c0_42 = arith.constant 0 : index
    %108 = vector.load %arg4[%c56, %c0_42] : memref<72x512xf32, #tpu.memory_space<vmem>>, vector<1x256xf32>
    %109 = arith.truncf %105 : vector<2x256xf32> to vector<2x256xbf16>
    %cst_43 = arith.constant dense<0.000000e+00> : vector<2x128xf32>
    %110 = tpu.matmul %109, %106, %cst_43 {dimension_numbers = #tpu.dot_dimension_numbers<[1], [0], [0], [1], [0, 0, 1, 1], [], []>} : vector<2x256xbf16>, vector<256x128xbf16>, vector<2x128xf32> -> vector<2x128xf32>
    %cst_44 = arith.constant dense<0.000000e+00> : vector<128xf32>
    %111 = vector.multi_reduction <add>, %110, %cst_44 [0] : vector<2x128xf32> to vector<128xf32>
    %112 = vector.shape_cast %111 : vector<128xf32> to vector<1x128xf32>
    %113 = arith.mulf %105, %105 : vector<2x256xf32>
    %114 = arith.truncf %113 : vector<2x256xf32> to vector<2x256xbf16>
    %cst_45 = arith.constant dense<0.000000e+00> : vector<2x128xf32>
    %115 = tpu.matmul %114, %106, %cst_45 {dimension_numbers = #tpu.dot_dimension_numbers<[1], [0], [0], [1], [0, 0, 1, 1], [], []>} : vector<2x256xbf16>, vector<256x128xbf16>, vector<2x128xf32> -> vector<2x128xf32>
    %cst_46 = arith.constant dense<0.000000e+00> : vector<128xf32>
    %116 = vector.multi_reduction <add>, %115, %cst_46 [0] : vector<2x128xf32> to vector<128xf32>
    %117 = vector.shape_cast %116 : vector<128xf32> to vector<1x128xf32>
    %cst_47 = arith.constant 3.125000e-02 : f32
    %118 = vector.broadcast %cst_47 : f32 to vector<1x128xf32>
    %119 = arith.mulf %112, %118 : vector<1x128xf32>
    %cst_48 = arith.constant 3.125000e-02 : f32
    %120 = vector.broadcast %cst_48 : f32 to vector<1x128xf32>
    %121 = arith.mulf %117, %120 : vector<1x128xf32>
    %122 = arith.mulf %119, %119 : vector<1x128xf32>
    %123 = arith.subf %121, %122 : vector<1x128xf32>
    %cst_49 = arith.constant 0.000000e+00 : f32
    %124 = vector.broadcast %cst_49 : f32 to vector<1x128xf32>
    %125 = arith.maximumf %123, %124 : vector<1x128xf32>
    %cst_50 = arith.constant 9.99999974E-6 : f32
    %126 = vector.broadcast %cst_50 : f32 to vector<1x128xf32>
    %127 = arith.addf %125, %126 : vector<1x128xf32>
    %128 = math.rsqrt %127 : vector<1x128xf32>
    %129 = tpu.iota {dimensions = array<i32: 0>} : vector<2x128xi32>
    %c0_i32_51 = arith.constant 0 : i32
    %130 = vector.broadcast %c0_i32_51 : i32 to vector<2x128xi32>
    %131 = arith.cmpi eq, %129, %130 : vector<2x128xi32>
    %cst_52 = arith.constant 0.000000e+00 : f32
    %132 = vector.broadcast %cst_52 : f32 to vector<1x128xf32>
    %133 = arith.subf %132, %119 : vector<1x128xf32>
    %134 = arith.mulf %133, %128 : vector<1x128xf32>
    %135 = vector.shape_cast %128 : vector<1x128xf32> to vector<1x128xf32>
    %136 = vector.broadcast %135 : vector<1x128xf32> to vector<2x128xf32>
    %137 = vector.shape_cast %134 : vector<1x128xf32> to vector<1x128xf32>
    %138 = vector.broadcast %137 : vector<1x128xf32> to vector<2x128xf32>
    %139 = arith.select %131, %136, %138 : vector<2x128xi1>, vector<2x128xf32>
    %140 = arith.truncf %139 : vector<2x128xf32> to vector<2x128xbf16>
    %cst_53 = arith.constant dense<0.000000e+00> : vector<2x256xf32>
    %141 = tpu.matmul %140, %107, %cst_53 {dimension_numbers = #tpu.dot_dimension_numbers<[1], [0], [0], [1], [0, 0, 1, 1], [], []>} : vector<2x128xbf16>, vector<128x256xbf16>, vector<2x256xf32> -> vector<2x256xf32>
    %142 = vector.extract_strided_slice %141 {offsets = [0, 0], sizes = [1, 256], strides = [1, 1]} : vector<2x256xf32> to vector<1x256xf32>
    %143 = vector.broadcast %142 : vector<1x256xf32> to vector<2x256xf32>
    %144 = arith.mulf %105, %143 : vector<2x256xf32>
    %145 = vector.extract_strided_slice %141 {offsets = [1, 0], sizes = [1, 256], strides = [1, 1]} : vector<2x256xf32> to vector<1x256xf32>
    %146 = vector.broadcast %145 : vector<1x256xf32> to vector<2x256xf32>
    %147 = arith.addf %144, %146 : vector<2x256xf32>
    %148 = vector.broadcast %108 : vector<1x256xf32> to vector<2x256xf32>
    %149 = arith.addf %147, %148 : vector<2x256xf32>
    %150 = arith.truncf %149 : vector<2x256xf32> to vector<2x256xbf16>
    %c0_54 = arith.constant 0 : index
    %c0_55 = arith.constant 0 : index
    %151 = vector.load %arg3[%c0_54, %c0_55] : memref<384x512xbf16, #tpu.memory_space<vmem>>, vector<256x512xbf16>
    %c24 = arith.constant 24 : index
    %c0_56 = arith.constant 0 : index
    %152 = vector.load %arg4[%c24, %c0_56] : memref<72x512xf32, #tpu.memory_space<vmem>>, vector<1x512xf32>
    %cst_57 = arith.constant dense<0.000000e+00> : vector<2x512xf32>
    %153 = tpu.matmul %150, %151, %cst_57 {dimension_numbers = #tpu.dot_dimension_numbers<[1], [0], [0], [1], [0, 0, 1, 1], [], []>} : vector<2x256xbf16>, vector<256x512xbf16>, vector<2x512xf32> -> vector<2x512xf32>
    %154 = vector.broadcast %152 : vector<1x512xf32> to vector<2x512xf32>
    %155 = arith.addf %153, %154 : vector<2x512xf32>
    %c1024_58 = arith.constant 1024 : index
    %c0_59 = arith.constant 0 : index
    %156 = vector.load %arg1[%c1024_58, %c0_59] : memref<1536x128xbf16, #tpu.memory_space<vmem>>, vector<512x128xbf16>
    %c256_60 = arith.constant 256 : index
    %c0_61 = arith.constant 0 : index
    %157 = vector.load %arg3[%c256_60, %c0_61] : memref<384x512xbf16, #tpu.memory_space<vmem>>, vector<128x512xbf16>
    %c64 = arith.constant 64 : index
    %c0_62 = arith.constant 0 : index
    %158 = vector.load %arg4[%c64, %c0_62] : memref<72x512xf32, #tpu.memory_space<vmem>>, vector<1x512xf32>
    %159 = arith.truncf %155 : vector<2x512xf32> to vector<2x512xbf16>
    %cst_63 = arith.constant dense<0.000000e+00> : vector<2x128xf32>
    %160 = tpu.matmul %159, %156, %cst_63 {dimension_numbers = #tpu.dot_dimension_numbers<[1], [0], [0], [1], [0, 0, 1, 1], [], []>} : vector<2x512xbf16>, vector<512x128xbf16>, vector<2x128xf32> -> vector<2x128xf32>
    %cst_64 = arith.constant dense<0.000000e+00> : vector<128xf32>
    %161 = vector.multi_reduction <add>, %160, %cst_64 [0] : vector<2x128xf32> to vector<128xf32>
    %162 = vector.shape_cast %161 : vector<128xf32> to vector<1x128xf32>
    %163 = arith.mulf %155, %155 : vector<2x512xf32>
    %164 = arith.truncf %163 : vector<2x512xf32> to vector<2x512xbf16>
    %cst_65 = arith.constant dense<0.000000e+00> : vector<2x128xf32>
    %165 = tpu.matmul %164, %156, %cst_65 {dimension_numbers = #tpu.dot_dimension_numbers<[1], [0], [0], [1], [0, 0, 1, 1], [], []>} : vector<2x512xbf16>, vector<512x128xbf16>, vector<2x128xf32> -> vector<2x128xf32>
    %cst_66 = arith.constant dense<0.000000e+00> : vector<128xf32>
    %166 = vector.multi_reduction <add>, %165, %cst_66 [0] : vector<2x128xf32> to vector<128xf32>
    %167 = vector.shape_cast %166 : vector<128xf32> to vector<1x128xf32>
    %cst_67 = arith.constant 7.812500e-03 : f32
    %168 = vector.broadcast %cst_67 : f32 to vector<1x128xf32>
    %169 = arith.mulf %162, %168 : vector<1x128xf32>
    %cst_68 = arith.constant 7.812500e-03 : f32
    %170 = vector.broadcast %cst_68 : f32 to vector<1x128xf32>
    %171 = arith.mulf %167, %170 : vector<1x128xf32>
    %172 = arith.mulf %169, %169 : vector<1x128xf32>
    %173 = arith.subf %171, %172 : vector<1x128xf32>
    %cst_69 = arith.constant 0.000000e+00 : f32
    %174 = vector.broadcast %cst_69 : f32 to vector<1x128xf32>
    %175 = arith.maximumf %173, %174 : vector<1x128xf32>
    %cst_70 = arith.constant 9.99999974E-6 : f32
    %176 = vector.broadcast %cst_70 : f32 to vector<1x128xf32>
    %177 = arith.addf %175, %176 : vector<1x128xf32>
    %178 = math.rsqrt %177 : vector<1x128xf32>
    %179 = tpu.iota {dimensions = array<i32: 0>} : vector<2x128xi32>
    %c0_i32_71 = arith.constant 0 : i32
    %180 = vector.broadcast %c0_i32_71 : i32 to vector<2x128xi32>
    %181 = arith.cmpi eq, %179, %180 : vector<2x128xi32>
    %cst_72 = arith.constant 0.000000e+00 : f32
    %182 = vector.broadcast %cst_72 : f32 to vector<1x128xf32>
    %183 = arith.subf %182, %169 : vector<1x128xf32>
    %184 = arith.mulf %183, %178 : vector<1x128xf32>
    %185 = vector.shape_cast %178 : vector<1x128xf32> to vector<1x128xf32>
    %186 = vector.broadcast %185 : vector<1x128xf32> to vector<2x128xf32>
    %187 = vector.shape_cast %184 : vector<1x128xf32> to vector<1x128xf32>
    %188 = vector.broadcast %187 : vector<1x128xf32> to vector<2x128xf32>
    %189 = arith.select %181, %186, %188 : vector<2x128xi1>, vector<2x128xf32>
    %190 = arith.truncf %189 : vector<2x128xf32> to vector<2x128xbf16>
    %cst_73 = arith.constant dense<0.000000e+00> : vector<2x512xf32>
    %191 = tpu.matmul %190, %157, %cst_73 {dimension_numbers = #tpu.dot_dimension_numbers<[1], [0], [0], [1], [0, 0, 1, 1], [], []>} : vector<2x128xbf16>, vector<128x512xbf16>, vector<2x512xf32> -> vector<2x512xf32>
    %192 = vector.extract_strided_slice %191 {offsets = [0, 0], sizes = [1, 512], strides = [1, 1]} : vector<2x512xf32> to vector<1x512xf32>
    %193 = vector.broadcast %192 : vector<1x512xf32> to vector<2x512xf32>
    %194 = arith.mulf %155, %193 : vector<2x512xf32>
    %195 = vector.extract_strided_slice %191 {offsets = [1, 0], sizes = [1, 512], strides = [1, 1]} : vector<2x512xf32> to vector<1x512xf32>
    %196 = vector.broadcast %195 : vector<1x512xf32> to vector<2x512xf32>
    %197 = arith.addf %194, %196 : vector<2x512xf32>
    %198 = vector.broadcast %158 : vector<1x512xf32> to vector<2x512xf32>
    %199 = arith.addf %197, %198 : vector<2x512xf32>
    %200 = arith.truncf %199 : vector<2x512xf32> to vector<2x512xbf16>
    %c384 = arith.constant 384 : index
    %c0_74 = arith.constant 0 : index
    %201 = vector.load %arg2[%c384, %c0_74] : memref<1152x256xbf16, #tpu.memory_space<vmem>>, vector<512x256xbf16>
    %c32 = arith.constant 32 : index
    %c0_75 = arith.constant 0 : index
    %202 = vector.load %arg4[%c32, %c0_75] : memref<72x512xf32, #tpu.memory_space<vmem>>, vector<1x256xf32>
    %cst_76 = arith.constant dense<0.000000e+00> : vector<2x256xf32>
    %203 = tpu.matmul %200, %201, %cst_76 {dimension_numbers = #tpu.dot_dimension_numbers<[1], [0], [0], [1], [0, 0, 1, 1], [], []>} : vector<2x512xbf16>, vector<512x256xbf16>, vector<2x256xf32> -> vector<2x256xf32>
    %204 = vector.broadcast %202 : vector<1x256xf32> to vector<2x256xf32>
    %205 = arith.addf %203, %204 : vector<2x256xf32>
    %206 = arith.negf %205 : vector<2x256xf32>
    %207 = math.exp %206 : vector<2x256xf32>
    %cst_77 = arith.constant 1.000000e+00 : f32
    %208 = vector.broadcast %cst_77 : f32 to vector<2x256xf32>
    %209 = arith.addf %208, %207 : vector<2x256xf32>
    %210 = arith.divf %208, %209 : vector<2x256xf32>
    %c0_78 = arith.constant 0 : index
    %c0_79 = arith.constant 0 : index
    %211 = vector.load %arg5[%c0_78, %c0_79] : memref<2x256xf32, #tpu.memory_space<vmem>>, vector<2x256xf32>
    tpu.vector_store %arg5[%c0_78, %c0_79], %210 {strides = array<i32>} : memref<2x256xf32, #tpu.memory_space<vmem>>, vector<2x256xf32>,
    return
  }
}

</mosaic_0001>

<llo_original>
// kernel: forward.1
$region0: #{forward.1}
  #allocation0 [shape = 'u32[]', space=smem, size = 0x4, offset = 0x4, fixed_abs, tag = 'smem constant byte address 0x4 - core index']
  #allocation1 [shape = 'u32[144,128]{1,0:T(1,128)}', space=vmem, size = 0x12000, scoped, tag = 'internal scratch']
  %s0 = inlined_call_operand.vmem [shape: bf16[2,256], index: 0, kind: input, shape index: {}]
  %s1 = inlined_call_operand.hbm [shape: bf16[1536,128], index: 1, kind: input, shape index: {}]
  %s2 = inlined_call_operand.hbm [shape: bf16[1152,256], index: 2, kind: input, shape index: {}]
  %s3 = inlined_call_operand.hbm [shape: bf16[384,512], index: 3, kind: input, shape index: {}]
  %s4 = inlined_call_operand.hbm [shape: f32[72,512], index: 4, kind: input, shape index: {}]
  %s5 = inlined_call_operand.vmem [shape: f32[2,256], index: 5, kind: output, shape index: {}]
  %s6 = sld [smem:[#allocation0]]
  $region46: #{forward.1} parent=0
    _
  %s8 = ssub.s32 1, %s6
  %s9 = scalar_select 0, %s8, %s6
  $region1: #{forward.1} parent=0
    #allocation2 [shape = 'u8[393216]{0}', space=vmem, size = 0x60000, scoped, tag = 'input window, operand 1, single buffered']
    #allocation3 [shape = 's32[1]{0}', space=sflag, size = 0x4, scoped, tag = 'scoped memory for forward.1']
    #allocation4 [shape = 'u8[589824]{0}', space=vmem, size = 0x90000, scoped, tag = 'input window, operand 2, single buffered']
    #allocation5 [shape = 's32[1]{0}', space=sflag, size = 0x4, scoped, tag = 'scoped memory for forward.1']
    #allocation6 [shape = 'u8[393216]{0}', space=vmem, size = 0x60000, scoped, tag = 'input window, operand 3, single buffered']
    #allocation7 [shape = 'u8[147456]{0}', space=vmem, size = 0x24000, scoped, tag = 'input window, operand 4, single buffered']
    #allocation8 [shape = 's32[1]{0}', space=sflag, size = 0x4, scoped, tag = 'scoped memory for forward.1']
    %10 = vsyncpa [#allocation3], 0
    %11 = vsyncpa [#allocation5], 0
    %12 = vsyncpa [#allocation8], 0
    // Predicated region
    $region2: #{forward.1} parent=1 // pred_check
      _
    $region3: #{forward.1} parent=1 // pred_check_branch
      %14 = sbr.rel (0) target = $region5
    $region4: #{forward.1} parent=1 // pred_region
      _
    $region5: #{forward.1} parent=1 // pred_fallthru
      _
    // Predicated region
    $region6: #{forward.1} parent=1 // pred_check
      _
    $region7: #{forward.1} parent=1 // pred_check_branch
      %16 = sbr.rel (0) target = $region9
    $region8: #{forward.1} parent=1 // pred_region
      %s18 = ssub.s32 12288, 12288
      %19 = vsyncadd [#allocation3], %s18
      %s20 = sshll.u32 [#allocation2], 4
      %s21 = int_to_ptr.vmem [resolvable:$true] %s20
      %26 = dma.hbm_to_vmem [thread:$0]  %s1, 12288, %s21, [#allocation3], 64, 64, 4
    $region9: #{forward.1} parent=1 // pred_fallthru
      _
    // Predicated region
    $region10: #{forward.1} parent=1 // pred_check
      _
    $region11: #{forward.1} parent=1 // pred_check_branch
      %28 = sbr.rel (0) target = $region13
    $region12: #{forward.1} parent=1 // pred_region
      %s30 = ssub.s32 18432, 18432
      %31 = vsyncadd [#allocation5], %s30
      %s32 = sshll.u32 [#allocation4], 4
      %s33 = int_to_ptr.vmem [resolvable:$true] %s32
      %38 = dma.hbm_to_vmem [thread:$0]  %s2, 18432, %s33, [#allocation5], 128, 128, 8
    $region13: #{forward.1} parent=1 // pred_fallthru
      _
    // Predicated region
    $region14: #{forward.1} parent=1 // pred_check
      _
    $region15: #{forward.1} parent=1 // pred_check_branch
      %40 = sbr.rel (0) target = $region17
    $region16: #{forward.1} parent=1 // pred_region
      %s42 = ssub.s32 12288, 12288
      %43 = vsyncadd [#allocation5], %s42
      %s44 = sshll.u32 [#allocation6], 4
      %s45 = int_to_ptr.vmem [resolvable:$true] %s44
      %50 = dma.hbm_to_vmem [thread:$0]  %s3, 12288, %s45, [#allocation5], 256, 256, 16
    $region17: #{forward.1} parent=1 // pred_fallthru
      _
    // Predicated region
    $region18: #{forward.1} parent=1 // pred_check
      _
    $region19: #{forward.1} parent=1 // pred_check_branch
      %52 = sbr.rel (0) target = $region21
    $region20: #{forward.1} parent=1 // pred_region
      %s54 = ssub.s32 4608, 4608
      %55 = vsyncadd [#allocation8], %s54
      %s56 = sshll.u32 [#allocation7], 4
      %s57 = int_to_ptr.vmem [resolvable:$true] %s56
      %62 = dma.hbm_to_vmem [thread:$0]  %s4, 4608, %s57, [#allocation8], 512, 512, 32
    $region21: #{forward.1} parent=1 // pred_fallthru
      _
    // Predicated region
    $region22: #{forward.1} parent=1 // pred_check
      _
    $region23: #{forward.1} parent=1 // pred_check_branch
      %64 = sbr.rel (0) target = $region25
    $region24: #{forward.1} parent=1 // pred_region
      %65 = dma.done [#allocation3], 12288
    $region25: #{forward.1} parent=1 // pred_fallthru
      _
    // Predicated region
    $region26: #{forward.1} parent=1 // pred_check
      _
    $region27: #{forward.1} parent=1 // pred_check_branch
      %67 = sbr.rel (0) target = $region29
    $region28: #{forward.1} parent=1 // pred_region
      %68 = dma.done [#allocation5], 18432
    $region29: #{forward.1} parent=1 // pred_fallthru
      _
    // Predicated region
    $region30: #{forward.1} parent=1 // pred_check
      _
    $region31: #{forward.1} parent=1 // pred_check_branch
      %70 = sbr.rel (0) target = $region33
    $region32: #{forward.1} parent=1 // pred_region
      %71 = dma.done [#allocation5], 12288
    $region33: #{forward.1} parent=1 // pred_fallthru
      _
    // Predicated region
    $region34: #{forward.1} parent=1 // pred_check
      _
    $region35: #{forward.1} parent=1 // pred_check_branch
      %73 = sbr.rel (0) target = $region37
    $region36: #{forward.1} parent=1 // pred_region
      %74 = dma.done [#allocation8], 4608
    $region37: #{forward.1} parent=1 // pred_fallthru
      _
    %v76 = vld [vmem:[%s0] sm:$0x3]
    %v77 = vld [vmem:[#allocation4] sm:$0xff]
    %v78 = vld [vmem:[#allocation4 + $0x8] sm:$0xff]
    %v79 = vld [vmem:[#allocation4 + $0x10] sm:$0xff]
    %v80 = vld [vmem:[#allocation4 + $0x18] sm:$0xff]
    %v81 = vld [vmem:[#allocation4 + $0x20] sm:$0xff]
    %v82 = vld [vmem:[#allocation4 + $0x28] sm:$0xff]
    %v83 = vld [vmem:[#allocation4 + $0x30] sm:$0xff]
    %v84 = vld [vmem:[#allocation4 + $0x38] sm:$0xff]
    %v85 = vld [vmem:[#allocation4 + $0x40] sm:$0xff]
    %v86 = vld [vmem:[#allocation4 + $0x48] sm:$0xff]
    %v87 = vld [vmem:[#allocation4 + $0x50] sm:$0xff]
    %v88 = vld [vmem:[#allocation4 + $0x58] sm:$0xff]
    %v89 = vld [vmem:[#allocation4 + $0x60] sm:$0xff]
    %v90 = vld [vmem:[#allocation4 + $0x68] sm:$0xff]
    %v91 = vld [vmem:[#allocation4 + $0x70] sm:$0xff]
    %v92 = vld [vmem:[#allocation4 + $0x78] sm:$0xff]
    %v93 = vld [vmem:[#allocation4 + $0x80] sm:$0xff]
    %v94 = vld [vmem:[#allocation4 + $0x88] sm:$0xff]
    %v95 = vld [vmem:[#allocation4 + $0x90] sm:$0xff]
    %v96 = vld [vmem:[#allocation4 + $0x98] sm:$0xff]
    %v97 = vld [vmem:[#allocation4 + $0xa0] sm:$0xff]
    %v98 = vld [vmem:[#allocation4 + $0xa8] sm:$0xff]
    %v99 = vld [vmem:[#allocation4 + $0xb0] sm:$0xff]
    %v100 = vld [vmem:[#allocation4 + $0xb8] sm:$0xff]
    %v101 = vld [vmem:[#allocation4 + $0xc0] sm:$0xff]
    %v102 = vld [vmem:[#allocation4 + $0xc8] sm:$0xff]
    %v103 = vld [vmem:[#allocation4 + $0xd0] sm:$0xff]
    %v104 = vld [vmem:[#allocation4 + $0xd8] sm:$0xff]
    %v105 = vld [vmem:[#allocation4 + $0xe0] sm:$0xff]
    %v106 = vld [vmem:[#allocation4 + $0xe8] sm:$0xff]
    %v107 = vld [vmem:[#allocation4 + $0xf0] sm:$0xff]
    %v108 = vld [vmem:[#allocation4 + $0xf8] sm:$0xff]
    %v109 = vld [vmem:[#allocation7] ss:$8 sm:$0x3]
    %v111 = vlaneseq
    %v112 = vshrl.u32 %v111, 7
    %v113 = vsub.s32 0, %v112
    %v114 = vrot.slane %v109, %v113
    %v115 = vlaneseq
    %v116 = vshrl.u32 %v115, 7
    %v117 = vsub.s32 1, %v116
    %v118 = vrot.slane %v109, %v117
    %v123 = vunpack.c.l.s4 1966171168
    %v124 = vunpack.c.0.s8 %v123
    %v125 = vlaneseq
    %v126 = vshrl.u32 %v125, 7
    %v127 = vsub.s32 %v124, %v126
    %v128 = vrot.slane %v76, %v127
    %v129 = vcombine.high %v128, %v128
    %v131 = vunpack.c.l.s4 1966171168
    %v132 = vunpack.c.0.s8 %v131
    %v133 = vlaneseq
    %v134 = vshrl.u32 %v133, 7
    %v135 = vsub.s32 %v132, %v134
    %v136 = vrot.slane %v128, %v135
    %v138 = vunpack.c.l.s4 1966171168
    %v139 = vunpack.c.0.s8 %v138
    %v140 = vlaneseq
    %v141 = vshrl.u32 %v140, 7
    %v142 = vsub.s32 %v139, %v141
    %v143 = vrot.slane %v129, %v142
    %v178 = vunpack.c.l.b16 %v77
    %v179 = vunpack.c.h.b16 %v77
    %v180 = vunpack.c.l.b16 %v78
    %v181 = vunpack.c.h.b16 %v78
    %v182 = vunpack.c.l.b16 %v79
    %v183 = vunpack.c.h.b16 %v79
    %v184 = vunpack.c.l.b16 %v80
    %v185 = vunpack.c.h.b16 %v80
    %v186 = vunpack.c.l.b16 %v81
    %v187 = vunpack.c.h.b16 %v81
    %v188 = vunpack.c.l.b16 %v82
    %v189 = vunpack.c.h.b16 %v82
    %v190 = vunpack.c.l.b16 %v83
    %v191 = vunpack.c.h.b16 %v83
    %v192 = vunpack.c.l.b16 %v84
    %v193 = vunpack.c.h.b16 %v84
    %v194 = vunpack.c.l.b16 %v85
    %v195 = vunpack.c.h.b16 %v85
    %v196 = vunpack.c.l.b16 %v86
    %v197 = vunpack.c.h.b16 %v86
    %v198 = vunpack.c.l.b16 %v87
    %v199 = vunpack.c.h.b16 %v87
    %v200 = vunpack.c.l.b16 %v88
    %v201 = vunpack.c.h.b16 %v88
    %v202 = vunpack.c.l.b16 %v89
    %v203 = vunpack.c.h.b16 %v89
    %v204 = vunpack.c.l.b16 %v90
    %v205 = vunpack.c.h.b16 %v90
    %v206 = vunpack.c.l.b16 %v91
    %v207 = vunpack.c.h.b16 %v91
    %v208 = vunpack.c.l.b16 %v92
    %v209 = vunpack.c.h.b16 %v92
    %v210 = vunpack.c.l.b16 %v93
    %v211 = vunpack.c.h.b16 %v93
    %v212 = vunpack.c.l.b16 %v94
    %v213 = vunpack.c.h.b16 %v94
    %v214 = vunpack.c.l.b16 %v95
    %v215 = vunpack.c.h.b16 %v95
    %v216 = vunpack.c.l.b16 %v96
    %v217 = vunpack.c.h.b16 %v96
    %v218 = vunpack.c.l.b16 %v97
    %v219 = vunpack.c.h.b16 %v97
    %v220 = vunpack.c.l.b16 %v98
    %v221 = vunpack.c.h.b16 %v98
    %v222 = vunpack.c.l.b16 %v99
    %v223 = vunpack.c.h.b16 %v99
    %v224 = vunpack.c.l.b16 %v100
    %v225 = vunpack.c.h.b16 %v100
    %v226 = vunpack.c.l.b16 %v101
    %v227 = vunpack.c.h.b16 %v101
    %v228 = vunpack.c.l.b16 %v102
    %v229 = vunpack.c.h.b16 %v102
    %v230 = vunpack.c.l.b16 %v103
    %v231 = vunpack.c.h.b16 %v103
    %v232 = vunpack.c.l.b16 %v104
    %v233 = vunpack.c.h.b16 %v104
    %v234 = vunpack.c.l.b16 %v105
    %v235 = vunpack.c.h.b16 %v105
    %v236 = vunpack.c.l.b16 %v106
    %v237 = vunpack.c.h.b16 %v106
    %v238 = vunpack.c.l.b16 %v107
    %v239 = vunpack.c.h.b16 %v107
    %v240 = vunpack.c.l.b16 %v108
    %v241 = vunpack.c.h.b16 %v108
    %v242 = vpack.c.b16 %v180, %v178
    %v243 = vpack.c.b16 %v181, %v179
    %v244 = vpack.c.b16 %v184, %v182
    %v245 = vpack.c.b16 %v185, %v183
    %v246 = vpack.c.b16 %v188, %v186
    %v247 = vpack.c.b16 %v189, %v187
    %v248 = vpack.c.b16 %v192, %v190
    %v249 = vpack.c.b16 %v193, %v191
    %v250 = vpack.c.b16 %v196, %v194
    %v251 = vpack.c.b16 %v197, %v195
    %v252 = vpack.c.b16 %v200, %v198
    %v253 = vpack.c.b16 %v201, %v199
    %v254 = vpack.c.b16 %v204, %v202
    %v255 = vpack.c.b16 %v205, %v203
    %v256 = vpack.c.b16 %v208, %v206
    %v257 = vpack.c.b16 %v209, %v207
    %v258 = vpack.c.b16 %v212, %v210
    %v259 = vpack.c.b16 %v213, %v211
    %v260 = vpack.c.b16 %v216, %v214
    %v261 = vpack.c.b16 %v217, %v215
    %v262 = vpack.c.b16 %v220, %v218
    %v263 = vpack.c.b16 %v221, %v219
    %v264 = vpack.c.b16 %v224, %v222
    %v265 = vpack.c.b16 %v225, %v223
    %v266 = vpack.c.b16 %v228, %v226
    %v267 = vpack.c.b16 %v229, %v227
    %v268 = vpack.c.b16 %v232, %v230
    %v269 = vpack.c.b16 %v233, %v231
    %v270 = vpack.c.b16 %v236, %v234
    %v271 = vpack.c.b16 %v237, %v235
    %v272 = vpack.c.b16 %v240, %v238
    %v273 = vpack.c.b16 %v241, %v239
    %306 = vmatprep.subr.bf16.mxu0 %v243
    %307 = vmatpush1.bf16.msra.mxu0 %v242
    %308 = vmatprep.subr.bf16.mxu0 %v245
    %309 = vmatpush1.bf16.msra.mxu0 %v244
    %310 = vmatprep.subr.bf16.mxu0 %v247
    %311 = vmatpush1.bf16.msra.mxu0 %v246
    %312 = vmatprep.subr.bf16.mxu0 %v249
    %313 = vmatpush1.bf16.msra.mxu0 %v248
    %314 = vmatprep.subr.bf16.mxu0 %v251
    %315 = vmatpush1.bf16.msra.mxu0 %v250
    %316 = vmatprep.subr.bf16.mxu0 %v253
    %317 = vmatpush1.bf16.msra.mxu0 %v252
    %318 = vmatprep.subr.bf16.mxu0 %v255
    %319 = vmatpush1.bf16.msra.mxu0 %v254
    %320 = vmatprep.subr.bf16.mxu0 %v257
    %321 = vmatpush1.bf16.msra.mxu0 %v256
    %322 = vmatprep.subr.bf16.mxu0 %v259
    %323 = vmatpush1.bf16.msra.mxu0 %v258
    %324 = vmatprep.subr.bf16.mxu0 %v261
    %325 = vmatpush1.bf16.msra.mxu0 %v260
    %326 = vmatprep.subr.bf16.mxu0 %v263
    %327 = vmatpush1.bf16.msra.mxu0 %v262
    %328 = vmatprep.subr.bf16.mxu0 %v265
    %329 = vmatpush1.bf16.msra.mxu0 %v264
    %330 = vmatprep.subr.bf16.mxu0 %v267
    %331 = vmatpush1.bf16.msra.mxu0 %v266
    %332 = vmatprep.subr.bf16.mxu0 %v269
    %333 = vmatpush1.bf16.msra.mxu0 %v268
    %334 = vmatprep.subr.bf16.mxu0 %v271
    %335 = vmatpush1.bf16.msra.mxu0 %v270
    %336 = vmatprep.subr.bf16.mxu0 %v273
    %337 = vmatpush1.bf16.msra.mxu0 %v272
    %338 = vmatprep.mubr.bf16.mxu0 %v143
    %339 = vmatmul.mubr.bf16.gmra.mrb[0].mxu0 %v136
    %v340 = vpop.f32.mrb[0].mxu0
    %v341 = vadd.f32 %v114, %v340
    %v342 = vpop.f32.mrb[0].mxu0
    %v343 = vadd.f32 %v118, %v342
    %v344 = vpop.f32.mrb[0].mxu0
    %v345 = vpop.f32.mrb[0].mxu0
    %346 = vdwg.mxu0
    %v347 = vld [vmem:[#allocation2 + $0x80] sm:$0xf]
    %v348 = vld [vmem:[#allocation2 + $0x84] sm:$0xf]
    %v349 = vld [vmem:[#allocation2 + $0x88] sm:$0xf]
    %v350 = vld [vmem:[#allocation2 + $0x8c] sm:$0xf]
    %v351 = vld [vmem:[#allocation2 + $0x90] sm:$0xf]
    %v352 = vld [vmem:[#allocation2 + $0x94] sm:$0xf]
    %v353 = vld [vmem:[#allocation2 + $0x98] sm:$0xf]
    %v354 = vld [vmem:[#allocation2 + $0x9c] sm:$0xf]
    %v355 = vld [vmem:[#allocation2 + $0xa0] sm:$0xf]
    %v356 = vld [vmem:[#allocation2 + $0xa4] sm:$0xf]
    %v357 = vld [vmem:[#allocation2 + $0xa8] sm:$0xf]
    %v358 = vld [vmem:[#allocation2 + $0xac] sm:$0xf]
    %v359 = vld [vmem:[#allocation2 + $0xb0] sm:$0xf]
    %v360 = vld [vmem:[#allocation2 + $0xb4] sm:$0xf]
    %v361 = vld [vmem:[#allocation2 + $0xb8] sm:$0xf]
    %v362 = vld [vmem:[#allocation2 + $0xbc] sm:$0xf]
    %v363 = vld [vmem:[#allocation2 + $0xc0] sm:$0xf]
    %v364 = vld [vmem:[#allocation2 + $0xc4] sm:$0xf]
    %v365 = vld [vmem:[#allocation2 + $0xc8] sm:$0xf]
    %v366 = vld [vmem:[#allocation2 + $0xcc] sm:$0xf]
    %v367 = vld [vmem:[#allocation2 + $0xd0] sm:$0xf]
    %v368 = vld [vmem:[#allocation2 + $0xd4] sm:$0xf]
    %v369 = vld [vmem:[#allocation2 + $0xd8] sm:$0xf]
    %v370 = vld [vmem:[#allocation2 + $0xdc] sm:$0xf]
    %v371 = vld [vmem:[#allocation2 + $0xe0] sm:$0xf]
    %v372 = vld [vmem:[#allocation2 + $0xe4] sm:$0xf]
    %v373 = vld [vmem:[#allocation2 + $0xe8] sm:$0xf]
    %v374 = vld [vmem:[#allocation2 + $0xec] sm:$0xf]
    %v375 = vld [vmem:[#allocation2 + $0xf0] sm:$0xf]
    %v376 = vld [vmem:[#allocation2 + $0xf4] sm:$0xf]
    %v377 = vld [vmem:[#allocation2 + $0xf8] sm:$0xf]
    %v378 = vld [vmem:[#allocation2 + $0xfc] sm:$0xf]
    %v379 = vld [vmem:[#allocation4 + $0x380] sm:$0xff]
    %v380 = vld [vmem:[#allocation4 + $0x388] sm:$0xff]
    %v381 = vld [vmem:[#allocation4 + $0x390] sm:$0xff]
    %v382 = vld [vmem:[#allocation4 + $0x398] sm:$0xff]
    %v383 = vld [vmem:[#allocation4 + $0x3a0] sm:$0xff]
    %v384 = vld [vmem:[#allocation4 + $0x3a8] sm:$0xff]
    %v385 = vld [vmem:[#allocation4 + $0x3b0] sm:$0xff]
    %v386 = vld [vmem:[#allocation4 + $0x3b8] sm:$0xff]
    %v387 = vld [vmem:[#allocation4 + $0x3c0] sm:$0xff]
    %v388 = vld [vmem:[#allocation4 + $0x3c8] sm:$0xff]
    %v389 = vld [vmem:[#allocation4 + $0x3d0] sm:$0xff]
    %v390 = vld [vmem:[#allocation4 + $0x3d8] sm:$0xff]
    %v391 = vld [vmem:[#allocation4 + $0x3e0] sm:$0xff]
    %v392 = vld [vmem:[#allocation4 + $0x3e8] sm:$0xff]
    %v393 = vld [vmem:[#allocation4 + $0x3f0] sm:$0xff]
    %v394 = vld [vmem:[#allocation4 + $0x3f8] sm:$0xff]
    %s395 = scalar_lea.vmem [#allocation7], 160
    %v396 = vld [vmem:[%s395] ss:$8 sm:$0x3]
    %v397 = vpack.c.bf16 %v341, %v341
    %v398 = vpack.c.bf16 %v343, %v343
    %v431 = vunpack.c.l.b16 %v347
    %v432 = vunpack.c.l.b16 %v348
    %v433 = vunpack.c.l.b16 %v349
    %v434 = vunpack.c.l.b16 %v350
    %v435 = vunpack.c.l.b16 %v351
    %v436 = vunpack.c.l.b16 %v352
    %v437 = vunpack.c.l.b16 %v353
    %v438 = vunpack.c.l.b16 %v354
    %v439 = vunpack.c.l.b16 %v355
    %v440 = vunpack.c.l.b16 %v356
    %v441 = vunpack.c.l.b16 %v357
    %v442 = vunpack.c.l.b16 %v358
    %v443 = vunpack.c.l.b16 %v359
    %v444 = vunpack.c.l.b16 %v360
    %v445 = vunpack.c.l.b16 %v361
    %v446 = vunpack.c.l.b16 %v362
    %v447 = vunpack.c.l.b16 %v363
    %v448 = vunpack.c.l.b16 %v364
    %v449 = vunpack.c.l.b16 %v365
    %v450 = vunpack.c.l.b16 %v366
    %v451 = vunpack.c.l.b16 %v367
    %v452 = vunpack.c.l.b16 %v368
    %v453 = vunpack.c.l.b16 %v369
    %v454 = vunpack.c.l.b16 %v370
    %v455 = vunpack.c.l.b16 %v371
    %v456 = vunpack.c.l.b16 %v372
    %v457 = vunpack.c.l.b16 %v373
    %v458 = vunpack.c.l.b16 %v374
    %v459 = vunpack.c.l.b16 %v375
    %v460 = vunpack.c.l.b16 %v376
    %v461 = vunpack.c.l.b16 %v377
    %v462 = vunpack.c.l.b16 %v378
    %v463 = vpack.c.b16 %v432, %v431
    %v464 = vpack.c.b16 %v434, %v433
    %v465 = vpack.c.b16 %v436, %v435
    %v466 = vpack.c.b16 %v438, %v437
    %v467 = vpack.c.b16 %v440, %v439
    %v468 = vpack.c.b16 %v442, %v441
    %v469 = vpack.c.b16 %v444, %v443
    %v470 = vpack.c.b16 %v446, %v445
    %v471 = vpack.c.b16 %v448, %v447
    %v472 = vpack.c.b16 %v450, %v449
    %v473 = vpack.c.b16 %v452, %v451
    %v474 = vpack.c.b16 %v454, %v453
    %v475 = vpack.c.b16 %v456, %v455
    %v476 = vpack.c.b16 %v458, %v457
    %v477 = vpack.c.b16 %v460, %v459
    %v478 = vpack.c.b16 %v462, %v461
    %495 = vmatprep.subr.bf16.mxu0 0
    %496 = vmatpush1.bf16.msra.mxu0 %v463
    %497 = vmatprep.subr.bf16.mxu0 0
    %498 = vmatpush1.bf16.msra.mxu0 %v464
    %499 = vmatprep.subr.bf16.mxu0 0
    %500 = vmatpush1.bf16.msra.mxu0 %v465
    %501 = vmatprep.subr.bf16.mxu0 0
    %502 = vmatpush1.bf16.msra.mxu0 %v466
    %503 = vmatprep.subr.bf16.mxu0 0
    %504 = vmatpush1.bf16.msra.mxu0 %v467
    %505 = vmatprep.subr.bf16.mxu0 0
    %506 = vmatpush1.bf16.msra.mxu0 %v468
    %507 = vmatprep.subr.bf16.mxu0 0
    %508 = vmatpush1.bf16.msra.mxu0 %v469
    %509 = vmatprep.subr.bf16.mxu0 0
    %510 = vmatpush1.bf16.msra.mxu0 %v470
    %511 = vmatprep.subr.bf16.mxu0 0
    %512 = vmatpush1.bf16.msra.mxu0 %v471
    %513 = vmatprep.subr.bf16.mxu0 0
    %514 = vmatpush1.bf16.msra.mxu0 %v472
    %515 = vmatprep.subr.bf16.mxu0 0
    %516 = vmatpush1.bf16.msra.mxu0 %v473
    %517 = vmatprep.subr.bf16.mxu0 0
    %518 = vmatpush1.bf16.msra.mxu0 %v474
    %519 = vmatprep.subr.bf16.mxu0 0
    %520 = vmatpush1.bf16.msra.mxu0 %v475
    %521 = vmatprep.subr.bf16.mxu0 0
    %522 = vmatpush1.bf16.msra.mxu0 %v476
    %523 = vmatprep.subr.bf16.mxu0 0
    %524 = vmatpush1.bf16.msra.mxu0 %v477
    %525 = vmatprep.subr.bf16.mxu0 0
    %526 = vmatpush1.bf16.msra.mxu0 %v478
    %527 = vmatprep.mubr.bf16.mxu0 %v398
    %528 = vmatmul.mubr.bf16.gmra.mrb[0].mxu0 %v397
    %v529 = vpop.f32.mrb[0].mxu0
    %v530 = vadd.f32 0.0, %v529
    %v531 = vpop.f32.mrb[0].mxu0
    %v532 = vpop.f32.mrb[0].mxu0
    %v533 = vpop.f32.mrb[0].mxu0
    %534 = vdwg.mxu0
    %vm535 = vcmask 1041408
    %v536 = vsel %vm535, %v530, 0.0
    %v537 = vrot.slane %v536, 4
    %v538 = vadd.f32 %v536, %v537
    %v539 = vrot.slane %v538, 2
    %v540 = vadd.f32 %v538, %v539
    %v541 = vrot.slane %v540, 1
    %v542 = vadd.f32 %v540, %v541
    %v543 = vmul.f32 %v341, %v341
    %v544 = vmul.f32 %v343, %v343
    %v545 = vpack.c.bf16 %v543, %v543
    %v546 = vpack.c.bf16 %v544, %v544
    %547 = vmatprep.subr.bf16.mxu0 0
    %548 = vmatpush1.bf16.msra.mxu0 %v463
    %549 = vmatprep.subr.bf16.mxu0 0
    %550 = vmatpush1.bf16.msra.mxu0 %v464
    %551 = vmatprep.subr.bf16.mxu0 0
    %552 = vmatpush1.bf16.msra.mxu0 %v465
    %553 = vmatprep.subr.bf16.mxu0 0
    %554 = vmatpush1.bf16.msra.mxu0 %v466
    %555 = vmatprep.subr.bf16.mxu0 0
    %556 = vmatpush1.bf16.msra.mxu0 %v467
    %557 = vmatprep.subr.bf16.mxu0 0
    %558 = vmatpush1.bf16.msra.mxu0 %v468
    %559 = vmatprep.subr.bf16.mxu0 0
    %560 = vmatpush1.bf16.msra.mxu0 %v469
    %561 = vmatprep.subr.bf16.mxu0 0
    %562 = vmatpush1.bf16.msra.mxu0 %v470
    %563 = vmatprep.subr.bf16.mxu0 0
    %564 = vmatpush1.bf16.msra.mxu0 %v471
    %565 = vmatprep.subr.bf16.mxu0 0
    %566 = vmatpush1.bf16.msra.mxu0 %v472
    %567 = vmatprep.subr.bf16.mxu0 0
    %568 = vmatpush1.bf16.msra.mxu0 %v473
    %569 = vmatprep.subr.bf16.mxu0 0
    %570 = vmatpush1.bf16.msra.mxu0 %v474
    %571 = vmatprep.subr.bf16.mxu0 0
    %572 = vmatpush1.bf16.msra.mxu0 %v475
    %573 = vmatprep.subr.bf16.mxu0 0
    %574 = vmatpush1.bf16.msra.mxu0 %v476
    %575 = vmatprep.subr.bf16.mxu0 0
    %576 = vmatpush1.bf16.msra.mxu0 %v477
    %577 = vmatprep.subr.bf16.mxu0 0
    %578 = vmatpush1.bf16.msra.mxu0 %v478
    %579 = vmatprep.mubr.bf16.mxu0 %v546
    %580 = vmatmul.mubr.bf16.gmra.mrb[0].mxu0 %v545
    %v581 = vpop.f32.mrb[0].mxu0
    %v582 = vadd.f32 0.0, %v581
    %v583 = vpop.f32.mrb[0].mxu0
    %v584 = vpop.f32.mrb[0].mxu0
    %v585 = vpop.f32.mrb[0].mxu0
    %586 = vdwg.mxu0
    %v587 = vsel %vm535, %v582, 0.0
    %v588 = vrot.slane %v587, 4
    %v589 = vadd.f32 %v587, %v588
    %v590 = vrot.slane %v589, 2
    %v591 = vadd.f32 %v589, %v590
    %v592 = vrot.slane %v591, 1
    %v593 = vadd.f32 %v591, %v592
    %v594 = vmul.f32 %v542, 0.03125
    %v595 = vmul.f32 %v593, 0.03125
    %v596 = vmul.f32 %v594, %v594
    %v597 = vsub.f32 %v595, %v596
    %v598 = vmax.f32 %v597, 0.0
    %v599 = vadd.f32 %v598, 1e-05
    %v600 = vrsqrt.pop %v599
    %v601 = vlaneseq
    %v602 = vshrl.u32 %v601, 7
    %vm603 = vcmp.eq.s32.totalorder %v602, 0
    %v604 = vsub.f32 0.0, %v594
    %v605 = vmul.f32 %v604, %v600
    %v606 = vsel %vm603, %v600, %v605
    %v607 = vpack.c.bf16 %v606, %v606
    %v624 = vunpack.c.l.b16 %v379
    %v625 = vunpack.c.h.b16 %v379
    %v626 = vunpack.c.l.b16 %v380
    %v627 = vunpack.c.h.b16 %v380
    %v628 = vunpack.c.l.b16 %v381
    %v629 = vunpack.c.h.b16 %v381
    %v630 = vunpack.c.l.b16 %v382
    %v631 = vunpack.c.h.b16 %v382
    %v632 = vunpack.c.l.b16 %v383
    %v633 = vunpack.c.h.b16 %v383
    %v634 = vunpack.c.l.b16 %v384
    %v635 = vunpack.c.h.b16 %v384
    %v636 = vunpack.c.l.b16 %v385
    %v637 = vunpack.c.h.b16 %v385
    %v638 = vunpack.c.l.b16 %v386
    %v639 = vunpack.c.h.b16 %v386
    %v640 = vunpack.c.l.b16 %v387
    %v641 = vunpack.c.h.b16 %v387
    %v642 = vunpack.c.l.b16 %v388
    %v643 = vunpack.c.h.b16 %v388
    %v644 = vunpack.c.l.b16 %v389
    %v645 = vunpack.c.h.b16 %v389
    %v646 = vunpack.c.l.b16 %v390
    %v647 = vunpack.c.h.b16 %v390
    %v648 = vunpack.c.l.b16 %v391
    %v649 = vunpack.c.h.b16 %v391
    %v650 = vunpack.c.l.b16 %v392
    %v651 = vunpack.c.h.b16 %v392
    %v652 = vunpack.c.l.b16 %v393
    %v653 = vunpack.c.h.b16 %v393
    %v654 = vunpack.c.l.b16 %v394
    %v655 = vunpack.c.h.b16 %v394
    %v656 = vpack.c.b16 %v626, %v624
    %v657 = vpack.c.b16 %v627, %v625
    %v658 = vpack.c.b16 %v630, %v628
    %v659 = vpack.c.b16 %v631, %v629
    %v660 = vpack.c.b16 %v634, %v632
    %v661 = vpack.c.b16 %v635, %v633
    %v662 = vpack.c.b16 %v638, %v636
    %v663 = vpack.c.b16 %v639, %v637
    %v664 = vpack.c.b16 %v642, %v640
    %v665 = vpack.c.b16 %v643, %v641
    %v666 = vpack.c.b16 %v646, %v644
    %v667 = vpack.c.b16 %v647, %v645
    %v668 = vpack.c.b16 %v650, %v648
    %v669 = vpack.c.b16 %v651, %v649
    %v670 = vpack.c.b16 %v654, %v652
    %v671 = vpack.c.b16 %v655, %v653
    %688 = vmatprep.subr.bf16.mxu0 %v657
    %689 = vmatpush1.bf16.msra.mxu0 %v656
    %690 = vmatprep.subr.bf16.mxu0 %v659
    %691 = vmatpush1.bf16.msra.mxu0 %v658
    %692 = vmatprep.subr.bf16.mxu0 %v661
    %693 = vmatpush1.bf16.msra.mxu0 %v660
    %694 = vmatprep.subr.bf16.mxu0 %v663
    %695 = vmatpush1.bf16.msra.mxu0 %v662
    %696 = vmatprep.subr.bf16.mxu0 %v665
    %697 = vmatpush1.bf16.msra.mxu0 %v664
    %698 = vmatprep.subr.bf16.mxu0 %v667
    %699 = vmatpush1.bf16.msra.mxu0 %v666
    %700 = vmatprep.subr.bf16.mxu0 %v669
    %701 = vmatpush1.bf16.msra.mxu0 %v668
    %702 = vmatprep.subr.bf16.mxu0 %v671
    %703 = vmatpush1.bf16.msra.mxu0 %v670
    %704 = vmatprep.subr.bf16.mxu0 0
    %705 = vmatpush1.bf16.msra.mxu0 0
    %706 = vmatprep.subr.bf16.mxu0 0
    %707 = vmatpush1.bf16.msra.mxu0 0
    %708 = vmatprep.subr.bf16.mxu0 0
    %709 = vmatpush1.bf16.msra.mxu0 0
    %710 = vmatprep.subr.bf16.mxu0 0
    %711 = vmatpush1.bf16.msra.mxu0 0
    %712 = vmatprep.subr.bf16.mxu0 0
    %713 = vmatpush1.bf16.msra.mxu0 0
    %714 = vmatprep.subr.bf16.mxu0 0
    %715 = vmatpush1.bf16.msra.mxu0 0
    %716 = vmatprep.subr.bf16.mxu0 0
    %717 = vmatpush1.bf16.msra.mxu0 0
    %718 = vmatprep.subr.bf16.mxu0 0
    %719 = vmatpush1.bf16.msra.mxu0 0
    %720 = vmatprep.mubr.bf16.mxu0 0
    %721 = vmatmul.mubr.bf16.gmra.mrb[0].mxu0 %v607
    %v722 = vpop.f32.mrb[0].mxu0
    %v723 = vadd.f32 0.0, %v722
    %v724 = vpop.f32.mrb[0].mxu0
    %v725 = vadd.f32 0.0, %v724
    %v726 = vpop.f32.mrb[0].mxu0
    %v727 = vpop.f32.mrb[0].mxu0
    %728 = vdwg.mxu0
    %v729 = vlaneseq
    %v730 = vshrl.u32 %v729, 7
    %v731 = vsub.s32 0, %v730
    %v732 = vrot.slane %v723, %v731
    %v733 = vlaneseq
    %v734 = vshrl.u32 %v733, 7
    %v735 = vsub.s32 0, %v734
    %v736 = vrot.slane %v725, %v735
    %v737 = vmul.f32 %v341, %v732
    %v738 = vmul.f32 %v343, %v736
    %v739 = vlaneseq
    %v740 = vshrl.u32 %v739, 7
    %v741 = vsub.s32 1, %v740
    %v742 = vrot.slane %v723, %v741
    %v743 = vlaneseq
    %v744 = vshrl.u32 %v743, 7
    %v745 = vsub.s32 1, %v744
    %v746 = vrot.slane %v725, %v745
    %v747 = vadd.f32 %v737, %v742
    %v748 = vadd.f32 %v738, %v746
    %v750 = vlaneseq
    %v751 = vshrl.u32 %v750, 7
    %v752 = vsub.s32 0, %v751
    %v753 = vrot.slane %v396, %v752
    %v754 = vlaneseq
    %v755 = vshrl.u32 %v754, 7
    %v756 = vsub.s32 1, %v755
    %v757 = vrot.slane %v396, %v756
    %v760 = vadd.f32 %v747, %v753
    %v761 = vadd.f32 %v748, %v757
    %v762 = vpack.c.bf16 %v760, %v760
    %v763 = vpack.c.bf16 %v761, %v761
    %v764 = vld [vmem:[#allocation2] sm:$0xf]
    %v765 = vld [vmem:[#allocation2 + $0x4] sm:$0xf]
    %v766 = vld [vmem:[#allocation2 + $0x8] sm:$0xf]
    %v767 = vld [vmem:[#allocation2 + $0xc] sm:$0xf]
    %v768 = vld [vmem:[#allocation2 + $0x10] sm:$0xf]
    %v769 = vld [vmem:[#allocation2 + $0x14] sm:$0xf]
    %v770 = vld [vmem:[#allocation2 + $0x18] sm:$0xf]
    %v771 = vld [vmem:[#allocation2 + $0x1c] sm:$0xf]
    %v772 = vld [vmem:[#allocation2 + $0x20] sm:$0xf]
    %v773 = vld [vmem:[#allocation2 + $0x24] sm:$0xf]
    %v774 = vld [vmem:[#allocation2 + $0x28] sm:$0xf]
    %v775 = vld [vmem:[#allocation2 + $0x2c] sm:$0xf]
    %v776 = vld [vmem:[#allocation2 + $0x30] sm:$0xf]
    %v777 = vld [vmem:[#allocation2 + $0x34] sm:$0xf]
    %v778 = vld [vmem:[#allocation2 + $0x38] sm:$0xf]
    %v779 = vld [vmem:[#allocation2 + $0x3c] sm:$0xf]
    %v780 = vld [vmem:[#allocation2 + $0x40] sm:$0xf]
    %v781 = vld [vmem:[#allocation2 + $0x44] sm:$0xf]
    %v782 = vld [vmem:[#allocation2 + $0x48] sm:$0xf]
    %v783 = vld [vmem:[#allocation2 + $0x4c] sm:$0xf]
    %v784 = vld [vmem:[#allocation2 + $0x50] sm:$0xf]
    %v785 = vld [vmem:[#allocation2 + $0x54] sm:$0xf]
    %v786 = vld [vmem:[#allocation2 + $0x58] sm:$0xf]
    %v787 = vld [vmem:[#allocation2 + $0x5c] sm:$0xf]
    %v788 = vld [vmem:[#allocation2 + $0x60] sm:$0xf]
    %v789 = vld [vmem:[#allocation2 + $0x64] sm:$0xf]
    %v790 = vld [vmem:[#allocation2 + $0x68] sm:$0xf]
    %v791 = vld [vmem:[#allocation2 + $0x6c] sm:$0xf]
    %v792 = vld [vmem:[#allocation2 + $0x70] sm:$0xf]
    %v793 = vld [vmem:[#allocation2 + $0x74] sm:$0xf]
    %v794 = vld [vmem:[#allocation2 + $0x78] sm:$0xf]
    %v795 = vld [vmem:[#allocation2 + $0x7c] sm:$0xf]
    %v796 = vld [vmem:[#allocation7 + $0x20] ss:$0 sm:$0xff]
    %v829 = vunpack.c.l.b16 %v764
    %v830 = vunpack.c.l.b16 %v765
    %v831 = vunpack.c.l.b16 %v766
    %v832 = vunpack.c.l.b16 %v767
    %v833 = vunpack.c.l.b16 %v768
    %v834 = vunpack.c.l.b16 %v769
    %v835 = vunpack.c.l.b16 %v770
    %v836 = vunpack.c.l.b16 %v771
    %v837 = vunpack.c.l.b16 %v772
    %v838 = vunpack.c.l.b16 %v773
    %v839 = vunpack.c.l.b16 %v774
    %v840 = vunpack.c.l.b16 %v775
    %v841 = vunpack.c.l.b16 %v776
    %v842 = vunpack.c.l.b16 %v777
    %v843 = vunpack.c.l.b16 %v778
    %v844 = vunpack.c.l.b16 %v779
    %v845 = vunpack.c.l.b16 %v780
    %v846 = vunpack.c.l.b16 %v781
    %v847 = vunpack.c.l.b16 %v782
    %v848 = vunpack.c.l.b16 %v783
    %v849 = vunpack.c.l.b16 %v784
    %v850 = vunpack.c.l.b16 %v785
    %v851 = vunpack.c.l.b16 %v786
    %v852 = vunpack.c.l.b16 %v787
    %v853 = vunpack.c.l.b16 %v788
    %v854 = vunpack.c.l.b16 %v789
    %v855 = vunpack.c.l.b16 %v790
    %v856 = vunpack.c.l.b16 %v791
    %v857 = vunpack.c.l.b16 %v792
    %v858 = vunpack.c.l.b16 %v793
    %v859 = vunpack.c.l.b16 %v794
    %v860 = vunpack.c.l.b16 %v795
    %v861 = vpack.c.b16 %v830, %v829
    %v862 = vpack.c.b16 %v832, %v831
    %v863 = vpack.c.b16 %v834, %v833
    %v864 = vpack.c.b16 %v836, %v835
    %v865 = vpack.c.b16 %v838, %v837
    %v866 = vpack.c.b16 %v840, %v839
    %v867 = vpack.c.b16 %v842, %v841
    %v868 = vpack.c.b16 %v844, %v843
    %v869 = vpack.c.b16 %v846, %v845
    %v870 = vpack.c.b16 %v848, %v847
    %v871 = vpack.c.b16 %v850, %v849
    %v872 = vpack.c.b16 %v852, %v851
    %v873 = vpack.c.b16 %v854, %v853
    %v874 = vpack.c.b16 %v856, %v855
    %v875 = vpack.c.b16 %v858, %v857
    %v876 = vpack.c.b16 %v860, %v859
    %893 = vmatprep.subr.bf16.mxu0 0
    %894 = vmatpush1.bf16.msra.mxu0 %v861
    %895 = vmatprep.subr.bf16.mxu0 0
    %896 = vmatpush1.bf16.msra.mxu0 %v862
    %897 = vmatprep.subr.bf16.mxu0 0
    %898 = vmatpush1.bf16.msra.mxu0 %v863
    %899 = vmatprep.subr.bf16.mxu0 0
    %900 = vmatpush1.bf16.msra.mxu0 %v864
    %901 = vmatprep.subr.bf16.mxu0 0
    %902 = vmatpush1.bf16.msra.mxu0 %v865
    %903 = vmatprep.subr.bf16.mxu0 0
    %904 = vmatpush1.bf16.msra.mxu0 %v866
    %905 = vmatprep.subr.bf16.mxu0 0
    %906 = vmatpush1.bf16.msra.mxu0 %v867
    %907 = vmatprep.subr.bf16.mxu0 0
    %908 = vmatpush1.bf16.msra.mxu0 %v868
    %909 = vmatprep.subr.bf16.mxu0 0
    %910 = vmatpush1.bf16.msra.mxu0 %v869
    %911 = vmatprep.subr.bf16.mxu0 0
    %912 = vmatpush1.bf16.msra.mxu0 %v870
    %913 = vmatprep.subr.bf16.mxu0 0
    %914 = vmatpush1.bf16.msra.mxu0 %v871
    %915 = vmatprep.subr.bf16.mxu0 0
    %916 = vmatpush1.bf16.msra.mxu0 %v872
    %917 = vmatprep.subr.bf16.mxu0 0
    %918 = vmatpush1.bf16.msra.mxu0 %v873
    %919 = vmatprep.subr.bf16.mxu0 0
    %920 = vmatpush1.bf16.msra.mxu0 %v874
    %921 = vmatprep.subr.bf16.mxu0 0
    %922 = vmatpush1.bf16.msra.mxu0 %v875
    %923 = vmatprep.subr.bf16.mxu0 0
    %924 = vmatpush1.bf16.msra.mxu0 %v876
    %925 = vmatprep.mubr.bf16.mxu0 %v763
    %926 = vmatmul.mubr.bf16.gmra.mrb[0].mxu0 %v762
    %v927 = vpop.f32.mrb[0].mxu0
    %v928 = vadd.f32 %v796, %v927
    %v929 = vpop.f32.mrb[0].mxu0
    %v930 = vpop.f32.mrb[0].mxu0
    %v931 = vpop.f32.mrb[0].mxu0
    %932 = vdwg.mxu0
    %v933 = vld [vmem:[#allocation2 + $0x100] sm:$0xf]
    %v934 = vld [vmem:[#allocation2 + $0x104] sm:$0xf]
    %v935 = vld [vmem:[#allocation2 + $0x108] sm:$0xf]
    %v936 = vld [vmem:[#allocation2 + $0x10c] sm:$0xf]
    %v937 = vld [vmem:[#allocation2 + $0x110] sm:$0xf]
    %v938 = vld [vmem:[#allocation2 + $0x114] sm:$0xf]
    %v939 = vld [vmem:[#allocation2 + $0x118] sm:$0xf]
    %v940 = vld [vmem:[#allocation2 + $0x11c] sm:$0xf]
    %v941 = vld [vmem:[#allocation2 + $0x120] sm:$0xf]
    %v942 = vld [vmem:[#allocation2 + $0x124] sm:$0xf]
    %v943 = vld [vmem:[#allocation2 + $0x128] sm:$0xf]
    %v944 = vld [vmem:[#allocation2 + $0x12c] sm:$0xf]
    %v945 = vld [vmem:[#allocation2 + $0x130] sm:$0xf]
    %v946 = vld [vmem:[#allocation2 + $0x134] sm:$0xf]
    %v947 = vld [vmem:[#allocation2 + $0x138] sm:$0xf]
    %v948 = vld [vmem:[#allocation2 + $0x13c] sm:$0xf]
    %v949 = vld [vmem:[#allocation2 + $0x140] sm:$0xf]
    %v950 = vld [vmem:[#allocation2 + $0x144] sm:$0xf]
    %v951 = vld [vmem:[#allocation2 + $0x148] sm:$0xf]
    %v952 = vld [vmem:[#allocation2 + $0x14c] sm:$0xf]
    %v953 = vld [vmem:[#allocation2 + $0x150] sm:$0xf]
    %v954 = vld [vmem:[#allocation2 + $0x154] sm:$0xf]
    %v955 = vld [vmem:[#allocation2 + $0x158] sm:$0xf]
    %v956 = vld [vmem:[#allocation2 + $0x15c] sm:$0xf]
    %v957 = vld [vmem:[#allocation2 + $0x160] sm:$0xf]
    %v958 = vld [vmem:[#allocation2 + $0x164] sm:$0xf]
    %v959 = vld [vmem:[#allocation2 + $0x168] sm:$0xf]
    %v960 = vld [vmem:[#allocation2 + $0x16c] sm:$0xf]
    %v961 = vld [vmem:[#allocation2 + $0x170] sm:$0xf]
    %v962 = vld [vmem:[#allocation2 + $0x174] sm:$0xf]
    %v963 = vld [vmem:[#allocation2 + $0x178] sm:$0xf]
    %v964 = vld [vmem:[#allocation2 + $0x17c] sm:$0xf]
    %v965 = vld [vmem:[#allocation7 + $0xc0] ss:$0 sm:$0xff]
    %v966 = vpack.c.bf16 %v928, %v928
    %v983 = vunpack.c.l.b16 %v933
    %v984 = vunpack.c.l.b16 %v934
    %v985 = vunpack.c.l.b16 %v935
    %v986 = vunpack.c.l.b16 %v936
    %v987 = vunpack.c.l.b16 %v937
    %v988 = vunpack.c.l.b16 %v938
    %v989 = vunpack.c.l.b16 %v939
    %v990 = vunpack.c.l.b16 %v940
    %v991 = vunpack.c.l.b16 %v941
    %v992 = vunpack.c.l.b16 %v942
    %v993 = vunpack.c.l.b16 %v943
    %v994 = vunpack.c.l.b16 %v944
    %v995 = vunpack.c.l.b16 %v945
    %v996 = vunpack.c.l.b16 %v946
    %v997 = vunpack.c.l.b16 %v947
    %v998 = vunpack.c.l.b16 %v948
    %v999 = vpack.c.b16 %v984, %v983
    %v1000 = vpack.c.b16 %v986, %v985
    %v1001 = vpack.c.b16 %v988, %v987
    %v1002 = vpack.c.b16 %v990, %v989
    %v1003 = vpack.c.b16 %v992, %v991
    %v1004 = vpack.c.b16 %v994, %v993
    %v1005 = vpack.c.b16 %v996, %v995
    %v1006 = vpack.c.b16 %v998, %v997
    %1015 = vmatprep.subr.bf16.mxu0 0
    %1016 = vmatpush1.bf16.msra.mxu0 %v999
    %1017 = vmatprep.subr.bf16.mxu0 0
    %1018 = vmatpush1.bf16.msra.mxu0 %v1000
    %1019 = vmatprep.subr.bf16.mxu0 0
    %1020 = vmatpush1.bf16.msra.mxu0 %v1001
    %1021 = vmatprep.subr.bf16.mxu0 0
    %1022 = vmatpush1.bf16.msra.mxu0 %v1002
    %1023 = vmatprep.subr.bf16.mxu0 0
    %1024 = vmatpush1.bf16.msra.mxu0 %v1003
    %1025 = vmatprep.subr.bf16.mxu0 0
    %1026 = vmatpush1.bf16.msra.mxu0 %v1004
    %1027 = vmatprep.subr.bf16.mxu0 0
    %1028 = vmatpush1.bf16.msra.mxu0 %v1005
    %1029 = vmatprep.subr.bf16.mxu0 0
    %1030 = vmatpush1.bf16.msra.mxu0 %v1006
    %1031 = vmatprep.subr.bf16.mxu0 0
    %1032 = vmatpush1.bf16.msra.mxu0 0
    %1033 = vmatprep.subr.bf16.mxu0 0
    %1034 = vmatpush1.bf16.msra.mxu0 0
    %1035 = vmatprep.subr.bf16.mxu0 0
    %1036 = vmatpush1.bf16.msra.mxu0 0
    %1037 = vmatprep.subr.bf16.mxu0 0
    %1038 = vmatpush1.bf16.msra.mxu0 0
    %1039 = vmatprep.subr.bf16.mxu0 0
    %1040 = vmatpush1.bf16.msra.mxu0 0
    %1041 = vmatprep.subr.bf16.mxu0 0
    %1042 = vmatpush1.bf16.msra.mxu0 0
    %1043 = vmatprep.subr.bf16.mxu0 0
    %1044 = vmatpush1.bf16.msra.mxu0 0
    %1045 = vmatprep.subr.bf16.mxu0 0
    %1046 = vmatpush1.bf16.msra.mxu0 0
    %1047 = vmatprep.mubr.bf16.mxu0 0
    %1048 = vmatmul.mubr.bf16.gmra.mrb[0].mxu0 %v966
    %v1049 = vpop.f32.mrb[0].mxu0
    %v1050 = vadd.f32 0.0, %v1049
    %v1051 = vpop.f32.mrb[0].mxu0
    %v1052 = vpop.f32.mrb[0].mxu0
    %v1053 = vpop.f32.mrb[0].mxu0
    %1054 = vdwg.mxu0
    %v1055 = vsel %vm535, %v1050, 0.0
    %v1056 = vrot.slane %v1055, 4
    %v1057 = vadd.f32 %v1055, %v1056
    %v1058 = vrot.slane %v1057, 2
    %v1059 = vadd.f32 %v1057, %v1058
    %v1060 = vrot.slane %v1059, 1
    %v1061 = vadd.f32 %v1059, %v1060
    %v1062 = vmul.f32 %v928, %v928
    %v1063 = vpack.c.bf16 %v1062, %v1062
    %1064 = vmatprep.subr.bf16.mxu0 0
    %1065 = vmatpush1.bf16.msra.mxu0 %v999
    %1066 = vmatprep.subr.bf16.mxu0 0
    %1067 = vmatpush1.bf16.msra.mxu0 %v1000
    %1068 = vmatprep.subr.bf16.mxu0 0
    %1069 = vmatpush1.bf16.msra.mxu0 %v1001
    %1070 = vmatprep.subr.bf16.mxu0 0
    %1071 = vmatpush1.bf16.msra.mxu0 %v1002
    %1072 = vmatprep.subr.bf16.mxu0 0
    %1073 = vmatpush1.bf16.msra.mxu0 %v1003
    %1074 = vmatprep.subr.bf16.mxu0 0
    %1075 = vmatpush1.bf16.msra.mxu0 %v1004
    %1076 = vmatprep.subr.bf16.mxu0 0
    %1077 = vmatpush1.bf16.msra.mxu0 %v1005
    %1078 = vmatprep.subr.bf16.mxu0 0
    %1079 = vmatpush1.bf16.msra.mxu0 %v1006
    %1080 = vmatprep.subr.bf16.mxu0 0
    %1081 = vmatpush1.bf16.msra.mxu0 0
    %1082 = vmatprep.subr.bf16.mxu0 0
    %1083 = vmatpush1.bf16.msra.mxu0 0
    %1084 = vmatprep.subr.bf16.mxu0 0
    %1085 = vmatpush1.bf16.msra.mxu0 0
    %1086 = vmatprep.subr.bf16.mxu0 0
    %1087 = vmatpush1.bf16.msra.mxu0 0
    %1088 = vmatprep.subr.bf16.mxu0 0
    %1089 = vmatpush1.bf16.msra.mxu0 0
    %1090 = vmatprep.subr.bf16.mxu0 0
    %1091 = vmatpush1.bf16.msra.mxu0 0
    %1092 = vmatprep.subr.bf16.mxu0 0
    %1093 = vmatpush1.bf16.msra.mxu0 0
    %1094 = vmatprep.subr.bf16.mxu0 0
    %1095 = vmatpush1.bf16.msra.mxu0 0
    %1096 = vmatprep.mubr.bf16.mxu0 0
    %1097 = vmatmul.mubr.bf16.gmra.mrb[0].mxu0 %v1063
    %v1098 = vpop.f32.mrb[0].mxu0
    %v1099 = vadd.f32 0.0, %v1098
    %v1100 = vpop.f32.mrb[0].mxu0
    %v1101 = vpop.f32.mrb[0].mxu0
    %v1102 = vpop.f32.mrb[0].mxu0
    %1103 = vdwg.mxu0
    %v1104 = vsel %vm535, %v1099, 0.0
    %v1105 = vrot.slane %v1104, 4
    %v1106 = vadd.f32 %v1104, %v1105
    %v1107 = vrot.slane %v1106, 2
    %v1108 = vadd.f32 %v1106, %v1107
    %v1109 = vrot.slane %v1108, 1
    %v1110 = vadd.f32 %v1108, %v1109
    %v1111 = vmul.f32 %v1061, 0.125
    %v1112 = vmul.f32 %v1110, 0.125
    %v1113 = vmul.f32 %v1111, %v1111
    %v1114 = vsub.f32 %v1112, %v1113
    %v1115 = vmax.f32 %v1114, 0.0
    %v1116 = vadd.f32 %v1115, 1e-05
    %v1117 = vrsqrt.pop %v1116
    %v1118 = vsub.f32 0.0, %v1111
    %v1119 = vmul.f32 %v1118, %v1117
    %v1120 = vsel %vm603, %v1117, %v1119
    %v1121 = vpack.c.bf16 %v1120, %v1120
    %v1138 = vunpack.c.l.b16 %v949
    %v1139 = vunpack.c.l.b16 %v950
    %v1140 = vunpack.c.l.b16 %v951
    %v1141 = vunpack.c.l.b16 %v952
    %v1142 = vunpack.c.l.b16 %v953
    %v1143 = vunpack.c.l.b16 %v954
    %v1144 = vunpack.c.l.b16 %v955
    %v1145 = vunpack.c.l.b16 %v956
    %v1146 = vunpack.c.l.b16 %v957
    %v1147 = vunpack.c.l.b16 %v958
    %v1148 = vunpack.c.l.b16 %v959
    %v1149 = vunpack.c.l.b16 %v960
    %v1150 = vunpack.c.l.b16 %v961
    %v1151 = vunpack.c.l.b16 %v962
    %v1152 = vunpack.c.l.b16 %v963
    %v1153 = vunpack.c.l.b16 %v964
    %v1154 = vpack.c.b16 %v1139, %v1138
    %v1155 = vpack.c.b16 %v1141, %v1140
    %v1156 = vpack.c.b16 %v1143, %v1142
    %v1157 = vpack.c.b16 %v1145, %v1144
    %v1158 = vpack.c.b16 %v1147, %v1146
    %v1159 = vpack.c.b16 %v1149, %v1148
    %v1160 = vpack.c.b16 %v1151, %v1150
    %v1161 = vpack.c.b16 %v1153, %v1152
    %1170 = vmatprep.subr.bf16.mxu0 0
    %1171 = vmatpush1.bf16.msra.mxu0 %v1154
    %1172 = vmatprep.subr.bf16.mxu0 0
    %1173 = vmatpush1.bf16.msra.mxu0 %v1155
    %1174 = vmatprep.subr.bf16.mxu0 0
    %1175 = vmatpush1.bf16.msra.mxu0 %v1156
    %1176 = vmatprep.subr.bf16.mxu0 0
    %1177 = vmatpush1.bf16.msra.mxu0 %v1157
    %1178 = vmatprep.subr.bf16.mxu0 0
    %1179 = vmatpush1.bf16.msra.mxu0 %v1158
    %1180 = vmatprep.subr.bf16.mxu0 0
    %1181 = vmatpush1.bf16.msra.mxu0 %v1159
    %1182 = vmatprep.subr.bf16.mxu0 0
    %1183 = vmatpush1.bf16.msra.mxu0 %v1160
    %1184 = vmatprep.subr.bf16.mxu0 0
    %1185 = vmatpush1.bf16.msra.mxu0 %v1161
    %1186 = vmatprep.subr.bf16.mxu0 0
    %1187 = vmatpush1.bf16.msra.mxu0 0
    %1188 = vmatprep.subr.bf16.mxu0 0
    %1189 = vmatpush1.bf16.msra.mxu0 0
    %1190 = vmatprep.subr.bf16.mxu0 0
    %1191 = vmatpush1.bf16.msra.mxu0 0
    %1192 = vmatprep.subr.bf16.mxu0 0
    %1193 = vmatpush1.bf16.msra.mxu0 0
    %1194 = vmatprep.subr.bf16.mxu0 0
    %1195 = vmatpush1.bf16.msra.mxu0 0
    %1196 = vmatprep.subr.bf16.mxu0 0
    %1197 = vmatpush1.bf16.msra.mxu0 0
    %1198 = vmatprep.subr.bf16.mxu0 0
    %1199 = vmatpush1.bf16.msra.mxu0 0
    %1200 = vmatprep.subr.bf16.mxu0 0
    %1201 = vmatpush1.bf16.msra.mxu0 0
    %1202 = vmatprep.mubr.bf16.mxu0 0
    %1203 = vmatmul.mubr.bf16.gmra.mrb[0].mxu0 %v1121
    %v1204 = vpop.f32.mrb[0].mxu0
    %v1205 = vadd.f32 0.0, %v1204
    %v1206 = vpop.f32.mrb[0].mxu0
    %v1207 = vpop.f32.mrb[0].mxu0
    %v1208 = vpop.f32.mrb[0].mxu0
    %1209 = vdwg.mxu0
    %v1210 = vlaneseq
    %v1211 = vshrl.u32 %v1210, 7
    %v1212 = vsub.s32 0, %v1211
    %v1213 = vrot.slane %v1205, %v1212
    %v1214 = vmul.f32 %v928, %v1213
    %v1215 = vlaneseq
    %v1216 = vshrl.u32 %v1215, 7
    %v1217 = vsub.s32 1, %v1216
    %v1218 = vrot.slane %v1205, %v1217
    %v1219 = vadd.f32 %v1214, %v1218
    %v1220 = vadd.f32 %v1219, %v965
    %v1221 = vpack.c.bf16 %v1220, %v1220
    %v1222 = vld [vmem:[#allocation4 + $0x100] sm:$0xff]
    %v1223 = vld [vmem:[#allocation4 + $0x108] sm:$0xff]
    %v1224 = vld [vmem:[#allocation4 + $0x110] sm:$0xff]
    %v1225 = vld [vmem:[#allocation4 + $0x118] sm:$0xff]
    %v1226 = vld [vmem:[#allocation4 + $0x120] sm:$0xff]
    %v1227 = vld [vmem:[#allocation4 + $0x128] sm:$0xff]
    %v1228 = vld [vmem:[#allocation4 + $0x130] sm:$0xff]
    %v1229 = vld [vmem:[#allocation4 + $0x138] sm:$0xff]
    %v1230 = vld [vmem:[#allocation4 + $0x140] sm:$0xff]
    %v1231 = vld [vmem:[#allocation4 + $0x148] sm:$0xff]
    %v1232 = vld [vmem:[#allocation4 + $0x150] sm:$0xff]
    %v1233 = vld [vmem:[#allocation4 + $0x158] sm:$0xff]
    %v1234 = vld [vmem:[#allocation4 + $0x160] sm:$0xff]
    %v1235 = vld [vmem:[#allocation4 + $0x168] sm:$0xff]
    %v1236 = vld [vmem:[#allocation4 + $0x170] sm:$0xff]
    %v1237 = vld [vmem:[#allocation4 + $0x178] sm:$0xff]
    %s1238 = scalar_lea.vmem [#allocation7], 64
    %v1239 = vld [vmem:[%s1238] ss:$8 sm:$0x3]
    %v1241 = vlaneseq
    %v1242 = vshrl.u32 %v1241, 7
    %v1243 = vsub.s32 0, %v1242
    %v1244 = vrot.slane %v1239, %v1243
    %v1245 = vlaneseq
    %v1246 = vshrl.u32 %v1245, 7
    %v1247 = vsub.s32 1, %v1246
    %v1248 = vrot.slane %v1239, %v1247
    %v1267 = vunpack.c.l.b16 %v1222
    %v1268 = vunpack.c.h.b16 %v1222
    %v1269 = vunpack.c.l.b16 %v1223
    %v1270 = vunpack.c.h.b16 %v1223
    %v1271 = vunpack.c.l.b16 %v1224
    %v1272 = vunpack.c.h.b16 %v1224
    %v1273 = vunpack.c.l.b16 %v1225
    %v1274 = vunpack.c.h.b16 %v1225
    %v1275 = vunpack.c.l.b16 %v1226
    %v1276 = vunpack.c.h.b16 %v1226
    %v1277 = vunpack.c.l.b16 %v1227
    %v1278 = vunpack.c.h.b16 %v1227
    %v1279 = vunpack.c.l.b16 %v1228
    %v1280 = vunpack.c.h.b16 %v1228
    %v1281 = vunpack.c.l.b16 %v1229
    %v1282 = vunpack.c.h.b16 %v1229
    %v1283 = vunpack.c.l.b16 %v1230
    %v1284 = vunpack.c.h.b16 %v1230
    %v1285 = vunpack.c.l.b16 %v1231
    %v1286 = vunpack.c.h.b16 %v1231
    %v1287 = vunpack.c.l.b16 %v1232
    %v1288 = vunpack.c.h.b16 %v1232
    %v1289 = vunpack.c.l.b16 %v1233
    %v1290 = vunpack.c.h.b16 %v1233
    %v1291 = vunpack.c.l.b16 %v1234
    %v1292 = vunpack.c.h.b16 %v1234
    %v1293 = vunpack.c.l.b16 %v1235
    %v1294 = vunpack.c.h.b16 %v1235
    %v1295 = vunpack.c.l.b16 %v1236
    %v1296 = vunpack.c.h.b16 %v1236
    %v1297 = vunpack.c.l.b16 %v1237
    %v1298 = vunpack.c.h.b16 %v1237
    %v1299 = vpack.c.b16 %v1269, %v1267
    %v1300 = vpack.c.b16 %v1270, %v1268
    %v1301 = vpack.c.b16 %v1273, %v1271
    %v1302 = vpack.c.b16 %v1274, %v1272
    %v1303 = vpack.c.b16 %v1277, %v1275
    %v1304 = vpack.c.b16 %v1278, %v1276
    %v1305 = vpack.c.b16 %v1281, %v1279
    %v1306 = vpack.c.b16 %v1282, %v1280
    %v1307 = vpack.c.b16 %v1285, %v1283
    %v1308 = vpack.c.b16 %v1286, %v1284
    %v1309 = vpack.c.b16 %v1289, %v1287
    %v1310 = vpack.c.b16 %v1290, %v1288
    %v1311 = vpack.c.b16 %v1293, %v1291
    %v1312 = vpack.c.b16 %v1294, %v1292
    %v1313 = vpack.c.b16 %v1297, %v1295
    %v1314 = vpack.c.b16 %v1298, %v1296
    %1331 = vmatprep.subr.bf16.mxu0 %v1300
    %1332 = vmatpush1.bf16.msra.mxu0 %v1299
    %1333 = vmatprep.subr.bf16.mxu0 %v1302
    %1334 = vmatpush1.bf16.msra.mxu0 %v1301
    %1335 = vmatprep.subr.bf16.mxu0 %v1304
    %1336 = vmatpush1.bf16.msra.mxu0 %v1303
    %1337 = vmatprep.subr.bf16.mxu0 %v1306
    %1338 = vmatpush1.bf16.msra.mxu0 %v1305
    %1339 = vmatprep.subr.bf16.mxu0 %v1308
    %1340 = vmatpush1.bf16.msra.mxu0 %v1307
    %1341 = vmatprep.subr.bf16.mxu0 %v1310
    %1342 = vmatpush1.bf16.msra.mxu0 %v1309
    %1343 = vmatprep.subr.bf16.mxu0 %v1312
    %1344 = vmatpush1.bf16.msra.mxu0 %v1311
    %1345 = vmatprep.subr.bf16.mxu0 %v1314
    %1346 = vmatpush1.bf16.msra.mxu0 %v1313
    %1347 = vmatprep.subr.bf16.mxu0 0
    %1348 = vmatpush1.bf16.msra.mxu0 0
    %1349 = vmatprep.subr.bf16.mxu0 0
    %1350 = vmatpush1.bf16.msra.mxu0 0
    %1351 = vmatprep.subr.bf16.mxu0 0
    %1352 = vmatpush1.bf16.msra.mxu0 0
    %1353 = vmatprep.subr.bf16.mxu0 0
    %1354 = vmatpush1.bf16.msra.mxu0 0
    %1355 = vmatprep.subr.bf16.mxu0 0
    %1356 = vmatpush1.bf16.msra.mxu0 0
    %1357 = vmatprep.subr.bf16.mxu0 0
    %1358 = vmatpush1.bf16.msra.mxu0 0
    %1359 = vmatprep.subr.bf16.mxu0 0
    %1360 = vmatpush1.bf16.msra.mxu0 0
    %1361 = vmatprep.subr.bf16.mxu0 0
    %1362 = vmatpush1.bf16.msra.mxu0 0
    %1363 = vmatprep.mubr.bf16.mxu0 0
    %1364 = vmatmul.mubr.bf16.gmra.mrb[0].mxu0 %v1221
    %v1365 = vpop.f32.mrb[0].mxu0
    %v1366 = vadd.f32 %v1244, %v1365
    %v1367 = vpop.f32.mrb[0].mxu0
    %v1368 = vadd.f32 %v1248, %v1367
    %v1369 = vpop.f32.mrb[0].mxu0
    %v1370 = vpop.f32.mrb[0].mxu0
    %1371 = vdwg.mxu0
    %v1372 = vld [vmem:[#allocation2 + $0x180] sm:$0xf]
    %v1373 = vld [vmem:[#allocation2 + $0x184] sm:$0xf]
    %v1374 = vld [vmem:[#allocation2 + $0x188] sm:$0xf]
    %v1375 = vld [vmem:[#allocation2 + $0x18c] sm:$0xf]
    %v1376 = vld [vmem:[#allocation2 + $0x190] sm:$0xf]
    %v1377 = vld [vmem:[#allocation2 + $0x194] sm:$0xf]
    %v1378 = vld [vmem:[#allocation2 + $0x198] sm:$0xf]
    %v1379 = vld [vmem:[#allocation2 + $0x19c] sm:$0xf]
    %v1380 = vld [vmem:[#allocation2 + $0x1a0] sm:$0xf]
    %v1381 = vld [vmem:[#allocation2 + $0x1a4] sm:$0xf]
    %v1382 = vld [vmem:[#allocation2 + $0x1a8] sm:$0xf]
    %v1383 = vld [vmem:[#allocation2 + $0x1ac] sm:$0xf]
    %v1384 = vld [vmem:[#allocation2 + $0x1b0] sm:$0xf]
    %v1385 = vld [vmem:[#allocation2 + $0x1b4] sm:$0xf]
    %v1386 = vld [vmem:[#allocation2 + $0x1b8] sm:$0xf]
    %v1387 = vld [vmem:[#allocation2 + $0x1bc] sm:$0xf]
    %v1388 = vld [vmem:[#allocation2 + $0x1c0] sm:$0xf]
    %v1389 = vld [vmem:[#allocation2 + $0x1c4] sm:$0xf]
    %v1390 = vld [vmem:[#allocation2 + $0x1c8] sm:$0xf]
    %v1391 = vld [vmem:[#allocation2 + $0x1cc] sm:$0xf]
    %v1392 = vld [vmem:[#allocation2 + $0x1d0] sm:$0xf]
    %v1393 = vld [vmem:[#allocation2 + $0x1d4] sm:$0xf]
    %v1394 = vld [vmem:[#allocation2 + $0x1d8] sm:$0xf]
    %v1395 = vld [vmem:[#allocation2 + $0x1dc] sm:$0xf]
    %v1396 = vld [vmem:[#allocation2 + $0x1e0] sm:$0xf]
    %v1397 = vld [vmem:[#allocation2 + $0x1e4] sm:$0xf]
    %v1398 = vld [vmem:[#allocation2 + $0x1e8] sm:$0xf]
    %v1399 = vld [vmem:[#allocation2 + $0x1ec] sm:$0xf]
    %v1400 = vld [vmem:[#allocation2 + $0x1f0] sm:$0xf]
    %v1401 = vld [vmem:[#allocation2 + $0x1f4] sm:$0xf]
    %v1402 = vld [vmem:[#allocation2 + $0x1f8] sm:$0xf]
    %v1403 = vld [vmem:[#allocation2 + $0x1fc] sm:$0xf]
    %v1404 = vld [vmem:[#allocation4 + $0x400] sm:$0xff]
    %v1405 = vld [vmem:[#allocation4 + $0x408] sm:$0xff]
    %v1406 = vld [vmem:[#allocation4 + $0x410] sm:$0xff]
    %v1407 = vld [vmem:[#allocation4 + $0x418] sm:$0xff]
    %v1408 = vld [vmem:[#allocation4 + $0x420] sm:$0xff]
    %v1409 = vld [vmem:[#allocation4 + $0x428] sm:$0xff]
    %v1410 = vld [vmem:[#allocation4 + $0x430] sm:$0xff]
    %v1411 = vld [vmem:[#allocation4 + $0x438] sm:$0xff]
    %v1412 = vld [vmem:[#allocation4 + $0x440] sm:$0xff]
    %v1413 = vld [vmem:[#allocation4 + $0x448] sm:$0xff]
    %v1414 = vld [vmem:[#allocation4 + $0x450] sm:$0xff]
    %v1415 = vld [vmem:[#allocation4 + $0x458] sm:$0xff]
    %v1416 = vld [vmem:[#allocation4 + $0x460] sm:$0xff]
    %v1417 = vld [vmem:[#allocation4 + $0x468] sm:$0xff]
    %v1418 = vld [vmem:[#allocation4 + $0x470] sm:$0xff]
    %v1419 = vld [vmem:[#allocation4 + $0x478] sm:$0xff]
    %s1420 = scalar_lea.vmem [#allocation7], 224
    %v1421 = vld [vmem:[%s1420] ss:$8 sm:$0x3]
    %v1422 = vpack.c.bf16 %v1366, %v1366
    %v1423 = vpack.c.bf16 %v1368, %v1368
    %v1456 = vunpack.c.l.b16 %v1372
    %v1457 = vunpack.c.l.b16 %v1373
    %v1458 = vunpack.c.l.b16 %v1374
    %v1459 = vunpack.c.l.b16 %v1375
    %v1460 = vunpack.c.l.b16 %v1376
    %v1461 = vunpack.c.l.b16 %v1377
    %v1462 = vunpack.c.l.b16 %v1378
    %v1463 = vunpack.c.l.b16 %v1379
    %v1464 = vunpack.c.l.b16 %v1380
    %v1465 = vunpack.c.l.b16 %v1381
    %v1466 = vunpack.c.l.b16 %v1382
    %v1467 = vunpack.c.l.b16 %v1383
    %v1468 = vunpack.c.l.b16 %v1384
    %v1469 = vunpack.c.l.b16 %v1385
    %v1470 = vunpack.c.l.b16 %v1386
    %v1471 = vunpack.c.l.b16 %v1387
    %v1472 = vunpack.c.l.b16 %v1388
    %v1473 = vunpack.c.l.b16 %v1389
    %v1474 = vunpack.c.l.b16 %v1390
    %v1475 = vunpack.c.l.b16 %v1391
    %v1476 = vunpack.c.l.b16 %v1392
    %v1477 = vunpack.c.l.b16 %v1393
    %v1478 = vunpack.c.l.b16 %v1394
    %v1479 = vunpack.c.l.b16 %v1395
    %v1480 = vunpack.c.l.b16 %v1396
    %v1481 = vunpack.c.l.b16 %v1397
    %v1482 = vunpack.c.l.b16 %v1398
    %v1483 = vunpack.c.l.b16 %v1399
    %v1484 = vunpack.c.l.b16 %v1400
    %v1485 = vunpack.c.l.b16 %v1401
    %v1486 = vunpack.c.l.b16 %v1402
    %v1487 = vunpack.c.l.b16 %v1403
    %v1488 = vpack.c.b16 %v1457, %v1456
    %v1489 = vpack.c.b16 %v1459, %v1458
    %v1490 = vpack.c.b16 %v1461, %v1460
    %v1491 = vpack.c.b16 %v1463, %v1462
    %v1492 = vpack.c.b16 %v1465, %v1464
    %v1493 = vpack.c.b16 %v1467, %v1466
    %v1494 = vpack.c.b16 %v1469, %v1468
    %v1495 = vpack.c.b16 %v1471, %v1470
    %v1496 = vpack.c.b16 %v1473, %v1472
    %v1497 = vpack.c.b16 %v1475, %v1474
    %v1498 = vpack.c.b16 %v1477, %v1476
    %v1499 = vpack.c.b16 %v1479, %v1478
    %v1500 = vpack.c.b16 %v1481, %v1480
    %v1501 = vpack.c.b16 %v1483, %v1482
    %v1502 = vpack.c.b16 %v1485, %v1484
    %v1503 = vpack.c.b16 %v1487, %v1486
    %1520 = vmatprep.subr.bf16.mxu0 0
    %1521 = vmatpush1.bf16.msra.mxu0 %v1488
    %1522 = vmatprep.subr.bf16.mxu0 0
    %1523 = vmatpush1.bf16.msra.mxu0 %v1489
    %1524 = vmatprep.subr.bf16.mxu0 0
    %1525 = vmatpush1.bf16.msra.mxu0 %v1490
    %1526 = vmatprep.subr.bf16.mxu0 0
    %1527 = vmatpush1.bf16.msra.mxu0 %v1491
    %1528 = vmatprep.subr.bf16.mxu0 0
    %1529 = vmatpush1.bf16.msra.mxu0 %v1492
    %1530 = vmatprep.subr.bf16.mxu0 0
    %1531 = vmatpush1.bf16.msra.mxu0 %v1493
    %1532 = vmatprep.subr.bf16.mxu0 0
    %1533 = vmatpush1.bf16.msra.mxu0 %v1494
    %1534 = vmatprep.subr.bf16.mxu0 0
    %1535 = vmatpush1.bf16.msra.mxu0 %v1495
    %1536 = vmatprep.subr.bf16.mxu0 0
    %1537 = vmatpush1.bf16.msra.mxu0 %v1496
    %1538 = vmatprep.subr.bf16.mxu0 0
    %1539 = vmatpush1.bf16.msra.mxu0 %v1497
    %1540 = vmatprep.subr.bf16.mxu0 0
    %1541 = vmatpush1.bf16.msra.mxu0 %v1498
    %1542 = vmatprep.subr.bf16.mxu0 0
    %1543 = vmatpush1.bf16.msra.mxu0 %v1499
    %1544 = vmatprep.subr.bf16.mxu0 0
    %1545 = vmatpush1.bf16.msra.mxu0 %v1500
    %1546 = vmatprep.subr.bf16.mxu0 0
    %1547 = vmatpush1.bf16.msra.mxu0 %v1501
    %1548 = vmatprep.subr.bf16.mxu0 0
    %1549 = vmatpush1.bf16.msra.mxu0 %v1502
    %1550 = vmatprep.subr.bf16.mxu0 0
    %1551 = vmatpush1.bf16.msra.mxu0 %v1503
    %1552 = vmatprep.mubr.bf16.mxu0 %v1423
    %1553 = vmatmul.mubr.bf16.gmra.mrb[0].mxu0 %v1422
    %v1554 = vpop.f32.mrb[0].mxu0
    %v1555 = vadd.f32 0.0, %v1554
    %v1556 = vpop.f32.mrb[0].mxu0
    %v1557 = vpop.f32.mrb[0].mxu0
    %v1558 = vpop.f32.mrb[0].mxu0
    %1559 = vdwg.mxu0
    %v1560 = vsel %vm535, %v1555, 0.0
    %v1561 = vrot.slane %v1560, 4
    %v1562 = vadd.f32 %v1560, %v1561
    %v1563 = vrot.slane %v1562, 2
    %v1564 = vadd.f32 %v1562, %v1563
    %v1565 = vrot.slane %v1564, 1
    %v1566 = vadd.f32 %v1564, %v1565
    %v1567 = vmul.f32 %v1366, %v1366
    %v1568 = vmul.f32 %v1368, %v1368
    %v1569 = vpack.c.bf16 %v1567, %v1567
    %v1570 = vpack.c.bf16 %v1568, %v1568
    %1571 = vmatprep.subr.bf16.mxu0 0
    %1572 = vmatpush1.bf16.msra.mxu0 %v1488
    %1573 = vmatprep.subr.bf16.mxu0 0
    %1574 = vmatpush1.bf16.msra.mxu0 %v1489
    %1575 = vmatprep.subr.bf16.mxu0 0
    %1576 = vmatpush1.bf16.msra.mxu0 %v1490
    %1577 = vmatprep.subr.bf16.mxu0 0
    %1578 = vmatpush1.bf16.msra.mxu0 %v1491
    %1579 = vmatprep.subr.bf16.mxu0 0
    %1580 = vmatpush1.bf16.msra.mxu0 %v1492
    %1581 = vmatprep.subr.bf16.mxu0 0
    %1582 = vmatpush1.bf16.msra.mxu0 %v1493
    %1583 = vmatprep.subr.bf16.mxu0 0
    %1584 = vmatpush1.bf16.msra.mxu0 %v1494
    %1585 = vmatprep.subr.bf16.mxu0 0
    %1586 = vmatpush1.bf16.msra.mxu0 %v1495
    %1587 = vmatprep.subr.bf16.mxu0 0
    %1588 = vmatpush1.bf16.msra.mxu0 %v1496
    %1589 = vmatprep.subr.bf16.mxu0 0
    %1590 = vmatpush1.bf16.msra.mxu0 %v1497
    %1591 = vmatprep.subr.bf16.mxu0 0
    %1592 = vmatpush1.bf16.msra.mxu0 %v1498
    %1593 = vmatprep.subr.bf16.mxu0 0
    %1594 = vmatpush1.bf16.msra.mxu0 %v1499
    %1595 = vmatprep.subr.bf16.mxu0 0
    %1596 = vmatpush1.bf16.msra.mxu0 %v1500
    %1597 = vmatprep.subr.bf16.mxu0 0
    %1598 = vmatpush1.bf16.msra.mxu0 %v1501
    %1599 = vmatprep.subr.bf16.mxu0 0
    %1600 = vmatpush1.bf16.msra.mxu0 %v1502
    %1601 = vmatprep.subr.bf16.mxu0 0
    %1602 = vmatpush1.bf16.msra.mxu0 %v1503
    %1603 = vmatprep.mubr.bf16.mxu0 %v1570
    %1604 = vmatmul.mubr.bf16.gmra.mrb[0].mxu0 %v1569
    %v1605 = vpop.f32.mrb[0].mxu0
    %v1606 = vadd.f32 0.0, %v1605
    %v1607 = vpop.f32.mrb[0].mxu0
    %v1608 = vpop.f32.mrb[0].mxu0
    %v1609 = vpop.f32.mrb[0].mxu0
    %1610 = vdwg.mxu0
    %v1611 = vsel %vm535, %v1606, 0.0
    %v1612 = vrot.slane %v1611, 4
    %v1613 = vadd.f32 %v1611, %v1612
    %v1614 = vrot.slane %v1613, 2
    %v1615 = vadd.f32 %v1613, %v1614
    %v1616 = vrot.slane %v1615, 1
    %v1617 = vadd.f32 %v1615, %v1616
    %v1618 = vmul.f32 %v1566, 0.03125
    %v1619 = vmul.f32 %v1617, 0.03125
    %v1620 = vmul.f32 %v1618, %v1618
    %v1621 = vsub.f32 %v1619, %v1620
    %v1622 = vmax.f32 %v1621, 0.0
    %v1623 = vadd.f32 %v1622, 1e-05
    %v1624 = vrsqrt.pop %v1623
    %v1625 = vsub.f32 0.0, %v1618
    %v1626 = vmul.f32 %v1625, %v1624
    %v1627 = vsel %vm603, %v1624, %v1626
    %v1628 = vpack.c.bf16 %v1627, %v1627
    %v1645 = vunpack.c.l.b16 %v1404
    %v1646 = vunpack.c.h.b16 %v1404
    %v1647 = vunpack.c.l.b16 %v1405
    %v1648 = vunpack.c.h.b16 %v1405
    %v1649 = vunpack.c.l.b16 %v1406
    %v1650 = vunpack.c.h.b16 %v1406
    %v1651 = vunpack.c.l.b16 %v1407
    %v1652 = vunpack.c.h.b16 %v1407
    %v1653 = vunpack.c.l.b16 %v1408
    %v1654 = vunpack.c.h.b16 %v1408
    %v1655 = vunpack.c.l.b16 %v1409
    %v1656 = vunpack.c.h.b16 %v1409
    %v1657 = vunpack.c.l.b16 %v1410
    %v1658 = vunpack.c.h.b16 %v1410
    %v1659 = vunpack.c.l.b16 %v1411
    %v1660 = vunpack.c.h.b16 %v1411
    %v1661 = vunpack.c.l.b16 %v1412
    %v1662 = vunpack.c.h.b16 %v1412
    %v1663 = vunpack.c.l.b16 %v1413
    %v1664 = vunpack.c.h.b16 %v1413
    %v1665 = vunpack.c.l.b16 %v1414
    %v1666 = vunpack.c.h.b16 %v1414
    %v1667 = vunpack.c.l.b16 %v1415
    %v1668 = vunpack.c.h.b16 %v1415
    %v1669 = vunpack.c.l.b16 %v1416
    %v1670 = vunpack.c.h.b16 %v1416
    %v1671 = vunpack.c.l.b16 %v1417
    %v1672 = vunpack.c.h.b16 %v1417
    %v1673 = vunpack.c.l.b16 %v1418
    %v1674 = vunpack.c.h.b16 %v1418
    %v1675 = vunpack.c.l.b16 %v1419
    %v1676 = vunpack.c.h.b16 %v1419
    %v1677 = vpack.c.b16 %v1647, %v1645
    %v1678 = vpack.c.b16 %v1648, %v1646
    %v1679 = vpack.c.b16 %v1651, %v1649
    %v1680 = vpack.c.b16 %v1652, %v1650
    %v1681 = vpack.c.b16 %v1655, %v1653
    %v1682 = vpack.c.b16 %v1656, %v1654
    %v1683 = vpack.c.b16 %v1659, %v1657
    %v1684 = vpack.c.b16 %v1660, %v1658
    %v1685 = vpack.c.b16 %v1663, %v1661
    %v1686 = vpack.c.b16 %v1664, %v1662
    %v1687 = vpack.c.b16 %v1667, %v1665
    %v1688 = vpack.c.b16 %v1668, %v1666
    %v1689 = vpack.c.b16 %v1671, %v1669
    %v1690 = vpack.c.b16 %v1672, %v1670
    %v1691 = vpack.c.b16 %v1675, %v1673
    %v1692 = vpack.c.b16 %v1676, %v1674
    %1709 = vmatprep.subr.bf16.mxu0 %v1678
    %1710 = vmatpush1.bf16.msra.mxu0 %v1677
    %1711 = vmatprep.subr.bf16.mxu0 %v1680
    %1712 = vmatpush1.bf16.msra.mxu0 %v1679
    %1713 = vmatprep.subr.bf16.mxu0 %v1682
    %1714 = vmatpush1.bf16.msra.mxu0 %v1681
    %1715 = vmatprep.subr.bf16.mxu0 %v1684
    %1716 = vmatpush1.bf16.msra.mxu0 %v1683
    %1717 = vmatprep.subr.bf16.mxu0 %v1686
    %1718 = vmatpush1.bf16.msra.mxu0 %v1685
    %1719 = vmatprep.subr.bf16.mxu0 %v1688
    %1720 = vmatpush1.bf16.msra.mxu0 %v1687
    %1721 = vmatprep.subr.bf16.mxu0 %v1690
    %1722 = vmatpush1.bf16.msra.mxu0 %v1689
    %1723 = vmatprep.subr.bf16.mxu0 %v1692
    %1724 = vmatpush1.bf16.msra.mxu0 %v1691
    %1725 = vmatprep.subr.bf16.mxu0 0
    %1726 = vmatpush1.bf16.msra.mxu0 0
    %1727 = vmatprep.subr.bf16.mxu0 0
    %1728 = vmatpush1.bf16.msra.mxu0 0
    %1729 = vmatprep.subr.bf16.mxu0 0
    %1730 = vmatpush1.bf16.msra.mxu0 0
    %1731 = vmatprep.subr.bf16.mxu0 0
    %1732 = vmatpush1.bf16.msra.mxu0 0
    %1733 = vmatprep.subr.bf16.mxu0 0
    %1734 = vmatpush1.bf16.msra.mxu0 0
    %1735 = vmatprep.subr.bf16.mxu0 0
    %1736 = vmatpush1.bf16.msra.mxu0 0
    %1737 = vmatprep.subr.bf16.mxu0 0
    %1738 = vmatpush1.bf16.msra.mxu0 0
    %1739 = vmatprep.subr.bf16.mxu0 0
    %1740 = vmatpush1.bf16.msra.mxu0 0
    %1741 = vmatprep.mubr.bf16.mxu0 0
    %1742 = vmatmul.mubr.bf16.gmra.mrb[0].mxu0 %v1628
    %v1743 = vpop.f32.mrb[0].mxu0
    %v1744 = vadd.f32 0.0, %v1743
    %v1745 = vpop.f32.mrb[0].mxu0
    %v1746 = vadd.f32 0.0, %v1745
    %v1747 = vpop.f32.mrb[0].mxu0
    %v1748 = vpop.f32.mrb[0].mxu0
    %1749 = vdwg.mxu0
    %v1750 = vlaneseq
    %v1751 = vshrl.u32 %v1750, 7
    %v1752 = vsub.s32 0, %v1751
    %v1753 = vrot.slane %v1744, %v1752
    %v1754 = vlaneseq
    %v1755 = vshrl.u32 %v1754, 7
    %v1756 = vsub.s32 0, %v1755
    %v1757 = vrot.slane %v1746, %v1756
    %v1758 = vmul.f32 %v1366, %v1753
    %v1759 = vmul.f32 %v1368, %v1757
    %v1760 = vlaneseq
    %v1761 = vshrl.u32 %v1760, 7
    %v1762 = vsub.s32 1, %v1761
    %v1763 = vrot.slane %v1744, %v1762
    %v1764 = vlaneseq
    %v1765 = vshrl.u32 %v1764, 7
    %v1766 = vsub.s32 1, %v1765
    %v1767 = vrot.slane %v1746, %v1766
    %v1768 = vadd.f32 %v1758, %v1763
    %v1769 = vadd.f32 %v1759, %v1767
    %v1771 = vlaneseq
    %v1772 = vshrl.u32 %v1771, 7
    %v1773 = vsub.s32 0, %v1772
    %v1774 = vrot.slane %v1421, %v1773
    %v1775 = vlaneseq
    %v1776 = vshrl.u32 %v1775, 7
    %v1777 = vsub.s32 1, %v1776
    %v1778 = vrot.slane %v1421, %v1777
    %v1781 = vadd.f32 %v1768, %v1774
    %v1782 = vadd.f32 %v1769, %v1778
    %v1783 = vpack.c.bf16 %v1781, %v1781
    %v1784 = vpack.c.bf16 %v1782, %v1782
    %v1785 = vld [vmem:[#allocation6] sm:$0xff]
    %v1786 = vld [vmem:[#allocation6 + $0x8] sm:$0xff]
    %v1787 = vld [vmem:[#allocation6 + $0x10] sm:$0xff]
    %v1788 = vld [vmem:[#allocation6 + $0x18] sm:$0xff]
    %v1789 = vld [vmem:[#allocation6 + $0x20] sm:$0xff]
    %v1790 = vld [vmem:[#allocation6 + $0x28] sm:$0xff]
    %v1791 = vld [vmem:[#allocation6 + $0x30] sm:$0xff]
    %v1792 = vld [vmem:[#allocation6 + $0x38] sm:$0xff]
    %v1793 = vld [vmem:[#allocation6 + $0x40] sm:$0xff]
    %v1794 = vld [vmem:[#allocation6 + $0x48] sm:$0xff]
    %v1795 = vld [vmem:[#allocation6 + $0x50] sm:$0xff]
    %v1796 = vld [vmem:[#allocation6 + $0x58] sm:$0xff]
    %v1797 = vld [vmem:[#allocation6 + $0x60] sm:$0xff]
    %v1798 = vld [vmem:[#allocation6 + $0x68] sm:$0xff]
    %v1799 = vld [vmem:[#allocation6 + $0x70] sm:$0xff]
    %v1800 = vld [vmem:[#allocation6 + $0x78] sm:$0xff]
    %v1801 = vld [vmem:[#allocation6 + $0x80] sm:$0xff]
    %v1802 = vld [vmem:[#allocation6 + $0x88] sm:$0xff]
    %v1803 = vld [vmem:[#allocation6 + $0x90] sm:$0xff]
    %v1804 = vld [vmem:[#allocation6 + $0x98] sm:$0xff]
    %v1805 = vld [vmem:[#allocation6 + $0xa0] sm:$0xff]
    %v1806 = vld [vmem:[#allocation6 + $0xa8] sm:$0xff]
    %v1807 = vld [vmem:[#allocation6 + $0xb0] sm:$0xff]
    %v1808 = vld [vmem:[#allocation6 + $0xb8] sm:$0xff]
    %v1809 = vld [vmem:[#allocation6 + $0xc0] sm:$0xff]
    %v1810 = vld [vmem:[#allocation6 + $0xc8] sm:$0xff]
    %v1811 = vld [vmem:[#allocation6 + $0xd0] sm:$0xff]
    %v1812 = vld [vmem:[#allocation6 + $0xd8] sm:$0xff]
    %v1813 = vld [vmem:[#allocation6 + $0xe0] sm:$0xff]
    %v1814 = vld [vmem:[#allocation6 + $0xe8] sm:$0xff]
    %v1815 = vld [vmem:[#allocation6 + $0xf0] sm:$0xff]
    %v1816 = vld [vmem:[#allocation6 + $0xf8] sm:$0xff]
    %v1817 = vld [vmem:[#allocation6 + $0x100] sm:$0xff]
    %v1818 = vld [vmem:[#allocation6 + $0x108] sm:$0xff]
    %v1819 = vld [vmem:[#allocation6 + $0x110] sm:$0xff]
    %v1820 = vld [vmem:[#allocation6 + $0x118] sm:$0xff]
    %v1821 = vld [vmem:[#allocation6 + $0x120] sm:$0xff]
    %v1822 = vld [vmem:[#allocation6 + $0x128] sm:$0xff]
    %v1823 = vld [vmem:[#allocation6 + $0x130] sm:$0xff]
    %v1824 = vld [vmem:[#allocation6 + $0x138] sm:$0xff]
    %v1825 = vld [vmem:[#allocation6 + $0x140] sm:$0xff]
    %v1826 = vld [vmem:[#allocation6 + $0x148] sm:$0xff]
    %v1827 = vld [vmem:[#allocation6 + $0x150] sm:$0xff]
    %v1828 = vld [vmem:[#allocation6 + $0x158] sm:$0xff]
    %v1829 = vld [vmem:[#allocation6 + $0x160] sm:$0xff]
    %v1830 = vld [vmem:[#allocation6 + $0x168] sm:$0xff]
    %v1831 = vld [vmem:[#allocation6 + $0x170] sm:$0xff]
    %v1832 = vld [vmem:[#allocation6 + $0x178] sm:$0xff]
    %v1833 = vld [vmem:[#allocation6 + $0x180] sm:$0xff]
    %v1834 = vld [vmem:[#allocation6 + $0x188] sm:$0xff]
    %v1835 = vld [vmem:[#allocation6 + $0x190] sm:$0xff]
    %v1836 = vld [vmem:[#allocation6 + $0x198] sm:$0xff]
    %v1837 = vld [vmem:[#allocation6 + $0x1a0] sm:$0xff]
    %v1838 = vld [vmem:[#allocation6 + $0x1a8] sm:$0xff]
    %v1839 = vld [vmem:[#allocation6 + $0x1b0] sm:$0xff]
    %v1840 = vld [vmem:[#allocation6 + $0x1b8] sm:$0xff]
    %v1841 = vld [vmem:[#allocation6 + $0x1c0] sm:$0xff]
    %v1842 = vld [vmem:[#allocation6 + $0x1c8] sm:$0xff]
    %v1843 = vld [vmem:[#allocation6 + $0x1d0] sm:$0xff]
    %v1844 = vld [vmem:[#allocation6 + $0x1d8] sm:$0xff]
    %v1845 = vld [vmem:[#allocation6 + $0x1e0] sm:$0xff]
    %v1846 = vld [vmem:[#allocation6 + $0x1e8] sm:$0xff]
    %v1847 = vld [vmem:[#allocation6 + $0x1f0] sm:$0xff]
    %v1848 = vld [vmem:[#allocation6 + $0x1f8] sm:$0xff]
    %s1849 = scalar_lea.vmem [#allocation7], 96
    %v1850 = vld [vmem:[%s1849] ss:$8 sm:$0xf]
    %v1852 = vlaneseq
    %v1853 = vshrl.u32 %v1852, 7
    %v1854 = vsub.s32 0, %v1853
    %v1855 = vrot.slane %v1850, %v1854
    %v1856 = vlaneseq
    %v1857 = vshrl.u32 %v1856, 7
    %v1858 = vsub.s32 1, %v1857
    %v1859 = vrot.slane %v1850, %v1858
    %v1860 = vlaneseq
    %v1861 = vshrl.u32 %v1860, 7
    %v1862 = vsub.s32 2, %v1861
    %v1863 = vrot.slane %v1850, %v1862
    %v1864 = vlaneseq
    %v1865 = vshrl.u32 %v1864, 7
    %v1866 = vsub.s32 3, %v1865
    %v1867 = vrot.slane %v1850, %v1866
    %v1936 = vunpack.c.l.b16 %v1785
    %v1937 = vunpack.c.h.b16 %v1785
    %v1938 = vunpack.c.l.b16 %v1786
    %v1939 = vunpack.c.h.b16 %v1786
    %v1940 = vunpack.c.l.b16 %v1787
    %v1941 = vunpack.c.h.b16 %v1787
    %v1942 = vunpack.c.l.b16 %v1788
    %v1943 = vunpack.c.h.b16 %v1788
    %v1944 = vunpack.c.l.b16 %v1789
    %v1945 = vunpack.c.h.b16 %v1789
    %v1946 = vunpack.c.l.b16 %v1790
    %v1947 = vunpack.c.h.b16 %v1790
    %v1948 = vunpack.c.l.b16 %v1791
    %v1949 = vunpack.c.h.b16 %v1791
    %v1950 = vunpack.c.l.b16 %v1792
    %v1951 = vunpack.c.h.b16 %v1792
    %v1952 = vunpack.c.l.b16 %v1793
    %v1953 = vunpack.c.h.b16 %v1793
    %v1954 = vunpack.c.l.b16 %v1794
    %v1955 = vunpack.c.h.b16 %v1794
    %v1956 = vunpack.c.l.b16 %v1795
    %v1957 = vunpack.c.h.b16 %v1795
    %v1958 = vunpack.c.l.b16 %v1796
    %v1959 = vunpack.c.h.b16 %v1796
    %v1960 = vunpack.c.l.b16 %v1797
    %v1961 = vunpack.c.h.b16 %v1797
    %v1962 = vunpack.c.l.b16 %v1798
    %v1963 = vunpack.c.h.b16 %v1798
    %v1964 = vunpack.c.l.b16 %v1799
    %v1965 = vunpack.c.h.b16 %v1799
    %v1966 = vunpack.c.l.b16 %v1800
    %v1967 = vunpack.c.h.b16 %v1800
    %v1968 = vunpack.c.l.b16 %v1801
    %v1969 = vunpack.c.h.b16 %v1801
    %v1970 = vunpack.c.l.b16 %v1802
    %v1971 = vunpack.c.h.b16 %v1802
    %v1972 = vunpack.c.l.b16 %v1803
    %v1973 = vunpack.c.h.b16 %v1803
    %v1974 = vunpack.c.l.b16 %v1804
    %v1975 = vunpack.c.h.b16 %v1804
    %v1976 = vunpack.c.l.b16 %v1805
    %v1977 = vunpack.c.h.b16 %v1805
    %v1978 = vunpack.c.l.b16 %v1806
    %v1979 = vunpack.c.h.b16 %v1806
    %v1980 = vunpack.c.l.b16 %v1807
    %v1981 = vunpack.c.h.b16 %v1807
    %v1982 = vunpack.c.l.b16 %v1808
    %v1983 = vunpack.c.h.b16 %v1808
    %v1984 = vunpack.c.l.b16 %v1809
    %v1985 = vunpack.c.h.b16 %v1809
    %v1986 = vunpack.c.l.b16 %v1810
    %v1987 = vunpack.c.h.b16 %v1810
    %v1988 = vunpack.c.l.b16 %v1811
    %v1989 = vunpack.c.h.b16 %v1811
    %v1990 = vunpack.c.l.b16 %v1812
    %v1991 = vunpack.c.h.b16 %v1812
    %v1992 = vunpack.c.l.b16 %v1813
    %v1993 = vunpack.c.h.b16 %v1813
    %v1994 = vunpack.c.l.b16 %v1814
    %v1995 = vunpack.c.h.b16 %v1814
    %v1996 = vunpack.c.l.b16 %v1815
    %v1997 = vunpack.c.h.b16 %v1815
    %v1998 = vunpack.c.l.b16 %v1816
    %v1999 = vunpack.c.h.b16 %v1816
    %v2000 = vunpack.c.l.b16 %v1817
    %v2001 = vunpack.c.h.b16 %v1817
    %v2002 = vunpack.c.l.b16 %v1818
    %v2003 = vunpack.c.h.b16 %v1818
    %v2004 = vunpack.c.l.b16 %v1819
    %v2005 = vunpack.c.h.b16 %v1819
    %v2006 = vunpack.c.l.b16 %v1820
    %v2007 = vunpack.c.h.b16 %v1820
    %v2008 = vunpack.c.l.b16 %v1821
    %v2009 = vunpack.c.h.b16 %v1821
    %v2010 = vunpack.c.l.b16 %v1822
    %v2011 = vunpack.c.h.b16 %v1822
    %v2012 = vunpack.c.l.b16 %v1823
    %v2013 = vunpack.c.h.b16 %v1823
    %v2014 = vunpack.c.l.b16 %v1824
    %v2015 = vunpack.c.h.b16 %v1824
    %v2016 = vunpack.c.l.b16 %v1825
    %v2017 = vunpack.c.h.b16 %v1825
    %v2018 = vunpack.c.l.b16 %v1826
    %v2019 = vunpack.c.h.b16 %v1826
    %v2020 = vunpack.c.l.b16 %v1827
    %v2021 = vunpack.c.h.b16 %v1827
    %v2022 = vunpack.c.l.b16 %v1828
    %v2023 = vunpack.c.h.b16 %v1828
    %v2024 = vunpack.c.l.b16 %v1829
    %v2025 = vunpack.c.h.b16 %v1829
    %v2026 = vunpack.c.l.b16 %v1830
    %v2027 = vunpack.c.h.b16 %v1830
    %v2028 = vunpack.c.l.b16 %v1831
    %v2029 = vunpack.c.h.b16 %v1831
    %v2030 = vunpack.c.l.b16 %v1832
    %v2031 = vunpack.c.h.b16 %v1832
    %v2032 = vunpack.c.l.b16 %v1833
    %v2033 = vunpack.c.h.b16 %v1833
    %v2034 = vunpack.c.l.b16 %v1834
    %v2035 = vunpack.c.h.b16 %v1834
    %v2036 = vunpack.c.l.b16 %v1835
    %v2037 = vunpack.c.h.b16 %v1835
    %v2038 = vunpack.c.l.b16 %v1836
    %v2039 = vunpack.c.h.b16 %v1836
    %v2040 = vunpack.c.l.b16 %v1837
    %v2041 = vunpack.c.h.b16 %v1837
    %v2042 = vunpack.c.l.b16 %v1838
    %v2043 = vunpack.c.h.b16 %v1838
    %v2044 = vunpack.c.l.b16 %v1839
    %v2045 = vunpack.c.h.b16 %v1839
    %v2046 = vunpack.c.l.b16 %v1840
    %v2047 = vunpack.c.h.b16 %v1840
    %v2048 = vunpack.c.l.b16 %v1841
    %v2049 = vunpack.c.h.b16 %v1841
    %v2050 = vunpack.c.l.b16 %v1842
    %v2051 = vunpack.c.h.b16 %v1842
    %v2052 = vunpack.c.l.b16 %v1843
    %v2053 = vunpack.c.h.b16 %v1843
    %v2054 = vunpack.c.l.b16 %v1844
    %v2055 = vunpack.c.h.b16 %v1844
    %v2056 = vunpack.c.l.b16 %v1845
    %v2057 = vunpack.c.h.b16 %v1845
    %v2058 = vunpack.c.l.b16 %v1846
    %v2059 = vunpack.c.h.b16 %v1846
    %v2060 = vunpack.c.l.b16 %v1847
    %v2061 = vunpack.c.h.b16 %v1847
    %v2062 = vunpack.c.l.b16 %v1848
    %v2063 = vunpack.c.h.b16 %v1848
    %v2064 = vpack.c.b16 %v1940, %v1936
    %v2065 = vpack.c.b16 %v1941, %v1937
    %v2066 = vpack.c.b16 %v1942, %v1938
    %v2067 = vpack.c.b16 %v1943, %v1939
    %v2068 = vpack.c.b16 %v1948, %v1944
    %v2069 = vpack.c.b16 %v1949, %v1945
    %v2070 = vpack.c.b16 %v1950, %v1946
    %v2071 = vpack.c.b16 %v1951, %v1947
    %v2072 = vpack.c.b16 %v1956, %v1952
    %v2073 = vpack.c.b16 %v1957, %v1953
    %v2074 = vpack.c.b16 %v1958, %v1954
    %v2075 = vpack.c.b16 %v1959, %v1955
    %v2076 = vpack.c.b16 %v1964, %v1960
    %v2077 = vpack.c.b16 %v1965, %v1961
    %v2078 = vpack.c.b16 %v1966, %v1962
    %v2079 = vpack.c.b16 %v1967, %v1963
    %v2080 = vpack.c.b16 %v1972, %v1968
    %v2081 = vpack.c.b16 %v1973, %v1969
    %v2082 = vpack.c.b16 %v1974, %v1970
    %v2083 = vpack.c.b16 %v1975, %v1971
    %v2084 = vpack.c.b16 %v1980, %v1976
    %v2085 = vpack.c.b16 %v1981, %v1977
    %v2086 = vpack.c.b16 %v1982, %v1978
    %v2087 = vpack.c.b16 %v1983, %v1979
    %v2088 = vpack.c.b16 %v1988, %v1984
    %v2089 = vpack.c.b16 %v1989, %v1985
    %v2090 = vpack.c.b16 %v1990, %v1986
    %v2091 = vpack.c.b16 %v1991, %v1987
    %v2092 = vpack.c.b16 %v1996, %v1992
    %v2093 = vpack.c.b16 %v1997, %v1993
    %v2094 = vpack.c.b16 %v1998, %v1994
    %v2095 = vpack.c.b16 %v1999, %v1995
    %v2096 = vpack.c.b16 %v2004, %v2000
    %v2097 = vpack.c.b16 %v2005, %v2001
    %v2098 = vpack.c.b16 %v2006, %v2002
    %v2099 = vpack.c.b16 %v2007, %v2003
    %v2100 = vpack.c.b16 %v2012, %v2008
    %v2101 = vpack.c.b16 %v2013, %v2009
    %v2102 = vpack.c.b16 %v2014, %v2010
    %v2103 = vpack.c.b16 %v2015, %v2011
    %v2104 = vpack.c.b16 %v2020, %v2016
    %v2105 = vpack.c.b16 %v2021, %v2017
    %v2106 = vpack.c.b16 %v2022, %v2018
    %v2107 = vpack.c.b16 %v2023, %v2019
    %v2108 = vpack.c.b16 %v2028, %v2024
    %v2109 = vpack.c.b16 %v2029, %v2025
    %v2110 = vpack.c.b16 %v2030, %v2026
    %v2111 = vpack.c.b16 %v2031, %v2027
    %v2112 = vpack.c.b16 %v2036, %v2032
    %v2113 = vpack.c.b16 %v2037, %v2033
    %v2114 = vpack.c.b16 %v2038, %v2034
    %v2115 = vpack.c.b16 %v2039, %v2035
    %v2116 = vpack.c.b16 %v2044, %v2040
    %v2117 = vpack.c.b16 %v2045, %v2041
    %v2118 = vpack.c.b16 %v2046, %v2042
    %v2119 = vpack.c.b16 %v2047, %v2043
    %v2120 = vpack.c.b16 %v2052, %v2048
    %v2121 = vpack.c.b16 %v2053, %v2049
    %v2122 = vpack.c.b16 %v2054, %v2050
    %v2123 = vpack.c.b16 %v2055, %v2051
    %v2124 = vpack.c.b16 %v2060, %v2056
    %v2125 = vpack.c.b16 %v2061, %v2057
    %v2126 = vpack.c.b16 %v2062, %v2058
    %v2127 = vpack.c.b16 %v2063, %v2059
    %2192 = vmatprep.subr.bf16.mxu0 %v2065
    %2193 = vmatpush1.bf16.msra.mxu0 %v2064
    %2194 = vmatprep.subr.bf16.mxu0 %v2069
    %2195 = vmatpush1.bf16.msra.mxu0 %v2068
    %2196 = vmatprep.subr.bf16.mxu0 %v2073
    %2197 = vmatpush1.bf16.msra.mxu0 %v2072
    %2198 = vmatprep.subr.bf16.mxu0 %v2077
    %2199 = vmatpush1.bf16.msra.mxu0 %v2076
    %2200 = vmatprep.subr.bf16.mxu0 %v2081
    %2201 = vmatpush1.bf16.msra.mxu0 %v2080
    %2202 = vmatprep.subr.bf16.mxu0 %v2085
    %2203 = vmatpush1.bf16.msra.mxu0 %v2084
    %2204 = vmatprep.subr.bf16.mxu0 %v2089
    %2205 = vmatpush1.bf16.msra.mxu0 %v2088
    %2206 = vmatprep.subr.bf16.mxu0 %v2093
    %2207 = vmatpush1.bf16.msra.mxu0 %v2092
    %2208 = vmatprep.subr.bf16.mxu0 %v2097
    %2209 = vmatpush1.bf16.msra.mxu0 %v2096
    %2210 = vmatprep.subr.bf16.mxu0 %v2101
    %2211 = vmatpush1.bf16.msra.mxu0 %v2100
    %2212 = vmatprep.subr.bf16.mxu0 %v2105
    %2213 = vmatpush1.bf16.msra.mxu0 %v2104
    %2214 = vmatprep.subr.bf16.mxu0 %v2109
    %2215 = vmatpush1.bf16.msra.mxu0 %v2108
    %2216 = vmatprep.subr.bf16.mxu0 %v2113
    %2217 = vmatpush1.bf16.msra.mxu0 %v2112
    %2218 = vmatprep.subr.bf16.mxu0 %v2117
    %2219 = vmatpush1.bf16.msra.mxu0 %v2116
    %2220 = vmatprep.subr.bf16.mxu0 %v2121
    %2221 = vmatpush1.bf16.msra.mxu0 %v2120
    %2222 = vmatprep.subr.bf16.mxu0 %v2125
    %2223 = vmatpush1.bf16.msra.mxu0 %v2124
    %2224 = vmatprep.mubr.bf16.mxu0 %v1784
    %2225 = vmatmul.mubr.bf16.gmra.mrb[0].mxu0 %v1783
    %v2226 = vpop.f32.mrb[0].mxu0
    %v2227 = vadd.f32 %v1855, %v2226
    %v2228 = vpop.f32.mrb[0].mxu0
    %v2229 = vadd.f32 %v1859, %v2228
    %v2230 = vpop.f32.mrb[0].mxu0
    %v2231 = vpop.f32.mrb[0].mxu0
    %2232 = vdwg.mxu0
    %2233 = vmatprep.subr.bf16.mxu0 %v2067
    %2234 = vmatpush1.bf16.msra.mxu0 %v2066
    %2235 = vmatprep.subr.bf16.mxu0 %v2071
    %2236 = vmatpush1.bf16.msra.mxu0 %v2070
    %2237 = vmatprep.subr.bf16.mxu0 %v2075
    %2238 = vmatpush1.bf16.msra.mxu0 %v2074
    %2239 = vmatprep.subr.bf16.mxu0 %v2079
    %2240 = vmatpush1.bf16.msra.mxu0 %v2078
    %2241 = vmatprep.subr.bf16.mxu0 %v2083
    %2242 = vmatpush1.bf16.msra.mxu0 %v2082
    %2243 = vmatprep.subr.bf16.mxu0 %v2087
    %2244 = vmatpush1.bf16.msra.mxu0 %v2086
    %2245 = vmatprep.subr.bf16.mxu0 %v2091
    %2246 = vmatpush1.bf16.msra.mxu0 %v2090
    %2247 = vmatprep.subr.bf16.mxu0 %v2095
    %2248 = vmatpush1.bf16.msra.mxu0 %v2094
    %2249 = vmatprep.subr.bf16.mxu0 %v2099
    %2250 = vmatpush1.bf16.msra.mxu0 %v2098
    %2251 = vmatprep.subr.bf16.mxu0 %v2103
    %2252 = vmatpush1.bf16.msra.mxu0 %v2102
    %2253 = vmatprep.subr.bf16.mxu0 %v2107
    %2254 = vmatpush1.bf16.msra.mxu0 %v2106
    %2255 = vmatprep.subr.bf16.mxu0 %v2111
    %2256 = vmatpush1.bf16.msra.mxu0 %v2110
    %2257 = vmatprep.subr.bf16.mxu0 %v2115
    %2258 = vmatpush1.bf16.msra.mxu0 %v2114
    %2259 = vmatprep.subr.bf16.mxu0 %v2119
    %2260 = vmatpush1.bf16.msra.mxu0 %v2118
    %2261 = vmatprep.subr.bf16.mxu0 %v2123
    %2262 = vmatpush1.bf16.msra.mxu0 %v2122
    %2263 = vmatprep.subr.bf16.mxu0 %v2127
    %2264 = vmatpush1.bf16.msra.mxu0 %v2126
    %2265 = vmatprep.mubr.bf16.mxu0 %v1784
    %2266 = vmatmul.mubr.bf16.gmra.mrb[0].mxu0 %v1783
    %v2267 = vpop.f32.mrb[0].mxu0
    %v2268 = vadd.f32 %v1863, %v2267
    %v2269 = vpop.f32.mrb[0].mxu0
    %v2270 = vadd.f32 %v1867, %v2269
    %v2271 = vpop.f32.mrb[0].mxu0
    %v2272 = vpop.f32.mrb[0].mxu0
    %2273 = vdwg.mxu0
    %v2274 = vld [vmem:[#allocation2 + $0x200] sm:$0xf]
    %v2275 = vld [vmem:[#allocation2 + $0x204] sm:$0xf]
    %v2276 = vld [vmem:[#allocation2 + $0x208] sm:$0xf]
    %v2277 = vld [vmem:[#allocation2 + $0x20c] sm:$0xf]
    %v2278 = vld [vmem:[#allocation2 + $0x210] sm:$0xf]
    %v2279 = vld [vmem:[#allocation2 + $0x214] sm:$0xf]
    %v2280 = vld [vmem:[#allocation2 + $0x218] sm:$0xf]
    %v2281 = vld [vmem:[#allocation2 + $0x21c] sm:$0xf]
    %v2282 = vld [vmem:[#allocation2 + $0x220] sm:$0xf]
    %v2283 = vld [vmem:[#allocation2 + $0x224] sm:$0xf]
    %v2284 = vld [vmem:[#allocation2 + $0x228] sm:$0xf]
    %v2285 = vld [vmem:[#allocation2 + $0x22c] sm:$0xf]
    %v2286 = vld [vmem:[#allocation2 + $0x230] sm:$0xf]
    %v2287 = vld [vmem:[#allocation2 + $0x234] sm:$0xf]
    %v2288 = vld [vmem:[#allocation2 + $0x238] sm:$0xf]
    %v2289 = vld [vmem:[#allocation2 + $0x23c] sm:$0xf]
    %v2290 = vld [vmem:[#allocation2 + $0x240] sm:$0xf]
    %v2291 = vld [vmem:[#allocation2 + $0x244] sm:$0xf]
    %v2292 = vld [vmem:[#allocation2 + $0x248] sm:$0xf]
    %v2293 = vld [vmem:[#allocation2 + $0x24c] sm:$0xf]
    %v2294 = vld [vmem:[#allocation2 + $0x250] sm:$0xf]
    %v2295 = vld [vmem:[#allocation2 + $0x254] sm:$0xf]
    %v2296 = vld [vmem:[#allocation2 + $0x258] sm:$0xf]
    %v2297 = vld [vmem:[#allocation2 + $0x25c] sm:$0xf]
    %v2298 = vld [vmem:[#allocation2 + $0x260] sm:$0xf]
    %v2299 = vld [vmem:[#allocation2 + $0x264] sm:$0xf]
    %v2300 = vld [vmem:[#allocation2 + $0x268] sm:$0xf]
    %v2301 = vld [vmem:[#allocation2 + $0x26c] sm:$0xf]
    %v2302 = vld [vmem:[#allocation2 + $0x270] sm:$0xf]
    %v2303 = vld [vmem:[#allocation2 + $0x274] sm:$0xf]
    %v2304 = vld [vmem:[#allocation2 + $0x278] sm:$0xf]
    %v2305 = vld [vmem:[#allocation2 + $0x27c] sm:$0xf]
    %v2306 = vld [vmem:[#allocation2 + $0x280] sm:$0xf]
    %v2307 = vld [vmem:[#allocation2 + $0x284] sm:$0xf]
    %v2308 = vld [vmem:[#allocation2 + $0x288] sm:$0xf]
    %v2309 = vld [vmem:[#allocation2 + $0x28c] sm:$0xf]
    %v2310 = vld [vmem:[#allocation2 + $0x290] sm:$0xf]
    %v2311 = vld [vmem:[#allocation2 + $0x294] sm:$0xf]
    %v2312 = vld [vmem:[#allocation2 + $0x298] sm:$0xf]
    %v2313 = vld [vmem:[#allocation2 + $0x29c] sm:$0xf]
    %v2314 = vld [vmem:[#allocation2 + $0x2a0] sm:$0xf]
    %v2315 = vld [vmem:[#allocation2 + $0x2a4] sm:$0xf]
    %v2316 = vld [vmem:[#allocation2 + $0x2a8] sm:$0xf]
    %v2317 = vld [vmem:[#allocation2 + $0x2ac] sm:$0xf]
    %v2318 = vld [vmem:[#allocation2 + $0x2b0] sm:$0xf]
    %v2319 = vld [vmem:[#allocation2 + $0x2b4] sm:$0xf]
    %v2320 = vld [vmem:[#allocation2 + $0x2b8] sm:$0xf]
    %v2321 = vld [vmem:[#allocation2 + $0x2bc] sm:$0xf]
    %v2322 = vld [vmem:[#allocation2 + $0x2c0] sm:$0xf]
    %v2323 = vld [vmem:[#allocation2 + $0x2c4] sm:$0xf]
    %v2324 = vld [vmem:[#allocation2 + $0x2c8] sm:$0xf]
    %v2325 = vld [vmem:[#allocation2 + $0x2cc] sm:$0xf]
    %v2326 = vld [vmem:[#allocation2 + $0x2d0] sm:$0xf]
    %v2327 = vld [vmem:[#allocation2 + $0x2d4] sm:$0xf]
    %v2328 = vld [vmem:[#allocation2 + $0x2d8] sm:$0xf]
    %v2329 = vld [vmem:[#allocation2 + $0x2dc] sm:$0xf]
    %v2330 = vld [vmem:[#allocation2 + $0x2e0] sm:$0xf]
    %v2331 = vld [vmem:[#allocation2 + $0x2e4] sm:$0xf]
    %v2332 = vld [vmem:[#allocation2 + $0x2e8] sm:$0xf]
    %v2333 = vld [vmem:[#allocation2 + $0x2ec] sm:$0xf]
    %v2334 = vld [vmem:[#allocation2 + $0x2f0] sm:$0xf]
    %v2335 = vld [vmem:[#allocation2 + $0x2f4] sm:$0xf]
    %v2336 = vld [vmem:[#allocation2 + $0x2f8] sm:$0xf]
    %v2337 = vld [vmem:[#allocation2 + $0x2fc] sm:$0xf]
    %v2338 = vld [vmem:[#allocation6 + $0x200] sm:$0xff]
    %v2339 = vld [vmem:[#allocation6 + $0x208] sm:$0xff]
    %v2340 = vld [vmem:[#allocation6 + $0x210] sm:$0xff]
    %v2341 = vld [vmem:[#allocation6 + $0x218] sm:$0xff]
    %v2342 = vld [vmem:[#allocation6 + $0x220] sm:$0xff]
    %v2343 = vld [vmem:[#allocation6 + $0x228] sm:$0xff]
    %v2344 = vld [vmem:[#allocation6 + $0x230] sm:$0xff]
    %v2345 = vld [vmem:[#allocation6 + $0x238] sm:$0xff]
    %v2346 = vld [vmem:[#allocation6 + $0x240] sm:$0xff]
    %v2347 = vld [vmem:[#allocation6 + $0x248] sm:$0xff]
    %v2348 = vld [vmem:[#allocation6 + $0x250] sm:$0xff]
    %v2349 = vld [vmem:[#allocation6 + $0x258] sm:$0xff]
    %v2350 = vld [vmem:[#allocation6 + $0x260] sm:$0xff]
    %v2351 = vld [vmem:[#allocation6 + $0x268] sm:$0xff]
    %v2352 = vld [vmem:[#allocation6 + $0x270] sm:$0xff]
    %v2353 = vld [vmem:[#allocation6 + $0x278] sm:$0xff]
    %v2354 = vld [vmem:[#allocation6 + $0x280] sm:$0xff]
    %v2355 = vld [vmem:[#allocation6 + $0x288] sm:$0xff]
    %v2356 = vld [vmem:[#allocation6 + $0x290] sm:$0xff]
    %v2357 = vld [vmem:[#allocation6 + $0x298] sm:$0xff]
    %v2358 = vld [vmem:[#allocation6 + $0x2a0] sm:$0xff]
    %v2359 = vld [vmem:[#allocation6 + $0x2a8] sm:$0xff]
    %v2360 = vld [vmem:[#allocation6 + $0x2b0] sm:$0xff]
    %v2361 = vld [vmem:[#allocation6 + $0x2b8] sm:$0xff]
    %v2362 = vld [vmem:[#allocation6 + $0x2c0] sm:$0xff]
    %v2363 = vld [vmem:[#allocation6 + $0x2c8] sm:$0xff]
    %v2364 = vld [vmem:[#allocation6 + $0x2d0] sm:$0xff]
    %v2365 = vld [vmem:[#allocation6 + $0x2d8] sm:$0xff]
    %v2366 = vld [vmem:[#allocation6 + $0x2e0] sm:$0xff]
    %v2367 = vld [vmem:[#allocation6 + $0x2e8] sm:$0xff]
    %v2368 = vld [vmem:[#allocation6 + $0x2f0] sm:$0xff]
    %v2369 = vld [vmem:[#allocation6 + $0x2f8] sm:$0xff]
    %s2370 = scalar_lea.vmem [#allocation7], 256
    %v2371 = vld [vmem:[%s2370] ss:$8 sm:$0xf]
    %v2372 = vpack.c.bf16 %v2227, %v2227
    %v2373 = vpack.c.bf16 %v2229, %v2229
    %v2374 = vpack.c.bf16 %v2268, %v2268
    %v2375 = vpack.c.bf16 %v2270, %v2270
    %v2440 = vunpack.c.l.b16 %v2274
    %v2441 = vunpack.c.l.b16 %v2275
    %v2442 = vunpack.c.l.b16 %v2276
    %v2443 = vunpack.c.l.b16 %v2277
    %v2444 = vunpack.c.l.b16 %v2278
    %v2445 = vunpack.c.l.b16 %v2279
    %v2446 = vunpack.c.l.b16 %v2280
    %v2447 = vunpack.c.l.b16 %v2281
    %v2448 = vunpack.c.l.b16 %v2282
    %v2449 = vunpack.c.l.b16 %v2283
    %v2450 = vunpack.c.l.b16 %v2284
    %v2451 = vunpack.c.l.b16 %v2285
    %v2452 = vunpack.c.l.b16 %v2286
    %v2453 = vunpack.c.l.b16 %v2287
    %v2454 = vunpack.c.l.b16 %v2288
    %v2455 = vunpack.c.l.b16 %v2289
    %v2456 = vunpack.c.l.b16 %v2290
    %v2457 = vunpack.c.l.b16 %v2291
    %v2458 = vunpack.c.l.b16 %v2292
    %v2459 = vunpack.c.l.b16 %v2293
    %v2460 = vunpack.c.l.b16 %v2294
    %v2461 = vunpack.c.l.b16 %v2295
    %v2462 = vunpack.c.l.b16 %v2296
    %v2463 = vunpack.c.l.b16 %v2297
    %v2464 = vunpack.c.l.b16 %v2298
    %v2465 = vunpack.c.l.b16 %v2299
    %v2466 = vunpack.c.l.b16 %v2300
    %v2467 = vunpack.c.l.b16 %v2301
    %v2468 = vunpack.c.l.b16 %v2302
    %v2469 = vunpack.c.l.b16 %v2303
    %v2470 = vunpack.c.l.b16 %v2304
    %v2471 = vunpack.c.l.b16 %v2305
    %v2472 = vunpack.c.l.b16 %v2306
    %v2473 = vunpack.c.l.b16 %v2307
    %v2474 = vunpack.c.l.b16 %v2308
    %v2475 = vunpack.c.l.b16 %v2309
    %v2476 = vunpack.c.l.b16 %v2310
    %v2477 = vunpack.c.l.b16 %v2311
    %v2478 = vunpack.c.l.b16 %v2312
    %v2479 = vunpack.c.l.b16 %v2313
    %v2480 = vunpack.c.l.b16 %v2314
    %v2481 = vunpack.c.l.b16 %v2315
    %v2482 = vunpack.c.l.b16 %v2316
    %v2483 = vunpack.c.l.b16 %v2317
    %v2484 = vunpack.c.l.b16 %v2318
    %v2485 = vunpack.c.l.b16 %v2319
    %v2486 = vunpack.c.l.b16 %v2320
    %v2487 = vunpack.c.l.b16 %v2321
    %v2488 = vunpack.c.l.b16 %v2322
    %v2489 = vunpack.c.l.b16 %v2323
    %v2490 = vunpack.c.l.b16 %v2324
    %v2491 = vunpack.c.l.b16 %v2325
    %v2492 = vunpack.c.l.b16 %v2326
    %v2493 = vunpack.c.l.b16 %v2327
    %v2494 = vunpack.c.l.b16 %v2328
    %v2495 = vunpack.c.l.b16 %v2329
    %v2496 = vunpack.c.l.b16 %v2330
    %v2497 = vunpack.c.l.b16 %v2331
    %v2498 = vunpack.c.l.b16 %v2332
    %v2499 = vunpack.c.l.b16 %v2333
    %v2500 = vunpack.c.l.b16 %v2334
    %v2501 = vunpack.c.l.b16 %v2335
    %v2502 = vunpack.c.l.b16 %v2336
    %v2503 = vunpack.c.l.b16 %v2337
    %v2504 = vpack.c.b16 %v2441, %v2440
    %v2505 = vpack.c.b16 %v2443, %v2442
    %v2506 = vpack.c.b16 %v2445, %v2444
    %v2507 = vpack.c.b16 %v2447, %v2446
    %v2508 = vpack.c.b16 %v2449, %v2448
    %v2509 = vpack.c.b16 %v2451, %v2450
    %v2510 = vpack.c.b16 %v2453, %v2452
    %v2511 = vpack.c.b16 %v2455, %v2454
    %v2512 = vpack.c.b16 %v2457, %v2456
    %v2513 = vpack.c.b16 %v2459, %v2458
    %v2514 = vpack.c.b16 %v2461, %v2460
    %v2515 = vpack.c.b16 %v2463, %v2462
    %v2516 = vpack.c.b16 %v2465, %v2464
    %v2517 = vpack.c.b16 %v2467, %v2466
    %v2518 = vpack.c.b16 %v2469, %v2468
    %v2519 = vpack.c.b16 %v2471, %v2470
    %v2520 = vpack.c.b16 %v2473, %v2472
    %v2521 = vpack.c.b16 %v2475, %v2474
    %v2522 = vpack.c.b16 %v2477, %v2476
    %v2523 = vpack.c.b16 %v2479, %v2478
    %v2524 = vpack.c.b16 %v2481, %v2480
    %v2525 = vpack.c.b16 %v2483, %v2482
    %v2526 = vpack.c.b16 %v2485, %v2484
    %v2527 = vpack.c.b16 %v2487, %v2486
    %v2528 = vpack.c.b16 %v2489, %v2488
    %v2529 = vpack.c.b16 %v2491, %v2490
    %v2530 = vpack.c.b16 %v2493, %v2492
    %v2531 = vpack.c.b16 %v2495, %v2494
    %v2532 = vpack.c.b16 %v2497, %v2496
    %v2533 = vpack.c.b16 %v2499, %v2498
    %v2534 = vpack.c.b16 %v2501, %v2500
    %v2535 = vpack.c.b16 %v2503, %v2502
    %2568 = vmatprep.subr.bf16.mxu0 0
    %2569 = vmatpush1.bf16.msra.mxu0 %v2504
    %2570 = vmatprep.subr.bf16.mxu0 0
    %2571 = vmatpush1.bf16.msra.mxu0 %v2505
    %2572 = vmatprep.subr.bf16.mxu0 0
    %2573 = vmatpush1.bf16.msra.mxu0 %v2506
    %2574 = vmatprep.subr.bf16.mxu0 0
    %2575 = vmatpush1.bf16.msra.mxu0 %v2507
    %2576 = vmatprep.subr.bf16.mxu0 0
    %2577 = vmatpush1.bf16.msra.mxu0 %v2508
    %2578 = vmatprep.subr.bf16.mxu0 0
    %2579 = vmatpush1.bf16.msra.mxu0 %v2509
    %2580 = vmatprep.subr.bf16.mxu0 0
    %2581 = vmatpush1.bf16.msra.mxu0 %v2510
    %2582 = vmatprep.subr.bf16.mxu0 0
    %2583 = vmatpush1.bf16.msra.mxu0 %v2511
    %2584 = vmatprep.subr.bf16.mxu0 0
    %2585 = vmatpush1.bf16.msra.mxu0 %v2512
    %2586 = vmatprep.subr.bf16.mxu0 0
    %2587 = vmatpush1.bf16.msra.mxu0 %v2513
    %2588 = vmatprep.subr.bf16.mxu0 0
    %2589 = vmatpush1.bf16.msra.mxu0 %v2514
    %2590 = vmatprep.subr.bf16.mxu0 0
    %2591 = vmatpush1.bf16.msra.mxu0 %v2515
    %2592 = vmatprep.subr.bf16.mxu0 0
    %2593 = vmatpush1.bf16.msra.mxu0 %v2516
    %2594 = vmatprep.subr.bf16.mxu0 0
    %2595 = vmatpush1.bf16.msra.mxu0 %v2517
    %2596 = vmatprep.subr.bf16.mxu0 0
    %2597 = vmatpush1.bf16.msra.mxu0 %v2518
    %2598 = vmatprep.subr.bf16.mxu0 0
    %2599 = vmatpush1.bf16.msra.mxu0 %v2519
    %2600 = vmatprep.mubr.bf16.mxu0 %v2373
    %2601 = vmatmul.mubr.bf16.gmra.mrb[0].mxu0 %v2372
    %v2602 = vpop.f32.mrb[0].mxu0
    %v2603 = vadd.f32 0.0, %v2602
    %v2604 = vpop.f32.mrb[0].mxu0
    %v2605 = vpop.f32.mrb[0].mxu0
    %v2606 = vpop.f32.mrb[0].mxu0
    %2607 = vdwg.mxu0
    %2608 = vmatprep.subr.bf16.mxu0 0
    %2609 = vmatpush1.bf16.msra.mxu0 %v2520
    %2610 = vmatprep.subr.bf16.mxu0 0
    %2611 = vmatpush1.bf16.msra.mxu0 %v2521
    %2612 = vmatprep.subr.bf16.mxu0 0
    %2613 = vmatpush1.bf16.msra.mxu0 %v2522
    %2614 = vmatprep.subr.bf16.mxu0 0
    %2615 = vmatpush1.bf16.msra.mxu0 %v2523
    %2616 = vmatprep.subr.bf16.mxu0 0
    %2617 = vmatpush1.bf16.msra.mxu0 %v2524
    %2618 = vmatprep.subr.bf16.mxu0 0
    %2619 = vmatpush1.bf16.msra.mxu0 %v2525
    %2620 = vmatprep.subr.bf16.mxu0 0
    %2621 = vmatpush1.bf16.msra.mxu0 %v2526
    %2622 = vmatprep.subr.bf16.mxu0 0
    %2623 = vmatpush1.bf16.msra.mxu0 %v2527
    %2624 = vmatprep.subr.bf16.mxu0 0
    %2625 = vmatpush1.bf16.msra.mxu0 %v2528
    %2626 = vmatprep.subr.bf16.mxu0 0
    %2627 = vmatpush1.bf16.msra.mxu0 %v2529
    %2628 = vmatprep.subr.bf16.mxu0 0
    %2629 = vmatpush1.bf16.msra.mxu0 %v2530
    %2630 = vmatprep.subr.bf16.mxu0 0
    %2631 = vmatpush1.bf16.msra.mxu0 %v2531
    %2632 = vmatprep.subr.bf16.mxu0 0
    %2633 = vmatpush1.bf16.msra.mxu0 %v2532
    %2634 = vmatprep.subr.bf16.mxu0 0
    %2635 = vmatpush1.bf16.msra.mxu0 %v2533
    %2636 = vmatprep.subr.bf16.mxu0 0
    %2637 = vmatpush1.bf16.msra.mxu0 %v2534
    %2638 = vmatprep.subr.bf16.mxu0 0
    %2639 = vmatpush1.bf16.msra.mxu0 %v2535
    %2640 = vmatprep.mubr.bf16.mxu0 %v2375
    %2641 = vmatmul.mubr.bf16.gmra.mrb[0].mxu0 %v2374
    %v2642 = vpop.f32.mrb[0].mxu0
    %v2643 = vadd.f32 %v2603, %v2642
    %v2644 = vpop.f32.mrb[0].mxu0
    %v2645 = vpop.f32.mrb[0].mxu0
    %v2646 = vpop.f32.mrb[0].mxu0
    %2647 = vdwg.mxu0
    %v2648 = vsel %vm535, %v2643, 0.0
    %v2649 = vrot.slane %v2648, 4
    %v2650 = vadd.f32 %v2648, %v2649
    %v2651 = vrot.slane %v2650, 2
    %v2652 = vadd.f32 %v2650, %v2651
    %v2653 = vrot.slane %v2652, 1
    %v2654 = vadd.f32 %v2652, %v2653
    %v2655 = vmul.f32 %v2227, %v2227
    %v2656 = vmul.f32 %v2229, %v2229
    %v2657 = vmul.f32 %v2268, %v2268
    %v2658 = vmul.f32 %v2270, %v2270
    %v2659 = vpack.c.bf16 %v2655, %v2655
    %v2660 = vpack.c.bf16 %v2656, %v2656
    %v2661 = vpack.c.bf16 %v2657, %v2657
    %v2662 = vpack.c.bf16 %v2658, %v2658
    %2663 = vmatprep.subr.bf16.mxu0 0
    %2664 = vmatpush1.bf16.msra.mxu0 %v2504
    %2665 = vmatprep.subr.bf16.mxu0 0
    %2666 = vmatpush1.bf16.msra.mxu0 %v2505
    %2667 = vmatprep.subr.bf16.mxu0 0
    %2668 = vmatpush1.bf16.msra.mxu0 %v2506
    %2669 = vmatprep.subr.bf16.mxu0 0
    %2670 = vmatpush1.bf16.msra.mxu0 %v2507
    %2671 = vmatprep.subr.bf16.mxu0 0
    %2672 = vmatpush1.bf16.msra.mxu0 %v2508
    %2673 = vmatprep.subr.bf16.mxu0 0
    %2674 = vmatpush1.bf16.msra.mxu0 %v2509
    %2675 = vmatprep.subr.bf16.mxu0 0
    %2676 = vmatpush1.bf16.msra.mxu0 %v2510
    %2677 = vmatprep.subr.bf16.mxu0 0
    %2678 = vmatpush1.bf16.msra.mxu0 %v2511
    %2679 = vmatprep.subr.bf16.mxu0 0
    %2680 = vmatpush1.bf16.msra.mxu0 %v2512
    %2681 = vmatprep.subr.bf16.mxu0 0
    %2682 = vmatpush1.bf16.msra.mxu0 %v2513
    %2683 = vmatprep.subr.bf16.mxu0 0
    %2684 = vmatpush1.bf16.msra.mxu0 %v2514
    %2685 = vmatprep.subr.bf16.mxu0 0
    %2686 = vmatpush1.bf16.msra.mxu0 %v2515
    %2687 = vmatprep.subr.bf16.mxu0 0
    %2688 = vmatpush1.bf16.msra.mxu0 %v2516
    %2689 = vmatprep.subr.bf16.mxu0 0
    %2690 = vmatpush1.bf16.msra.mxu0 %v2517
    %2691 = vmatprep.subr.bf16.mxu0 0
    %2692 = vmatpush1.bf16.msra.mxu0 %v2518
    %2693 = vmatprep.subr.bf16.mxu0 0
    %2694 = vmatpush1.bf16.msra.mxu0 %v2519
    %2695 = vmatprep.mubr.bf16.mxu0 %v2660
    %2696 = vmatmul.mubr.bf16.gmra.mrb[0].mxu0 %v2659
    %v2697 = vpop.f32.mrb[0].mxu0
    %v2698 = vadd.f32 0.0, %v2697
    %v2699 = vpop.f32.mrb[0].mxu0
    %v2700 = vpop.f32.mrb[0].mxu0
    %v2701 = vpop.f32.mrb[0].mxu0
    %2702 = vdwg.mxu0
    %2703 = vmatprep.subr.bf16.mxu0 0
    %2704 = vmatpush1.bf16.msra.mxu0 %v2520
    %2705 = vmatprep.subr.bf16.mxu0 0
    %2706 = vmatpush1.bf16.msra.mxu0 %v2521
    %2707 = vmatprep.subr.bf16.mxu0 0
    %2708 = vmatpush1.bf16.msra.mxu0 %v2522
    %2709 = vmatprep.subr.bf16.mxu0 0
    %2710 = vmatpush1.bf16.msra.mxu0 %v2523
    %2711 = vmatprep.subr.bf16.mxu0 0
    %2712 = vmatpush1.bf16.msra.mxu0 %v2524
    %2713 = vmatprep.subr.bf16.mxu0 0
    %2714 = vmatpush1.bf16.msra.mxu0 %v2525
    %2715 = vmatprep.subr.bf16.mxu0 0
    %2716 = vmatpush1.bf16.msra.mxu0 %v2526
    %2717 = vmatprep.subr.bf16.mxu0 0
    %2718 = vmatpush1.bf16.msra.mxu0 %v2527
    %2719 = vmatprep.subr.bf16.mxu0 0
    %2720 = vmatpush1.bf16.msra.mxu0 %v2528
    %2721 = vmatprep.subr.bf16.mxu0 0
    %2722 = vmatpush1.bf16.msra.mxu0 %v2529
    %2723 = vmatprep.subr.bf16.mxu0 0
    %2724 = vmatpush1.bf16.msra.mxu0 %v2530
    %2725 = vmatprep.subr.bf16.mxu0 0
    %2726 = vmatpush1.bf16.msra.mxu0 %v2531
    %2727 = vmatprep.subr.bf16.mxu0 0
    %2728 = vmatpush1.bf16.msra.mxu0 %v2532
    %2729 = vmatprep.subr.bf16.mxu0 0
    %2730 = vmatpush1.bf16.msra.mxu0 %v2533
    %2731 = vmatprep.subr.bf16.mxu0 0
    %2732 = vmatpush1.bf16.msra.mxu0 %v2534
    %2733 = vmatprep.subr.bf16.mxu0 0
    %2734 = vmatpush1.bf16.msra.mxu0 %v2535
    %2735 = vmatprep.mubr.bf16.mxu0 %v2662
    %2736 = vmatmul.mubr.bf16.gmra.mrb[0].mxu0 %v2661
    %v2737 = vpop.f32.mrb[0].mxu0
    %v2738 = vadd.f32 %v2698, %v2737
    %v2739 = vpop.f32.mrb[0].mxu0
    %v2740 = vpop.f32.mrb[0].mxu0
    %v2741 = vpop.f32.mrb[0].mxu0
    %2742 = vdwg.mxu0
    %v2743 = vsel %vm535, %v2738, 0.0
    %v2744 = vrot.slane %v2743, 4
    %v2745 = vadd.f32 %v2743, %v2744
    %v2746 = vrot.slane %v2745, 2
    %v2747 = vadd.f32 %v2745, %v2746
    %v2748 = vrot.slane %v2747, 1
    %v2749 = vadd.f32 %v2747, %v2748
    %v2750 = vmul.f32 %v2654, 0.0078125
    %v2751 = vmul.f32 %v2749, 0.0078125
    %v2752 = vmul.f32 %v2750, %v2750
    %v2753 = vsub.f32 %v2751, %v2752
    %v2754 = vmax.f32 %v2753, 0.0
    %v2755 = vadd.f32 %v2754, 1e-05
    %v2756 = vrsqrt.pop %v2755
    %v2757 = vsub.f32 0.0, %v2750
    %v2758 = vmul.f32 %v2757, %v2756
    %v2759 = vsel %vm603, %v2756, %v2758
    %v2760 = vpack.c.bf16 %v2759, %v2759
    %v2793 = vunpack.c.l.b16 %v2338
    %v2794 = vunpack.c.h.b16 %v2338
    %v2795 = vunpack.c.l.b16 %v2339
    %v2796 = vunpack.c.h.b16 %v2339
    %v2797 = vunpack.c.l.b16 %v2340
    %v2798 = vunpack.c.h.b16 %v2340
    %v2799 = vunpack.c.l.b16 %v2341
    %v2800 = vunpack.c.h.b16 %v2341
    %v2801 = vunpack.c.l.b16 %v2342
    %v2802 = vunpack.c.h.b16 %v2342
    %v2803 = vunpack.c.l.b16 %v2343
    %v2804 = vunpack.c.h.b16 %v2343
    %v2805 = vunpack.c.l.b16 %v2344
    %v2806 = vunpack.c.h.b16 %v2344
    %v2807 = vunpack.c.l.b16 %v2345
    %v2808 = vunpack.c.h.b16 %v2345
    %v2809 = vunpack.c.l.b16 %v2346
    %v2810 = vunpack.c.h.b16 %v2346
    %v2811 = vunpack.c.l.b16 %v2347
    %v2812 = vunpack.c.h.b16 %v2347
    %v2813 = vunpack.c.l.b16 %v2348
    %v2814 = vunpack.c.h.b16 %v2348
    %v2815 = vunpack.c.l.b16 %v2349
    %v2816 = vunpack.c.h.b16 %v2349
    %v2817 = vunpack.c.l.b16 %v2350
    %v2818 = vunpack.c.h.b16 %v2350
    %v2819 = vunpack.c.l.b16 %v2351
    %v2820 = vunpack.c.h.b16 %v2351
    %v2821 = vunpack.c.l.b16 %v2352
    %v2822 = vunpack.c.h.b16 %v2352
    %v2823 = vunpack.c.l.b16 %v2353
    %v2824 = vunpack.c.h.b16 %v2353
    %v2825 = vunpack.c.l.b16 %v2354
    %v2826 = vunpack.c.h.b16 %v2354
    %v2827 = vunpack.c.l.b16 %v2355
    %v2828 = vunpack.c.h.b16 %v2355
    %v2829 = vunpack.c.l.b16 %v2356
    %v2830 = vunpack.c.h.b16 %v2356
    %v2831 = vunpack.c.l.b16 %v2357
    %v2832 = vunpack.c.h.b16 %v2357
    %v2833 = vunpack.c.l.b16 %v2358
    %v2834 = vunpack.c.h.b16 %v2358
    %v2835 = vunpack.c.l.b16 %v2359
    %v2836 = vunpack.c.h.b16 %v2359
    %v2837 = vunpack.c.l.b16 %v2360
    %v2838 = vunpack.c.h.b16 %v2360
    %v2839 = vunpack.c.l.b16 %v2361
    %v2840 = vunpack.c.h.b16 %v2361
    %v2841 = vunpack.c.l.b16 %v2362
    %v2842 = vunpack.c.h.b16 %v2362
    %v2843 = vunpack.c.l.b16 %v2363
    %v2844 = vunpack.c.h.b16 %v2363
    %v2845 = vunpack.c.l.b16 %v2364
    %v2846 = vunpack.c.h.b16 %v2364
    %v2847 = vunpack.c.l.b16 %v2365
    %v2848 = vunpack.c.h.b16 %v2365
    %v2849 = vunpack.c.l.b16 %v2366
    %v2850 = vunpack.c.h.b16 %v2366
    %v2851 = vunpack.c.l.b16 %v2367
    %v2852 = vunpack.c.h.b16 %v2367
    %v2853 = vunpack.c.l.b16 %v2368
    %v2854 = vunpack.c.h.b16 %v2368
    %v2855 = vunpack.c.l.b16 %v2369
    %v2856 = vunpack.c.h.b16 %v2369
    %v2857 = vpack.c.b16 %v2797, %v2793
    %v2858 = vpack.c.b16 %v2798, %v2794
    %v2859 = vpack.c.b16 %v2799, %v2795
    %v2860 = vpack.c.b16 %v2800, %v2796
    %v2861 = vpack.c.b16 %v2805, %v2801
    %v2862 = vpack.c.b16 %v2806, %v2802
    %v2863 = vpack.c.b16 %v2807, %v2803
    %v2864 = vpack.c.b16 %v2808, %v2804
    %v2865 = vpack.c.b16 %v2813, %v2809
    %v2866 = vpack.c.b16 %v2814, %v2810
    %v2867 = vpack.c.b16 %v2815, %v2811
    %v2868 = vpack.c.b16 %v2816, %v2812
    %v2869 = vpack.c.b16 %v2821, %v2817
    %v2870 = vpack.c.b16 %v2822, %v2818
    %v2871 = vpack.c.b16 %v2823, %v2819
    %v2872 = vpack.c.b16 %v2824, %v2820
    %v2873 = vpack.c.b16 %v2829, %v2825
    %v2874 = vpack.c.b16 %v2830, %v2826
    %v2875 = vpack.c.b16 %v2831, %v2827
    %v2876 = vpack.c.b16 %v2832, %v2828
    %v2877 = vpack.c.b16 %v2837, %v2833
    %v2878 = vpack.c.b16 %v2838, %v2834
    %v2879 = vpack.c.b16 %v2839, %v2835
    %v2880 = vpack.c.b16 %v2840, %v2836
    %v2881 = vpack.c.b16 %v2845, %v2841
    %v2882 = vpack.c.b16 %v2846, %v2842
    %v2883 = vpack.c.b16 %v2847, %v2843
    %v2884 = vpack.c.b16 %v2848, %v2844
    %v2885 = vpack.c.b16 %v2853, %v2849
    %v2886 = vpack.c.b16 %v2854, %v2850
    %v2887 = vpack.c.b16 %v2855, %v2851
    %v2888 = vpack.c.b16 %v2856, %v2852
    %2921 = vmatprep.subr.bf16.mxu0 %v2858
    %2922 = vmatpush1.bf16.msra.mxu0 %v2857
    %2923 = vmatprep.subr.bf16.mxu0 %v2862
    %2924 = vmatpush1.bf16.msra.mxu0 %v2861
    %2925 = vmatprep.subr.bf16.mxu0 %v2866
    %2926 = vmatpush1.bf16.msra.mxu0 %v2865
    %2927 = vmatprep.subr.bf16.mxu0 %v2870
    %2928 = vmatpush1.bf16.msra.mxu0 %v2869
    %2929 = vmatprep.subr.bf16.mxu0 %v2874
    %2930 = vmatpush1.bf16.msra.mxu0 %v2873
    %2931 = vmatprep.subr.bf16.mxu0 %v2878
    %2932 = vmatpush1.bf16.msra.mxu0 %v2877
    %2933 = vmatprep.subr.bf16.mxu0 %v2882
    %2934 = vmatpush1.bf16.msra.mxu0 %v2881
    %2935 = vmatprep.subr.bf16.mxu0 %v2886
    %2936 = vmatpush1.bf16.msra.mxu0 %v2885
    %2937 = vmatprep.subr.bf16.mxu0 0
    %2938 = vmatpush1.bf16.msra.mxu0 0
    %2939 = vmatprep.subr.bf16.mxu0 0
    %2940 = vmatpush1.bf16.msra.mxu0 0
    %2941 = vmatprep.subr.bf16.mxu0 0
    %2942 = vmatpush1.bf16.msra.mxu0 0
    %2943 = vmatprep.subr.bf16.mxu0 0
    %2944 = vmatpush1.bf16.msra.mxu0 0
    %2945 = vmatprep.subr.bf16.mxu0 0
    %2946 = vmatpush1.bf16.msra.mxu0 0
    %2947 = vmatprep.subr.bf16.mxu0 0
    %2948 = vmatpush1.bf16.msra.mxu0 0
    %2949 = vmatprep.subr.bf16.mxu0 0
    %2950 = vmatpush1.bf16.msra.mxu0 0
    %2951 = vmatprep.subr.bf16.mxu0 0
    %2952 = vmatpush1.bf16.msra.mxu0 0
    %2953 = vmatprep.mubr.bf16.mxu0 0
    %2954 = vmatmul.mubr.bf16.gmra.mrb[0].mxu0 %v2760
    %v2955 = vpop.f32.mrb[0].mxu0
    %v2956 = vadd.f32 0.0, %v2955
    %v2957 = vpop.f32.mrb[0].mxu0
    %v2958 = vadd.f32 0.0, %v2957
    %v2959 = vpop.f32.mrb[0].mxu0
    %v2960 = vpop.f32.mrb[0].mxu0
    %2961 = vdwg.mxu0
    %2962 = vmatprep.subr.bf16.mxu0 %v2860
    %2963 = vmatpush1.bf16.msra.mxu0 %v2859
    %2964 = vmatprep.subr.bf16.mxu0 %v2864
    %2965 = vmatpush1.bf16.msra.mxu0 %v2863
    %2966 = vmatprep.subr.bf16.mxu0 %v2868
    %2967 = vmatpush1.bf16.msra.mxu0 %v2867
    %2968 = vmatprep.subr.bf16.mxu0 %v2872
    %2969 = vmatpush1.bf16.msra.mxu0 %v2871
    %2970 = vmatprep.subr.bf16.mxu0 %v2876
    %2971 = vmatpush1.bf16.msra.mxu0 %v2875
    %2972 = vmatprep.subr.bf16.mxu0 %v2880
    %2973 = vmatpush1.bf16.msra.mxu0 %v2879
    %2974 = vmatprep.subr.bf16.mxu0 %v2884
    %2975 = vmatpush1.bf16.msra.mxu0 %v2883
    %2976 = vmatprep.subr.bf16.mxu0 %v2888
    %2977 = vmatpush1.bf16.msra.mxu0 %v2887
    %2978 = vmatprep.subr.bf16.mxu0 0
    %2979 = vmatpush1.bf16.msra.mxu0 0
    %2980 = vmatprep.subr.bf16.mxu0 0
    %2981 = vmatpush1.bf16.msra.mxu0 0
    %2982 = vmatprep.subr.bf16.mxu0 0
    %2983 = vmatpush1.bf16.msra.mxu0 0
    %2984 = vmatprep.subr.bf16.mxu0 0
    %2985 = vmatpush1.bf16.msra.mxu0 0
    %2986 = vmatprep.subr.bf16.mxu0 0
    %2987 = vmatpush1.bf16.msra.mxu0 0
    %2988 = vmatprep.subr.bf16.mxu0 0
    %2989 = vmatpush1.bf16.msra.mxu0 0
    %2990 = vmatprep.subr.bf16.mxu0 0
    %2991 = vmatpush1.bf16.msra.mxu0 0
    %2992 = vmatprep.subr.bf16.mxu0 0
    %2993 = vmatpush1.bf16.msra.mxu0 0
    %2994 = vmatprep.mubr.bf16.mxu0 0
    %2995 = vmatmul.mubr.bf16.gmra.mrb[0].mxu0 %v2760
    %v2996 = vpop.f32.mrb[0].mxu0
    %v2997 = vadd.f32 0.0, %v2996
    %v2998 = vpop.f32.mrb[0].mxu0
    %v2999 = vadd.f32 0.0, %v2998
    %v3000 = vpop.f32.mrb[0].mxu0
    %v3001 = vpop.f32.mrb[0].mxu0
    %3002 = vdwg.mxu0
    %v3003 = vlaneseq
    %v3004 = vshrl.u32 %v3003, 7
    %v3005 = vsub.s32 0, %v3004
    %v3006 = vrot.slane %v2956, %v3005
    %v3007 = vlaneseq
    %v3008 = vshrl.u32 %v3007, 7
    %v3009 = vsub.s32 0, %v3008
    %v3010 = vrot.slane %v2958, %v3009
    %v3011 = vlaneseq
    %v3012 = vshrl.u32 %v3011, 7
    %v3013 = vsub.s32 0, %v3012
    %v3014 = vrot.slane %v2997, %v3013
    %v3015 = vlaneseq
    %v3016 = vshrl.u32 %v3015, 7
    %v3017 = vsub.s32 0, %v3016
    %v3018 = vrot.slane %v2999, %v3017
    %v3019 = vmul.f32 %v2227, %v3006
    %v3020 = vmul.f32 %v2229, %v3010
    %v3021 = vmul.f32 %v2268, %v3014
    %v3022 = vmul.f32 %v2270, %v3018
    %v3023 = vlaneseq
    %v3024 = vshrl.u32 %v3023, 7
    %v3025 = vsub.s32 1, %v3024
    %v3026 = vrot.slane %v2956, %v3025
    %v3027 = vlaneseq
    %v3028 = vshrl.u32 %v3027, 7
    %v3029 = vsub.s32 1, %v3028
    %v3030 = vrot.slane %v2958, %v3029
    %v3031 = vlaneseq
    %v3032 = vshrl.u32 %v3031, 7
    %v3033 = vsub.s32 1, %v3032
    %v3034 = vrot.slane %v2997, %v3033
    %v3035 = vlaneseq
    %v3036 = vshrl.u32 %v3035, 7
    %v3037 = vsub.s32 1, %v3036
    %v3038 = vrot.slane %v2999, %v3037
    %v3039 = vadd.f32 %v3019, %v3026
    %v3040 = vadd.f32 %v3020, %v3030
    %v3041 = vadd.f32 %v3021, %v3034
    %v3042 = vadd.f32 %v3022, %v3038
    %v3044 = vlaneseq
    %v3045 = vshrl.u32 %v3044, 7
    %v3046 = vsub.s32 0, %v3045
    %v3047 = vrot.slane %v2371, %v3046
    %v3048 = vlaneseq
    %v3049 = vshrl.u32 %v3048, 7
    %v3050 = vsub.s32 1, %v3049
    %v3051 = vrot.slane %v2371, %v3050
    %v3052 = vlaneseq
    %v3053 = vshrl.u32 %v3052, 7
    %v3054 = vsub.s32 2, %v3053
    %v3055 = vrot.slane %v2371, %v3054
    %v3056 = vlaneseq
    %v3057 = vshrl.u32 %v3056, 7
    %v3058 = vsub.s32 3, %v3057
    %v3059 = vrot.slane %v2371, %v3058
    %v3064 = vadd.f32 %v3039, %v3047
    %v3065 = vadd.f32 %v3040, %v3051
    %v3066 = vadd.f32 %v3041, %v3055
    %v3067 = vadd.f32 %v3042, %v3059
    %v3068 = vpack.c.bf16 %v3064, %v3064
    %v3069 = vpack.c.bf16 %v3065, %v3065
    %v3070 = vpack.c.bf16 %v3066, %v3066
    %v3071 = vpack.c.bf16 %v3067, %v3067
    %v3072 = vld [vmem:[#allocation4 + $0x180] sm:$0xff]
    %v3073 = vld [vmem:[#allocation4 + $0x188] sm:$0xff]
    %v3074 = vld [vmem:[#allocation4 + $0x190] sm:$0xff]
    %v3075 = vld [vmem:[#allocation4 + $0x198] sm:$0xff]
    %v3076 = vld [vmem:[#allocation4 + $0x1a0] sm:$0xff]
    %v3077 = vld [vmem:[#allocation4 + $0x1a8] sm:$0xff]
    %v3078 = vld [vmem:[#allocation4 + $0x1b0] sm:$0xff]
    %v3079 = vld [vmem:[#allocation4 + $0x1b8] sm:$0xff]
    %v3080 = vld [vmem:[#allocation4 + $0x1c0] sm:$0xff]
    %v3081 = vld [vmem:[#allocation4 + $0x1c8] sm:$0xff]
    %v3082 = vld [vmem:[#allocation4 + $0x1d0] sm:$0xff]
    %v3083 = vld [vmem:[#allocation4 + $0x1d8] sm:$0xff]
    %v3084 = vld [vmem:[#allocation4 + $0x1e0] sm:$0xff]
    %v3085 = vld [vmem:[#allocation4 + $0x1e8] sm:$0xff]
    %v3086 = vld [vmem:[#allocation4 + $0x1f0] sm:$0xff]
    %v3087 = vld [vmem:[#allocation4 + $0x1f8] sm:$0xff]
    %v3088 = vld [vmem:[#allocation4 + $0x200] sm:$0xff]
    %v3089 = vld [vmem:[#allocation4 + $0x208] sm:$0xff]
    %v3090 = vld [vmem:[#allocation4 + $0x210] sm:$0xff]
    %v3091 = vld [vmem:[#allocation4 + $0x218] sm:$0xff]
    %v3092 = vld [vmem:[#allocation4 + $0x220] sm:$0xff]
    %v3093 = vld [vmem:[#allocation4 + $0x228] sm:$0xff]
    %v3094 = vld [vmem:[#allocation4 + $0x230] sm:$0xff]
    %v3095 = vld [vmem:[#allocation4 + $0x238] sm:$0xff]
    %v3096 = vld [vmem:[#allocation4 + $0x240] sm:$0xff]
    %v3097 = vld [vmem:[#allocation4 + $0x248] sm:$0xff]
    %v3098 = vld [vmem:[#allocation4 + $0x250] sm:$0xff]
    %v3099 = vld [vmem:[#allocation4 + $0x258] sm:$0xff]
    %v3100 = vld [vmem:[#allocation4 + $0x260] sm:$0xff]
    %v3101 = vld [vmem:[#allocation4 + $0x268] sm:$0xff]
    %v3102 = vld [vmem:[#allocation4 + $0x270] sm:$0xff]
    %v3103 = vld [vmem:[#allocation4 + $0x278] sm:$0xff]
    %v3104 = vld [vmem:[#allocation4 + $0x280] sm:$0xff]
    %v3105 = vld [vmem:[#allocation4 + $0x288] sm:$0xff]
    %v3106 = vld [vmem:[#allocation4 + $0x290] sm:$0xff]
    %v3107 = vld [vmem:[#allocation4 + $0x298] sm:$0xff]
    %v3108 = vld [vmem:[#allocation4 + $0x2a0] sm:$0xff]
    %v3109 = vld [vmem:[#allocation4 + $0x2a8] sm:$0xff]
    %v3110 = vld [vmem:[#allocation4 + $0x2b0] sm:$0xff]
    %v3111 = vld [vmem:[#allocation4 + $0x2b8] sm:$0xff]
    %v3112 = vld [vmem:[#allocation4 + $0x2c0] sm:$0xff]
    %v3113 = vld [vmem:[#allocation4 + $0x2c8] sm:$0xff]
    %v3114 = vld [vmem:[#allocation4 + $0x2d0] sm:$0xff]
    %v3115 = vld [vmem:[#allocation4 + $0x2d8] sm:$0xff]
    %v3116 = vld [vmem:[#allocation4 + $0x2e0] sm:$0xff]
    %v3117 = vld [vmem:[#allocation4 + $0x2e8] sm:$0xff]
    %v3118 = vld [vmem:[#allocation4 + $0x2f0] sm:$0xff]
    %v3119 = vld [vmem:[#allocation4 + $0x2f8] sm:$0xff]
    %v3120 = vld [vmem:[#allocation4 + $0x300] sm:$0xff]
    %v3121 = vld [vmem:[#allocation4 + $0x308] sm:$0xff]
    %v3122 = vld [vmem:[#allocation4 + $0x310] sm:$0xff]
    %v3123 = vld [vmem:[#allocation4 + $0x318] sm:$0xff]
    %v3124 = vld [vmem:[#allocation4 + $0x320] sm:$0xff]
    %v3125 = vld [vmem:[#allocation4 + $0x328] sm:$0xff]
    %v3126 = vld [vmem:[#allocation4 + $0x330] sm:$0xff]
    %v3127 = vld [vmem:[#allocation4 + $0x338] sm:$0xff]
    %v3128 = vld [vmem:[#allocation4 + $0x340] sm:$0xff]
    %v3129 = vld [vmem:[#allocation4 + $0x348] sm:$0xff]
    %v3130 = vld [vmem:[#allocation4 + $0x350] sm:$0xff]
    %v3131 = vld [vmem:[#allocation4 + $0x358] sm:$0xff]
    %v3132 = vld [vmem:[#allocation4 + $0x360] sm:$0xff]
    %v3133 = vld [vmem:[#allocation4 + $0x368] sm:$0xff]
    %v3134 = vld [vmem:[#allocation4 + $0x370] sm:$0xff]
    %v3135 = vld [vmem:[#allocation4 + $0x378] sm:$0xff]
    %s3136 = scalar_lea.vmem [#allocation7], 128
    %v3137 = vld [vmem:[%s3136] ss:$8 sm:$0x3]
    %v3139 = vlaneseq
    %v3140 = vshrl.u32 %v3139, 7
    %v3141 = vsub.s32 0, %v3140
    %v3142 = vrot.slane %v3137, %v3141
    %v3143 = vlaneseq
    %v3144 = vshrl.u32 %v3143, 7
    %v3145 = vsub.s32 1, %v3144
    %v3146 = vrot.slane %v3137, %v3145
    %v3213 = vunpack.c.l.b16 %v3072
    %v3214 = vunpack.c.h.b16 %v3072
    %v3215 = vunpack.c.l.b16 %v3073
    %v3216 = vunpack.c.h.b16 %v3073
    %v3217 = vunpack.c.l.b16 %v3074
    %v3218 = vunpack.c.h.b16 %v3074
    %v3219 = vunpack.c.l.b16 %v3075
    %v3220 = vunpack.c.h.b16 %v3075
    %v3221 = vunpack.c.l.b16 %v3076
    %v3222 = vunpack.c.h.b16 %v3076
    %v3223 = vunpack.c.l.b16 %v3077
    %v3224 = vunpack.c.h.b16 %v3077
    %v3225 = vunpack.c.l.b16 %v3078
    %v3226 = vunpack.c.h.b16 %v3078
    %v3227 = vunpack.c.l.b16 %v3079
    %v3228 = vunpack.c.h.b16 %v3079
    %v3229 = vunpack.c.l.b16 %v3080
    %v3230 = vunpack.c.h.b16 %v3080
    %v3231 = vunpack.c.l.b16 %v3081
    %v3232 = vunpack.c.h.b16 %v3081
    %v3233 = vunpack.c.l.b16 %v3082
    %v3234 = vunpack.c.h.b16 %v3082
    %v3235 = vunpack.c.l.b16 %v3083
    %v3236 = vunpack.c.h.b16 %v3083
    %v3237 = vunpack.c.l.b16 %v3084
    %v3238 = vunpack.c.h.b16 %v3084
    %v3239 = vunpack.c.l.b16 %v3085
    %v3240 = vunpack.c.h.b16 %v3085
    %v3241 = vunpack.c.l.b16 %v3086
    %v3242 = vunpack.c.h.b16 %v3086
    %v3243 = vunpack.c.l.b16 %v3087
    %v3244 = vunpack.c.h.b16 %v3087
    %v3245 = vunpack.c.l.b16 %v3088
    %v3246 = vunpack.c.h.b16 %v3088
    %v3247 = vunpack.c.l.b16 %v3089
    %v3248 = vunpack.c.h.b16 %v3089
    %v3249 = vunpack.c.l.b16 %v3090
    %v3250 = vunpack.c.h.b16 %v3090
    %v3251 = vunpack.c.l.b16 %v3091
    %v3252 = vunpack.c.h.b16 %v3091
    %v3253 = vunpack.c.l.b16 %v3092
    %v3254 = vunpack.c.h.b16 %v3092
    %v3255 = vunpack.c.l.b16 %v3093
    %v3256 = vunpack.c.h.b16 %v3093
    %v3257 = vunpack.c.l.b16 %v3094
    %v3258 = vunpack.c.h.b16 %v3094
    %v3259 = vunpack.c.l.b16 %v3095
    %v3260 = vunpack.c.h.b16 %v3095
    %v3261 = vunpack.c.l.b16 %v3096
    %v3262 = vunpack.c.h.b16 %v3096
    %v3263 = vunpack.c.l.b16 %v3097
    %v3264 = vunpack.c.h.b16 %v3097
    %v3265 = vunpack.c.l.b16 %v3098
    %v3266 = vunpack.c.h.b16 %v3098
    %v3267 = vunpack.c.l.b16 %v3099
    %v3268 = vunpack.c.h.b16 %v3099
    %v3269 = vunpack.c.l.b16 %v3100
    %v3270 = vunpack.c.h.b16 %v3100
    %v3271 = vunpack.c.l.b16 %v3101
    %v3272 = vunpack.c.h.b16 %v3101
    %v3273 = vunpack.c.l.b16 %v3102
    %v3274 = vunpack.c.h.b16 %v3102
    %v3275 = vunpack.c.l.b16 %v3103
    %v3276 = vunpack.c.h.b16 %v3103
    %v3277 = vunpack.c.l.b16 %v3104
    %v3278 = vunpack.c.h.b16 %v3104
    %v3279 = vunpack.c.l.b16 %v3105
    %v3280 = vunpack.c.h.b16 %v3105
    %v3281 = vunpack.c.l.b16 %v3106
    %v3282 = vunpack.c.h.b16 %v3106
    %v3283 = vunpack.c.l.b16 %v3107
    %v3284 = vunpack.c.h.b16 %v3107
    %v3285 = vunpack.c.l.b16 %v3108
    %v3286 = vunpack.c.h.b16 %v3108
    %v3287 = vunpack.c.l.b16 %v3109
    %v3288 = vunpack.c.h.b16 %v3109
    %v3289 = vunpack.c.l.b16 %v3110
    %v3290 = vunpack.c.h.b16 %v3110
    %v3291 = vunpack.c.l.b16 %v3111
    %v3292 = vunpack.c.h.b16 %v3111
    %v3293 = vunpack.c.l.b16 %v3112
    %v3294 = vunpack.c.h.b16 %v3112
    %v3295 = vunpack.c.l.b16 %v3113
    %v3296 = vunpack.c.h.b16 %v3113
    %v3297 = vunpack.c.l.b16 %v3114
    %v3298 = vunpack.c.h.b16 %v3114
    %v3299 = vunpack.c.l.b16 %v3115
    %v3300 = vunpack.c.h.b16 %v3115
    %v3301 = vunpack.c.l.b16 %v3116
    %v3302 = vunpack.c.h.b16 %v3116
    %v3303 = vunpack.c.l.b16 %v3117
    %v3304 = vunpack.c.h.b16 %v3117
    %v3305 = vunpack.c.l.b16 %v3118
    %v3306 = vunpack.c.h.b16 %v3118
    %v3307 = vunpack.c.l.b16 %v3119
    %v3308 = vunpack.c.h.b16 %v3119
    %v3309 = vunpack.c.l.b16 %v3120
    %v3310 = vunpack.c.h.b16 %v3120
    %v3311 = vunpack.c.l.b16 %v3121
    %v3312 = vunpack.c.h.b16 %v3121
    %v3313 = vunpack.c.l.b16 %v3122
    %v3314 = vunpack.c.h.b16 %v3122
    %v3315 = vunpack.c.l.b16 %v3123
    %v3316 = vunpack.c.h.b16 %v3123
    %v3317 = vunpack.c.l.b16 %v3124
    %v3318 = vunpack.c.h.b16 %v3124
    %v3319 = vunpack.c.l.b16 %v3125
    %v3320 = vunpack.c.h.b16 %v3125
    %v3321 = vunpack.c.l.b16 %v3126
    %v3322 = vunpack.c.h.b16 %v3126
    %v3323 = vunpack.c.l.b16 %v3127
    %v3324 = vunpack.c.h.b16 %v3127
    %v3325 = vunpack.c.l.b16 %v3128
    %v3326 = vunpack.c.h.b16 %v3128
    %v3327 = vunpack.c.l.b16 %v3129
    %v3328 = vunpack.c.h.b16 %v3129
    %v3329 = vunpack.c.l.b16 %v3130
    %v3330 = vunpack.c.h.b16 %v3130
    %v3331 = vunpack.c.l.b16 %v3131
    %v3332 = vunpack.c.h.b16 %v3131
    %v3333 = vunpack.c.l.b16 %v3132
    %v3334 = vunpack.c.h.b16 %v3132
    %v3335 = vunpack.c.l.b16 %v3133
    %v3336 = vunpack.c.h.b16 %v3133
    %v3337 = vunpack.c.l.b16 %v3134
    %v3338 = vunpack.c.h.b16 %v3134
    %v3339 = vunpack.c.l.b16 %v3135
    %v3340 = vunpack.c.h.b16 %v3135
    %v3341 = vpack.c.b16 %v3215, %v3213
    %v3342 = vpack.c.b16 %v3216, %v3214
    %v3343 = vpack.c.b16 %v3219, %v3217
    %v3344 = vpack.c.b16 %v3220, %v3218
    %v3345 = vpack.c.b16 %v3223, %v3221
    %v3346 = vpack.c.b16 %v3224, %v3222
    %v3347 = vpack.c.b16 %v3227, %v3225
    %v3348 = vpack.c.b16 %v3228, %v3226
    %v3349 = vpack.c.b16 %v3231, %v3229
    %v3350 = vpack.c.b16 %v3232, %v3230
    %v3351 = vpack.c.b16 %v3235, %v3233
    %v3352 = vpack.c.b16 %v3236, %v3234
    %v3353 = vpack.c.b16 %v3239, %v3237
    %v3354 = vpack.c.b16 %v3240, %v3238
    %v3355 = vpack.c.b16 %v3243, %v3241
    %v3356 = vpack.c.b16 %v3244, %v3242
    %v3357 = vpack.c.b16 %v3247, %v3245
    %v3358 = vpack.c.b16 %v3248, %v3246
    %v3359 = vpack.c.b16 %v3251, %v3249
    %v3360 = vpack.c.b16 %v3252, %v3250
    %v3361 = vpack.c.b16 %v3255, %v3253
    %v3362 = vpack.c.b16 %v3256, %v3254
    %v3363 = vpack.c.b16 %v3259, %v3257
    %v3364 = vpack.c.b16 %v3260, %v3258
    %v3365 = vpack.c.b16 %v3263, %v3261
    %v3366 = vpack.c.b16 %v3264, %v3262
    %v3367 = vpack.c.b16 %v3267, %v3265
    %v3368 = vpack.c.b16 %v3268, %v3266
    %v3369 = vpack.c.b16 %v3271, %v3269
    %v3370 = vpack.c.b16 %v3272, %v3270
    %v3371 = vpack.c.b16 %v3275, %v3273
    %v3372 = vpack.c.b16 %v3276, %v3274
    %v3373 = vpack.c.b16 %v3279, %v3277
    %v3374 = vpack.c.b16 %v3280, %v3278
    %v3375 = vpack.c.b16 %v3283, %v3281
    %v3376 = vpack.c.b16 %v3284, %v3282
    %v3377 = vpack.c.b16 %v3287, %v3285
    %v3378 = vpack.c.b16 %v3288, %v3286
    %v3379 = vpack.c.b16 %v3291, %v3289
    %v3380 = vpack.c.b16 %v3292, %v3290
    %v3381 = vpack.c.b16 %v3295, %v3293
    %v3382 = vpack.c.b16 %v3296, %v3294
    %v3383 = vpack.c.b16 %v3299, %v3297
    %v3384 = vpack.c.b16 %v3300, %v3298
    %v3385 = vpack.c.b16 %v3303, %v3301
    %v3386 = vpack.c.b16 %v3304, %v3302
    %v3387 = vpack.c.b16 %v3307, %v3305
    %v3388 = vpack.c.b16 %v3308, %v3306
    %v3389 = vpack.c.b16 %v3311, %v3309
    %v3390 = vpack.c.b16 %v3312, %v3310
    %v3391 = vpack.c.b16 %v3315, %v3313
    %v3392 = vpack.c.b16 %v3316, %v3314
    %v3393 = vpack.c.b16 %v3319, %v3317
    %v3394 = vpack.c.b16 %v3320, %v3318
    %v3395 = vpack.c.b16 %v3323, %v3321
    %v3396 = vpack.c.b16 %v3324, %v3322
    %v3397 = vpack.c.b16 %v3327, %v3325
    %v3398 = vpack.c.b16 %v3328, %v3326
    %v3399 = vpack.c.b16 %v3331, %v3329
    %v3400 = vpack.c.b16 %v3332, %v3330
    %v3401 = vpack.c.b16 %v3335, %v3333
    %v3402 = vpack.c.b16 %v3336, %v3334
    %v3403 = vpack.c.b16 %v3339, %v3337
    %v3404 = vpack.c.b16 %v3340, %v3338
    %3469 = vmatprep.subr.bf16.mxu0 %v3342
    %3470 = vmatpush1.bf16.msra.mxu0 %v3341
    %3471 = vmatprep.subr.bf16.mxu0 %v3344
    %3472 = vmatpush1.bf16.msra.mxu0 %v3343
    %3473 = vmatprep.subr.bf16.mxu0 %v3346
    %3474 = vmatpush1.bf16.msra.mxu0 %v3345
    %3475 = vmatprep.subr.bf16.mxu0 %v3348
    %3476 = vmatpush1.bf16.msra.mxu0 %v3347
    %3477 = vmatprep.subr.bf16.mxu0 %v3350
    %3478 = vmatpush1.bf16.msra.mxu0 %v3349
    %3479 = vmatprep.subr.bf16.mxu0 %v3352
    %3480 = vmatpush1.bf16.msra.mxu0 %v3351
    %3481 = vmatprep.subr.bf16.mxu0 %v3354
    %3482 = vmatpush1.bf16.msra.mxu0 %v3353
    %3483 = vmatprep.subr.bf16.mxu0 %v3356
    %3484 = vmatpush1.bf16.msra.mxu0 %v3355
    %3485 = vmatprep.subr.bf16.mxu0 %v3358
    %3486 = vmatpush1.bf16.msra.mxu0 %v3357
    %3487 = vmatprep.subr.bf16.mxu0 %v3360
    %3488 = vmatpush1.bf16.msra.mxu0 %v3359
    %3489 = vmatprep.subr.bf16.mxu0 %v3362
    %3490 = vmatpush1.bf16.msra.mxu0 %v3361
    %3491 = vmatprep.subr.bf16.mxu0 %v3364
    %3492 = vmatpush1.bf16.msra.mxu0 %v3363
    %3493 = vmatprep.subr.bf16.mxu0 %v3366
    %3494 = vmatpush1.bf16.msra.mxu0 %v3365
    %3495 = vmatprep.subr.bf16.mxu0 %v3368
    %3496 = vmatpush1.bf16.msra.mxu0 %v3367
    %3497 = vmatprep.subr.bf16.mxu0 %v3370
    %3498 = vmatpush1.bf16.msra.mxu0 %v3369
    %3499 = vmatprep.subr.bf16.mxu0 %v3372
    %3500 = vmatpush1.bf16.msra.mxu0 %v3371
    %3501 = vmatprep.mubr.bf16.mxu0 %v3069
    %3502 = vmatmul.mubr.bf16.gmra.mrb[0].mxu0 %v3068
    %v3503 = vpop.f32.mrb[0].mxu0
    %v3504 = vadd.f32 %v3142, %v3503
    %v3505 = vpop.f32.mrb[0].mxu0
    %v3506 = vadd.f32 %v3146, %v3505
    %v3507 = vpop.f32.mrb[0].mxu0
    %v3508 = vpop.f32.mrb[0].mxu0
    %3509 = vdwg.mxu0
    %3510 = vmatprep.subr.bf16.mxu0 %v3374
    %3511 = vmatpush1.bf16.msra.mxu0 %v3373
    %3512 = vmatprep.subr.bf16.mxu0 %v3376
    %3513 = vmatpush1.bf16.msra.mxu0 %v3375
    %3514 = vmatprep.subr.bf16.mxu0 %v3378
    %3515 = vmatpush1.bf16.msra.mxu0 %v3377
    %3516 = vmatprep.subr.bf16.mxu0 %v3380
    %3517 = vmatpush1.bf16.msra.mxu0 %v3379
    %3518 = vmatprep.subr.bf16.mxu0 %v3382
    %3519 = vmatpush1.bf16.msra.mxu0 %v3381
    %3520 = vmatprep.subr.bf16.mxu0 %v3384
    %3521 = vmatpush1.bf16.msra.mxu0 %v3383
    %3522 = vmatprep.subr.bf16.mxu0 %v3386
    %3523 = vmatpush1.bf16.msra.mxu0 %v3385
    %3524 = vmatprep.subr.bf16.mxu0 %v3388
    %3525 = vmatpush1.bf16.msra.mxu0 %v3387
    %3526 = vmatprep.subr.bf16.mxu0 %v3390
    %3527 = vmatpush1.bf16.msra.mxu0 %v3389
    %3528 = vmatprep.subr.bf16.mxu0 %v3392
    %3529 = vmatpush1.bf16.msra.mxu0 %v3391
    %3530 = vmatprep.subr.bf16.mxu0 %v3394
    %3531 = vmatpush1.bf16.msra.mxu0 %v3393
    %3532 = vmatprep.subr.bf16.mxu0 %v3396
    %3533 = vmatpush1.bf16.msra.mxu0 %v3395
    %3534 = vmatprep.subr.bf16.mxu0 %v3398
    %3535 = vmatpush1.bf16.msra.mxu0 %v3397
    %3536 = vmatprep.subr.bf16.mxu0 %v3400
    %3537 = vmatpush1.bf16.msra.mxu0 %v3399
    %3538 = vmatprep.subr.bf16.mxu0 %v3402
    %3539 = vmatpush1.bf16.msra.mxu0 %v3401
    %3540 = vmatprep.subr.bf16.mxu0 %v3404
    %3541 = vmatpush1.bf16.msra.mxu0 %v3403
    %3542 = vmatprep.mubr.bf16.mxu0 %v3071
    %3543 = vmatmul.mubr.bf16.gmra.mrb[0].mxu0 %v3070
    %v3544 = vpop.f32.mrb[0].mxu0
    %v3545 = vadd.f32 %v3504, %v3544
    %v3546 = vpop.f32.mrb[0].mxu0
    %v3547 = vadd.f32 %v3506, %v3546
    %v3548 = vpop.f32.mrb[0].mxu0
    %v3549 = vpop.f32.mrb[0].mxu0
    %3550 = vdwg.mxu0
    %v3551 = vxor.u32 %v3545, 2147483648
    %v3552 = vxor.u32 %v3547, 2147483648
    %v3553 = vmul.f32 %v3551, 1.442695
    %v3554 = vpow.pop %v3553
    %v3555 = vmul.f32 %v3552, 1.442695
    %v3556 = vpow.pop %v3555
    %v3557 = vadd.f32 %v3554, 1.0
    %v3558 = vadd.f32 %v3556, 1.0
    %v3559 = vrcp.pop %v3557
    %v3560 = vmul.f32 1.0, %v3559
    %v3561 = vrcp.pop %v3558
    %v3562 = vmul.f32 1.0, %v3561
    %v3565 = vcombine.low %v3560, %v3562
    %v3567 = vunpack.c.l.s4 1983009808
    %v3568 = vunpack.c.0.s8 %v3567
    %v3569 = vlaneseq
    %v3570 = vshrl.u32 %v3569, 7
    %v3571 = vsub.s32 %v3568, %v3570
    %v3572 = vrot.slane %v3565, %v3571
    %3574 = vst [vmem:[%s5] sm:$0xf] %v3572
    // Predicated region
    $region38: #{forward.1} parent=1 // pred_check
      _
    $region39: #{forward.1} parent=1 // pred_check_branch
      %3576 = sbr.rel (0) target = $region41
    $region40: #{forward.1} parent=1 // pred_region
      _
    $region41: #{forward.1} parent=1 // pred_fallthru
      _
    // Predicated region
    $region42: #{forward.1} parent=1 // pred_check
      _
    $region43: #{forward.1} parent=1 // pred_check_branch
      %3578 = sbr.rel (0) target = $region45
    $region44: #{forward.1} parent=1 // pred_region
      _
    $region45: #{forward.1} parent=1 // pred_fallthru
      _
    %3579 = vsyncpa [#allocation3], 1
    %3580 = vsyncpa [#allocation5], 1
    %3581 = vsyncpa [#allocation8], 1

</llo_original>
